<compile_context>
chip_gen: v7x
topology: tpu7x:2x2x1
jax: 0.10.0
libtpu: 0.0.40
codegen_flags: <defaults>
</compile_context>

<pallas_src>
import numpy as np
import jax
import jax.numpy as jnp
from jax.experimental import pallas as pl
from jax.experimental.pallas import tpu as pltpu

# ----------------------------------------------------------------------------
# Calibration tables (identical values to the PyTorch module, car_type='modena')
# ----------------------------------------------------------------------------
CABIN_P1 = np.array([[-20.0, 3.0], [-10.0, 2.0], [0.0, 0.88], [10.0, 0.38],
                     [25.0, 0.7], [30.0, 1.0], [35.0, 1.31], [40.0, 2.5],
                     [45.0, 3.0]], np.float64)
TEMP_SET = np.array([18.0, 20.0, 22.0, 24.0, 26.0, 28.0, 30.0, 31.5, 32.0], np.float64)
TEMP_ENVR = np.array([-30.0, -20.0, -10.0, 0.0, 5.0, 10.0, 15.0, 20.0, 25.0,
                      30.0, 35.0, 40.0, 45.0, 50.0], np.float64)
CABIN_SP = np.array([
    [17.0]*14,
    [20.0, 20.0, 19.5, 19.5, 19.5, 19.0, 19.0, 19.0, 18.5, 18.5, 18.0, 18.0, 18.0, 18.0],
    [22.0, 22.0, 22.0, 22.5, 22.5, 22.5, 22.0, 22.0, 21.0, 21.0, 21.0, 21.0, 20.5, 20.0],
    [24.0, 24.5, 25.5, 25.5, 26.0, 26.0, 25.5, 25.0, 24.5, 24.0, 23.5, 23.0, 23.0, 23.0],
    [27.0, 26.5, 27.0, 27.5, 28.0, 28.0, 27.5, 27.0, 26.5, 26.0, 25.5, 26.0, 26.0, 26.0],
    [29.0, 28.5, 28.5, 29.5, 30.0, 30.0, 29.5, 29.0, 29.0, 29.0, 28.0, 28.0, 29.0, 29.0],
    [31.0, 30.5, 30.5, 31.5, 32.0, 32.0, 32.0, 31.0, 31.0, 31.0, 31.0, 31.0, 31.0, 31.0],
    [32.0, 32.0, 32.0, 33.0, 33.0, 33.0, 33.0, 33.0, 33.0, 33.0, 33.0, 33.0, 32.0, 32.0],
    [32.0, 32.0, 36.0, 36.0, 36.0, 36.0, 36.0, 36.0, 36.0, 36.0, 36.0, 36.0, 36.0, 36.0],
], np.float64)
CABIN_P2 = np.array([[-20.0, 3.0], [-15.0, 2.0], [-10.0, 1.0], [-5.0, 0.5],
                     [0.0, 0.4], [5.0, 0.5], [10.0, 1.5], [15.0, 3.0],
                     [20.0, 6.0]], np.float64)
EVAP_TEMP = np.array([[2.0, 1.0], [3.0, 10.0], [5.0, 50.0], [6.0, 500.0]], np.float64)
PID_KP_HP = np.array([0.5, 0.3417968, 0.3417968, 0.3417968, 0.3417968, 0.5], np.float64)
DIFF_KP_HP = np.array([-10.0, -2.5, -1.0, 1.0, 2.5, 10.0], np.float64)
PID_KI_HP = np.array([0.1503906]*6, np.float64)          # constant table -> folds to a scalar
DIFF_KI_HP = np.array([-10.0, -2.5, -1.0, 1.0, 2.5, 10.0], np.float64)
PID_KP_LP = np.array([0.49, 0.49, 0.05, 0.05, 0.49, 0.49], np.float64)
DIFF_KP_LP = np.array([-10.0, -2.5, -1.0, 1.0, 2.5, 10.0], np.float64)
PID_KI_LP = np.array([0.15, 0.13, 0.12, 0.06, 0.06, 0.09], np.float64)
DIFF_KI_LP = np.array([-10.0, -2.5, -1.0, 1.0, 2.5, 10.0], np.float64)
LO_PRESS_TABLE = np.array([100.0, 150.0, 200.0, 250.0, 300.0, 350.0, 400.0,
                           450.0, 500.0, 550.0], np.float64)
HI_PRESS_TABLE = np.array([200.0, 400.0, 600.0, 800.0, 1000.0, 1200.0, 1400.0,
                           1600.0, 1800.0, 2000.0], np.float64)
COM_SPEED_MIN_TABLE = np.array([
    [2000.0]*10,
    [1600.0, 1600.0, 1600.0, 1600.0, 1600.0, 1700.0, 1800.0, 1900.0, 2000.0, 2000.0],
    [1200.0, 1200.0, 1200.0, 1200.0, 1200.0, 1200.0, 1200.0, 1200.0, 1600.0, 2000.0],
    [900.0, 900.0, 950.0, 1000.0, 1050.0, 1100.0, 1150.0, 1200.0, 1600.0, 2000.0],
    [800.0, 800.0, 800.0, 800.0, 900.0, 1000.0, 1100.0, 1200.0, 1600.0, 2000.0],
    [800.0, 800.0, 800.0, 800.0, 800.0, 900.0, 1050.0, 1200.0, 1600.0, 2000.0],
    [800.0, 800.0, 800.0, 800.0, 800.0, 800.0, 1000.0, 1200.0, 1600.0, 2000.0],
    [800.0, 800.0, 800.0, 800.0, 800.0, 800.0, 950.0, 1200.0, 1600.0, 2000.0],
    [800.0, 800.0, 800.0, 800.0, 800.0, 800.0, 900.0, 1200.0, 1600.0, 2000.0],
    [800.0, 800.0, 800.0, 800.0, 800.0, 800.0, 850.0, 1200.0, 1600.0, 2000.0],
], np.float64)
COM_SPEED_MIN_TEMP_AMB = np.array([[10.0, 800.0], [15.0, 1000.0], [20.0, 1200.0]], np.float64)

K_HIGH_PRESSURE = 0.0244
K_LOW_PRESSURE = 0.0996

# Build-time guarantees for the algebraic simplifications below.
#  * Ki_HP table is constant -> interpolation folds to a scalar.
assert np.all(PID_KI_HP == PID_KI_HP[0]), "Ki_HP table must be constant"
KI_HP_CONST = float(PID_KI_HP[0])
#  * Every TEMP_ENVR column of CABIN_SP is non-decreasing along TEMP_SET, so
#    min(interp2d(fl), interp2d(fr)) == interp2d(min(fl, fr)) (single query).
assert np.all(np.diff(CABIN_SP, axis=0) >= 0.0), \
    "CABIN_SP must be non-decreasing along TEMP_SET for the min-set-temp fold"

# Initial PID "state" of the module (all zeros at construction time), folded.
# TODO(synk): the PyTorch module mutates self.Ivalue / last_Pout / last_Dout /
# last_offset across calls; this kernel bakes the initial (zero) state, so it
# matches the first forward call only. Persistent state needs extra I/O.


# ----------------------------------------------------------------------------
# In-kernel piecewise-linear interpolation helpers. All tables are static
# python floats, so these unroll to short where/select VPU chains with
# precomputed (python-float) slope AND intercept — no runtime divides, one
# mul + one add + one select per segment.
# ----------------------------------------------------------------------------
def _interp1d(xp, fp, x):
    """1-D linear interpolation with edge clamping (static table).

    Returns a python float when fp is constant (pure compile-time fold)."""
    xp = [float(v) for v in xp]
    fp = [float(v) for v in fp]
    if all(f == fp[0] for f in fp):
        return fp[0]
    xc = jnp.clip(x, xp[0], xp[-1])
    res = fp[0]
    for i in range(len(xp) - 1):
        slope = (fp[i + 1] - fp[i]) / (xp[i + 1] - xp[i])     # python float
        intercept = fp[i] - xp[i] * slope                     # python float
        seg = xc * slope + intercept
        res = jnp.where(xc >= xp[i], seg, res)
    if isinstance(res, float):
        res = jnp.full_like(x, res)
    return res


def _interp2d(xp, yp, table, x, y):
    """Bilinear interpolation over a small static table with edge clamping.

    `xp` indexes table rows, `yp` indexes columns. Columns (y axis) are
    interpolated once per table row; a running blend keeps at most two
    interpolated rows live to bound vreg pressure. Slope constants for the
    row axis are folded to python floats."""
    xp = [float(v) for v in xp]
    yp_list = [float(v) for v in yp]
    xc = jnp.clip(x, xp[0], xp[-1])
    row_prev = _interp1d(yp_list, list(table[0]), y)
    res = row_prev
    for i in range(len(xp) - 1):
        row_next = _interp1d(yp_list, list(table[i + 1]), y)
        inv_dx = 1.0 / (xp[i + 1] - xp[i])                    # python float
        c_i = -xp[i] * inv_dx                                 # python float
        t = xc * inv_dx + c_i
        seg = row_prev + t * (row_next - row_prev)
        res = jnp.where(xc >= xp[i], seg, res)
        row_prev = row_next
    if isinstance(res, float):
        res = jnp.full_like(y, res)
    return res


# ----------------------------------------------------------------------------
# Pallas kernel: entire PID forward pass, elementwise over the batch tile.
# x_ref: (12, TILE_ROWS, 128) — the 12 *used* features; feature slabs are
# loaded lazily at first use (x_ref[i]) so Mosaic can schedule each vld near
# its consumer and the vreg file is never flooded at kernel entry.
# Compact feature order:
#   0 last_ac_pid_out_hp  1 temp_amb   2 cab_fl_set_temp  3 cab_fr_set_temp
#   4 lo_pressure  5 hi_pressure  6 aim_lo_pressure  7 aim_hi_pressure
#   8 temp_incar   9 temp_evap   10 hp_mode_ac      11 cab_cooling_status
# ----------------------------------------------------------------------------
def pid_kernel(x_ref, o_ref):
    col = lambda i: x_ref[i]            # lazy (TILE_ROWS, 128) feature load

    # ---- Cabin Kp rate ------------------------------------------------------
    temp_amb = col(1)
    ac_kprate1 = _interp1d(CABIN_P1[:, 0], CABIN_P1[:, 1], temp_amb)
    # CABIN_SP is monotone along TEMP_SET (asserted at build time), so
    # min(interp(FL), interp(FR)) == interp(min(FL, FR)): one bilinear query.
    set_min = jnp.minimum(col(2), col(3))
    cab_sp_min = _interp2d(TEMP_SET, TEMP_ENVR, CABIN_SP, set_min, temp_amb)
    dvt_cabin_err = cab_sp_min - col(8)
    ac_kprate2 = _interp1d(CABIN_P2[:, 0], CABIN_P2[:, 1], dvt_cabin_err)
    ac_kprate = jnp.minimum(ac_kprate1, ac_kprate2)

    # ---- Pressure errors ----------------------------------------------------
    lo_pressure = col(4)
    hi_pressure = col(5)
    diff_hi_pressure = (col(7) - hi_pressure) * K_HIGH_PRESSURE
    diff_lo_pressure = (lo_pressure - col(6)) * K_LOW_PRESSURE

    # ---- PID gains (Ki_HP table folded to a scalar) --------------------------
    kp_hp = _interp1d(DIFF_KP_HP, PID_KP_HP, diff_hi_pressure) * ac_kprate
    kp_lp = _interp1d(DIFF_KP_LP, PID_KP_LP, diff_lo_pressure) * ac_kprate
    ki_lp = _interp1d(DIFF_KI_LP, PID_KI_LP, diff_lo_pressure) * ac_kprate

    # ---- PID branches with the zero initial state folded in -----------------
    # Ivalue_HP = where(|d_hp|<thr, 0, d_hp/2); Iout = Ki * Ivalue / 2
    # Diffout = Pout - (last_Pout + last_Dout) = Pout       (state == 0)
    iout_hp = (KI_HP_CONST * ac_kprate) * jnp.where(
        jnp.abs(diff_hi_pressure) < 0.39063, 0.0, diff_hi_pressure * 0.25)
    hp_ad = iout_hp + kp_hp * diff_hi_pressure

    # LP branch gate uses diff_hi_pressure, exactly as in the PyTorch source.
    iout_lp = ki_lp * jnp.where(
        jnp.abs(diff_hi_pressure) < 0.59375, 0.0, diff_lo_pressure * 0.25)
    lp_ad = iout_lp + kp_lp * diff_lo_pressure

    offset = jnp.minimum(hp_ad, lp_ad) * 85.0

    # ---- Minimum compressor speed -------------------------------------------
    com_speed_min1 = _interp2d(LO_PRESS_TABLE, HI_PRESS_TABLE,
                               COM_SPEED_MIN_TABLE, lo_pressure, hi_pressure)
    temp_amb_limit = jnp.clip(temp_amb, 10.0, 20.0)
    com_speed_min2 = _interp1d(COM_SPEED_MIN_TEMP_AMB[:, 0],
                               COM_SPEED_MIN_TEMP_AMB[:, 1], temp_amb_limit)
    com_speed_min = jnp.maximum(com_speed_min1, com_speed_min2)

    # ---- Rate limits on the offset ------------------------------------------
    mask5 = (col(11) > 0.0) & (col(10) > 0.0)
    # EVAP_TEMP interp is edge-clamped with min table value 1.0, so the
    # original clamp(min=1.0) is a no-op; the 500.0 term in the min-list is
    # dominated by the unconditional 200.0 term.
    temp_evap_up_max = jnp.where(
        mask5, _interp1d(EVAP_TEMP[:, 0], EVAP_TEMP[:, 1], col(9)), 200.0)
    max_up_change_spd1 = jnp.minimum(jnp.minimum(200.0, ac_kprate * 78.0),
                                     temp_evap_up_max)

    last_ac_pid_out_hp = col(0)
    mask6 = (last_ac_pid_out_hp + 10.0) > com_speed_min
    max_up_change_spd = jnp.where(mask6, max_up_change_spd1, 8500.0)
    max_down_change_spd = jnp.where(mask6, -200.0, -8500.0)
    # clamp(offset, max_down, max_up) — equivalent to the module's relu chain.
    offset = jnp.clip(offset, max_down_change_spd, max_up_change_spd)

    ac_pid_out_hp = last_ac_pid_out_hp + offset
    com_speed_min = jnp.where(ac_pid_out_hp < (com_speed_min - 120.0),
                              800.0, com_speed_min)
    ac_pid_out_hp = jnp.minimum(ac_pid_out_hp, 8000.0)
    ac_pid_out_hp = jnp.maximum(ac_pid_out_hp, com_speed_min)   # relu(x-m)+m

    o_ref[...] = ac_pid_out_hp.astype(o_ref.dtype)   # (TILE_ROWS, 128), lane-dense


# ----------------------------------------------------------------------------
# Wrapper: lane-dense layout + batch tiling with a parallel grid axis.
# ----------------------------------------------------------------------------
def ac_pid_forward(x, tile_rows=16):
    """x: (..., 15) float32 -> (N, 1) float32, N = prod(leading dims).

    tile_rows * 128 samples are processed per grid step (default 2048).
    tile_rows is clamped so the grid has >= 2 steps whenever the padded batch
    allows it (keeps both TensorCores busy on v7x)."""
    x = jnp.asarray(x, jnp.float32).reshape(-1, 15)
    n = x.shape[0]

    # Keep only the 12 features used by the forward pass (drop cols 9,10,11),
    # sliced before the transpose to minimize host-side layout traffic.
    x_used = jnp.concatenate([x[:, :9], x[:, 12:15]], axis=1)   # (N, 12)

    lane_rows = -(-n // 128)                           # ceil(n / 128)
    padded_rows = -(-lane_rows // 8) * 8               # sublane-aligned rows
    tile_rows = max(8, (int(tile_rows) // 8) * 8)
    if padded_rows >= 16:
        # guarantee >= 2 grid steps so the 'parallel' axis shards across TCs
        tile_rows = min(tile_rows, max(8, (padded_rows // 2) // 8 * 8))
    else:
        tile_rows = 8
    total_rows = -(-padded_rows // tile_rows) * tile_rows
    n_pad = total_rows * 128

    # (N, 12) -> (12, N_pad) -> (12, total_rows, 128): batch on sublanes+lanes.
    xt = jnp.pad(x_used.T, ((0, 0), (0, n_pad - n))).reshape(12, total_rows, 128)

    out = pl.pallas_call(
        pid_kernel,
        out_shape=jax.ShapeDtypeStruct((total_rows, 128), jnp.float32),
        grid=(total_rows // tile_rows,),
        in_specs=[pl.BlockSpec((12, tile_rows, 128), lambda i: (0, i, 0))],
        out_specs=pl.BlockSpec((tile_rows, 128), lambda i: (i, 0)),
        compiler_params=pltpu.CompilerParams(
            dimension_semantics=("parallel",)),   # shards across 2 TCs on v7x
    )(xt)

    return out.reshape(-1)[:n].reshape(n, 1)


if __name__ == "__main__":
    key = jax.random.PRNGKey(0)
    n = 8
    u = jax.random.uniform(key, (n, 15), dtype=jnp.float32)  # in [0, 1)

    # scale each feature column into a physically sensible range
    lo = jnp.array([800.0, -10.0, 18.0, 18.0, 100.0, 200.0, 100.0, 200.0,
                    15.0, 20.0, 20.0, 20.0, 0.0, 0.0, 0.0], jnp.float32)
    hi = jnp.array([5000.0, 40.0, 32.0, 32.0, 550.0, 2000.0, 550.0, 2000.0,
                    35.0, 35.0, 35.0, 35.0, 10.0, 1.0, 1.0], jnp.float32)
    x = lo + u * (hi - lo)
    # make the two mode flags crisp 0/1 values
    x = x.at[:, 13].set(jnp.round(x[:, 13]))
    x = x.at[:, 14].set(jnp.round(x[:, 14]))

    out = ac_pid_forward(x)
    out = jax.block_until_ready(out)
    assert out.shape == (n, 1)
    assert bool(jnp.all(jnp.isfinite(out)))
    print("KERNEL_OK")
</pallas_src>

<mosaic_0001>
module attributes {stable_mosaic.version = 11 : i64} {
  func.func @pid_kernel(%arg0: i32, %arg1: memref<12x8x128xf32, #tpu.memory_space<vmem>>, %arg2: memref<8x128xf32, #tpu.memory_space<vmem>>) attributes {dimension_semantics = [#tpu.dimension_semantics<parallel>], iteration_bounds = array<i64: 1>, scalar_prefetch = 0 : i64, scratch_operands = 0 : i64, tpu.core_type = #tpu.core_type<tc>, window_params = [{transform_indices = @transform_0, window_bounds = array<i64: 12, 8, 128>}, {transform_indices = @transform_1, window_bounds = array<i64: 8, 128>}]} {
    %c1 = arith.constant 1 : index
    %c0 = arith.constant 0 : index
    %c0_0 = arith.constant 0 : index
    %0 = vector.load %arg1[%c1, %c0, %c0_0] : memref<12x8x128xf32, #tpu.memory_space<vmem>>, vector<1x8x128xf32>
    %1 = vector.shape_cast %0 : vector<1x8x128xf32> to vector<8x128xf32>
    %cst = arith.constant -2.000000e+01 : f32
    %cst_1 = arith.constant 4.500000e+01 : f32
    %2 = vector.broadcast %cst : f32 to vector<8x128xf32>
    %3 = arith.maximumf %2, %1 : vector<8x128xf32>
    %4 = vector.broadcast %cst_1 : f32 to vector<8x128xf32>
    %5 = arith.minimumf %4, %3 : vector<8x128xf32>
    %cst_2 = arith.constant -1.000000e-01 : f32
    %6 = vector.broadcast %cst_2 : f32 to vector<8x128xf32>
    %7 = arith.mulf %5, %6 : vector<8x128xf32>
    %cst_3 = arith.constant 1.000000e+00 : f32
    %8 = vector.broadcast %cst_3 : f32 to vector<8x128xf32>
    %9 = arith.addf %7, %8 : vector<8x128xf32>
    %cst_4 = arith.constant -2.000000e+01 : f32
    %10 = vector.broadcast %cst_4 : f32 to vector<8x128xf32>
    %11 = arith.cmpf oge, %5, %10 : vector<8x128xf32>
    %cst_5 = arith.constant 3.000000e+00 : f32
    %12 = vector.broadcast %cst_5 : f32 to vector<8x128xf32>
    %13 = arith.select %11, %9, %12 : vector<8x128xi1>, vector<8x128xf32>
    %cst_6 = arith.constant -1.120000e-01 : f32
    %14 = vector.broadcast %cst_6 : f32 to vector<8x128xf32>
    %15 = arith.mulf %5, %14 : vector<8x128xf32>
    %cst_7 = arith.constant 0.879999995 : f32
    %16 = vector.broadcast %cst_7 : f32 to vector<8x128xf32>
    %17 = arith.addf %15, %16 : vector<8x128xf32>
    %cst_8 = arith.constant -1.000000e+01 : f32
    %18 = vector.broadcast %cst_8 : f32 to vector<8x128xf32>
    %19 = arith.cmpf oge, %5, %18 : vector<8x128xf32>
    %20 = arith.select %19, %17, %13 : vector<8x128xi1>, vector<8x128xf32>
    %cst_9 = arith.constant -5.000000e-02 : f32
    %21 = vector.broadcast %cst_9 : f32 to vector<8x128xf32>
    %22 = arith.mulf %5, %21 : vector<8x128xf32>
    %cst_10 = arith.constant 0.879999995 : f32
    %23 = vector.broadcast %cst_10 : f32 to vector<8x128xf32>
    %24 = arith.addf %22, %23 : vector<8x128xf32>
    %cst_11 = arith.constant 0.000000e+00 : f32
    %25 = vector.broadcast %cst_11 : f32 to vector<8x128xf32>
    %26 = arith.cmpf oge, %5, %25 : vector<8x128xf32>
    %27 = arith.select %26, %24, %20 : vector<8x128xi1>, vector<8x128xf32>
    %cst_12 = arith.constant 0.0213333331 : f32
    %28 = vector.broadcast %cst_12 : f32 to vector<8x128xf32>
    %29 = arith.mulf %5, %28 : vector<8x128xf32>
    %cst_13 = arith.constant 0.166666672 : f32
    %30 = vector.broadcast %cst_13 : f32 to vector<8x128xf32>
    %31 = arith.addf %29, %30 : vector<8x128xf32>
    %cst_14 = arith.constant 1.000000e+01 : f32
    %32 = vector.broadcast %cst_14 : f32 to vector<8x128xf32>
    %33 = arith.cmpf oge, %5, %32 : vector<8x128xf32>
    %34 = arith.select %33, %31, %27 : vector<8x128xi1>, vector<8x128xf32>
    %cst_15 = arith.constant 6.000000e-02 : f32
    %35 = vector.broadcast %cst_15 : f32 to vector<8x128xf32>
    %36 = arith.mulf %5, %35 : vector<8x128xf32>
    %cst_16 = arith.constant -8.000000e-01 : f32
    %37 = vector.broadcast %cst_16 : f32 to vector<8x128xf32>
    %38 = arith.addf %36, %37 : vector<8x128xf32>
    %cst_17 = arith.constant 2.500000e+01 : f32
    %39 = vector.broadcast %cst_17 : f32 to vector<8x128xf32>
    %40 = arith.cmpf oge, %5, %39 : vector<8x128xf32>
    %41 = arith.select %40, %38, %34 : vector<8x128xi1>, vector<8x128xf32>
    %cst_18 = arith.constant 6.200000e-02 : f32
    %42 = vector.broadcast %cst_18 : f32 to vector<8x128xf32>
    %43 = arith.mulf %5, %42 : vector<8x128xf32>
    %cst_19 = arith.constant -8.600000e-01 : f32
    %44 = vector.broadcast %cst_19 : f32 to vector<8x128xf32>
    %45 = arith.addf %43, %44 : vector<8x128xf32>
    %cst_20 = arith.constant 3.000000e+01 : f32
    %46 = vector.broadcast %cst_20 : f32 to vector<8x128xf32>
    %47 = arith.cmpf oge, %5, %46 : vector<8x128xf32>
    %48 = arith.select %47, %45, %41 : vector<8x128xi1>, vector<8x128xf32>
    %cst_21 = arith.constant 2.380000e-01 : f32
    %49 = vector.broadcast %cst_21 : f32 to vector<8x128xf32>
    %50 = arith.mulf %5, %49 : vector<8x128xf32>
    %cst_22 = arith.constant -7.020000e+00 : f32
    %51 = vector.broadcast %cst_22 : f32 to vector<8x128xf32>
    %52 = arith.addf %50, %51 : vector<8x128xf32>
    %cst_23 = arith.constant 3.500000e+01 : f32
    %53 = vector.broadcast %cst_23 : f32 to vector<8x128xf32>
    %54 = arith.cmpf oge, %5, %53 : vector<8x128xf32>
    %55 = arith.select %54, %52, %48 : vector<8x128xi1>, vector<8x128xf32>
    %cst_24 = arith.constant 1.000000e-01 : f32
    %56 = vector.broadcast %cst_24 : f32 to vector<8x128xf32>
    %57 = arith.mulf %5, %56 : vector<8x128xf32>
    %cst_25 = arith.constant -1.500000e+00 : f32
    %58 = vector.broadcast %cst_25 : f32 to vector<8x128xf32>
    %59 = arith.addf %57, %58 : vector<8x128xf32>
    %cst_26 = arith.constant 4.000000e+01 : f32
    %60 = vector.broadcast %cst_26 : f32 to vector<8x128xf32>
    %61 = arith.cmpf oge, %5, %60 : vector<8x128xf32>
    %62 = arith.select %61, %59, %55 : vector<8x128xi1>, vector<8x128xf32>
    %c2 = arith.constant 2 : index
    %c0_27 = arith.constant 0 : index
    %c0_28 = arith.constant 0 : index
    %63 = vector.load %arg1[%c2, %c0_27, %c0_28] : memref<12x8x128xf32, #tpu.memory_space<vmem>>, vector<1x8x128xf32>
    %64 = vector.shape_cast %63 : vector<1x8x128xf32> to vector<8x128xf32>
    %c3 = arith.constant 3 : index
    %c0_29 = arith.constant 0 : index
    %c0_30 = arith.constant 0 : index
    %65 = vector.load %arg1[%c3, %c0_29, %c0_30] : memref<12x8x128xf32, #tpu.memory_space<vmem>>, vector<1x8x128xf32>
    %66 = vector.shape_cast %65 : vector<1x8x128xf32> to vector<8x128xf32>
    %67 = arith.minimumf %64, %66 : vector<8x128xf32>
    %cst_31 = arith.constant 1.800000e+01 : f32
    %cst_32 = arith.constant 3.200000e+01 : f32
    %68 = vector.broadcast %cst_31 : f32 to vector<8x128xf32>
    %69 = arith.maximumf %68, %67 : vector<8x128xf32>
    %70 = vector.broadcast %cst_32 : f32 to vector<8x128xf32>
    %71 = arith.minimumf %70, %69 : vector<8x128xf32>
    %cst_33 = arith.constant -3.000000e+01 : f32
    %cst_34 = arith.constant 5.000000e+01 : f32
    %72 = vector.broadcast %cst_33 : f32 to vector<8x128xf32>
    %73 = arith.maximumf %72, %1 : vector<8x128xf32>
    %74 = vector.broadcast %cst_34 : f32 to vector<8x128xf32>
    %75 = arith.minimumf %74, %73 : vector<8x128xf32>
    %cst_35 = arith.constant 0.000000e+00 : f32
    %76 = vector.broadcast %cst_35 : f32 to vector<8x128xf32>
    %77 = arith.mulf %75, %76 : vector<8x128xf32>
    %cst_36 = arith.constant 2.000000e+01 : f32
    %78 = vector.broadcast %cst_36 : f32 to vector<8x128xf32>
    %79 = arith.addf %77, %78 : vector<8x128xf32>
    %cst_37 = arith.constant -3.000000e+01 : f32
    %80 = vector.broadcast %cst_37 : f32 to vector<8x128xf32>
    %81 = arith.cmpf oge, %75, %80 : vector<8x128xf32>
    %cst_38 = arith.constant 2.000000e+01 : f32
    %82 = vector.broadcast %cst_38 : f32 to vector<8x128xf32>
    %83 = arith.select %81, %79, %82 : vector<8x128xi1>, vector<8x128xf32>
    %cst_39 = arith.constant -5.000000e-02 : f32
    %84 = vector.broadcast %cst_39 : f32 to vector<8x128xf32>
    %85 = arith.mulf %75, %84 : vector<8x128xf32>
    %cst_40 = arith.constant 1.900000e+01 : f32
    %86 = vector.broadcast %cst_40 : f32 to vector<8x128xf32>
    %87 = arith.addf %85, %86 : vector<8x128xf32>
    %cst_41 = arith.constant -2.000000e+01 : f32
    %88 = vector.broadcast %cst_41 : f32 to vector<8x128xf32>
    %89 = arith.cmpf oge, %75, %88 : vector<8x128xf32>
    %90 = arith.select %89, %87, %83 : vector<8x128xi1>, vector<8x128xf32>
    %cst_42 = arith.constant 0.000000e+00 : f32
    %91 = vector.broadcast %cst_42 : f32 to vector<8x128xf32>
    %92 = arith.mulf %75, %91 : vector<8x128xf32>
    %cst_43 = arith.constant 1.950000e+01 : f32
    %93 = vector.broadcast %cst_43 : f32 to vector<8x128xf32>
    %94 = arith.addf %92, %93 : vector<8x128xf32>
    %cst_44 = arith.constant -1.000000e+01 : f32
    %95 = vector.broadcast %cst_44 : f32 to vector<8x128xf32>
    %96 = arith.cmpf oge, %75, %95 : vector<8x128xf32>
    %97 = arith.select %96, %94, %90 : vector<8x128xi1>, vector<8x128xf32>
    %cst_45 = arith.constant 0.000000e+00 : f32
    %98 = vector.broadcast %cst_45 : f32 to vector<8x128xf32>
    %99 = arith.mulf %75, %98 : vector<8x128xf32>
    %cst_46 = arith.constant 1.950000e+01 : f32
    %100 = vector.broadcast %cst_46 : f32 to vector<8x128xf32>
    %101 = arith.addf %99, %100 : vector<8x128xf32>
    %cst_47 = arith.constant 0.000000e+00 : f32
    %102 = vector.broadcast %cst_47 : f32 to vector<8x128xf32>
    %103 = arith.cmpf oge, %75, %102 : vector<8x128xf32>
    %104 = arith.select %103, %101, %97 : vector<8x128xi1>, vector<8x128xf32>
    %cst_48 = arith.constant -1.000000e-01 : f32
    %105 = vector.broadcast %cst_48 : f32 to vector<8x128xf32>
    %106 = arith.mulf %75, %105 : vector<8x128xf32>
    %cst_49 = arith.constant 2.000000e+01 : f32
    %107 = vector.broadcast %cst_49 : f32 to vector<8x128xf32>
    %108 = arith.addf %106, %107 : vector<8x128xf32>
    %cst_50 = arith.constant 5.000000e+00 : f32
    %109 = vector.broadcast %cst_50 : f32 to vector<8x128xf32>
    %110 = arith.cmpf oge, %75, %109 : vector<8x128xf32>
    %111 = arith.select %110, %108, %104 : vector<8x128xi1>, vector<8x128xf32>
    %cst_51 = arith.constant 0.000000e+00 : f32
    %112 = vector.broadcast %cst_51 : f32 to vector<8x128xf32>
    %113 = arith.mulf %75, %112 : vector<8x128xf32>
    %cst_52 = arith.constant 1.900000e+01 : f32
    %114 = vector.broadcast %cst_52 : f32 to vector<8x128xf32>
    %115 = arith.addf %113, %114 : vector<8x128xf32>
    %cst_53 = arith.constant 1.000000e+01 : f32
    %116 = vector.broadcast %cst_53 : f32 to vector<8x128xf32>
    %117 = arith.cmpf oge, %75, %116 : vector<8x128xf32>
    %118 = arith.select %117, %115, %111 : vector<8x128xi1>, vector<8x128xf32>
    %cst_54 = arith.constant 0.000000e+00 : f32
    %119 = vector.broadcast %cst_54 : f32 to vector<8x128xf32>
    %120 = arith.mulf %75, %119 : vector<8x128xf32>
    %cst_55 = arith.constant 1.900000e+01 : f32
    %121 = vector.broadcast %cst_55 : f32 to vector<8x128xf32>
    %122 = arith.addf %120, %121 : vector<8x128xf32>
    %cst_56 = arith.constant 1.500000e+01 : f32
    %123 = vector.broadcast %cst_56 : f32 to vector<8x128xf32>
    %124 = arith.cmpf oge, %75, %123 : vector<8x128xf32>
    %125 = arith.select %124, %122, %118 : vector<8x128xi1>, vector<8x128xf32>
    %cst_57 = arith.constant -1.000000e-01 : f32
    %126 = vector.broadcast %cst_57 : f32 to vector<8x128xf32>
    %127 = arith.mulf %75, %126 : vector<8x128xf32>
    %cst_58 = arith.constant 2.100000e+01 : f32
    %128 = vector.broadcast %cst_58 : f32 to vector<8x128xf32>
    %129 = arith.addf %127, %128 : vector<8x128xf32>
    %cst_59 = arith.constant 2.000000e+01 : f32
    %130 = vector.broadcast %cst_59 : f32 to vector<8x128xf32>
    %131 = arith.cmpf oge, %75, %130 : vector<8x128xf32>
    %132 = arith.select %131, %129, %125 : vector<8x128xi1>, vector<8x128xf32>
    %cst_60 = arith.constant 0.000000e+00 : f32
    %133 = vector.broadcast %cst_60 : f32 to vector<8x128xf32>
    %134 = arith.mulf %75, %133 : vector<8x128xf32>
    %cst_61 = arith.constant 1.850000e+01 : f32
    %135 = vector.broadcast %cst_61 : f32 to vector<8x128xf32>
    %136 = arith.addf %134, %135 : vector<8x128xf32>
    %cst_62 = arith.constant 2.500000e+01 : f32
    %137 = vector.broadcast %cst_62 : f32 to vector<8x128xf32>
    %138 = arith.cmpf oge, %75, %137 : vector<8x128xf32>
    %139 = arith.select %138, %136, %132 : vector<8x128xi1>, vector<8x128xf32>
    %cst_63 = arith.constant -1.000000e-01 : f32
    %140 = vector.broadcast %cst_63 : f32 to vector<8x128xf32>
    %141 = arith.mulf %75, %140 : vector<8x128xf32>
    %cst_64 = arith.constant 2.150000e+01 : f32
    %142 = vector.broadcast %cst_64 : f32 to vector<8x128xf32>
    %143 = arith.addf %141, %142 : vector<8x128xf32>
    %cst_65 = arith.constant 3.000000e+01 : f32
    %144 = vector.broadcast %cst_65 : f32 to vector<8x128xf32>
    %145 = arith.cmpf oge, %75, %144 : vector<8x128xf32>
    %146 = arith.select %145, %143, %139 : vector<8x128xi1>, vector<8x128xf32>
    %cst_66 = arith.constant 0.000000e+00 : f32
    %147 = vector.broadcast %cst_66 : f32 to vector<8x128xf32>
    %148 = arith.mulf %75, %147 : vector<8x128xf32>
    %cst_67 = arith.constant 1.800000e+01 : f32
    %149 = vector.broadcast %cst_67 : f32 to vector<8x128xf32>
    %150 = arith.addf %148, %149 : vector<8x128xf32>
    %cst_68 = arith.constant 3.500000e+01 : f32
    %151 = vector.broadcast %cst_68 : f32 to vector<8x128xf32>
    %152 = arith.cmpf oge, %75, %151 : vector<8x128xf32>
    %153 = arith.select %152, %150, %146 : vector<8x128xi1>, vector<8x128xf32>
    %cst_69 = arith.constant 0.000000e+00 : f32
    %154 = vector.broadcast %cst_69 : f32 to vector<8x128xf32>
    %155 = arith.mulf %75, %154 : vector<8x128xf32>
    %cst_70 = arith.constant 1.800000e+01 : f32
    %156 = vector.broadcast %cst_70 : f32 to vector<8x128xf32>
    %157 = arith.addf %155, %156 : vector<8x128xf32>
    %cst_71 = arith.constant 4.000000e+01 : f32
    %158 = vector.broadcast %cst_71 : f32 to vector<8x128xf32>
    %159 = arith.cmpf oge, %75, %158 : vector<8x128xf32>
    %160 = arith.select %159, %157, %153 : vector<8x128xi1>, vector<8x128xf32>
    %cst_72 = arith.constant 0.000000e+00 : f32
    %161 = vector.broadcast %cst_72 : f32 to vector<8x128xf32>
    %162 = arith.mulf %75, %161 : vector<8x128xf32>
    %cst_73 = arith.constant 1.800000e+01 : f32
    %163 = vector.broadcast %cst_73 : f32 to vector<8x128xf32>
    %164 = arith.addf %162, %163 : vector<8x128xf32>
    %cst_74 = arith.constant 4.500000e+01 : f32
    %165 = vector.broadcast %cst_74 : f32 to vector<8x128xf32>
    %166 = arith.cmpf oge, %75, %165 : vector<8x128xf32>
    %167 = arith.select %166, %164, %160 : vector<8x128xi1>, vector<8x128xf32>
    %cst_75 = arith.constant 5.000000e-01 : f32
    %168 = vector.broadcast %cst_75 : f32 to vector<8x128xf32>
    %169 = arith.mulf %71, %168 : vector<8x128xf32>
    %cst_76 = arith.constant -9.000000e+00 : f32
    %170 = vector.broadcast %cst_76 : f32 to vector<8x128xf32>
    %171 = arith.addf %169, %170 : vector<8x128xf32>
    %cst_77 = arith.constant 1.700000e+01 : f32
    %172 = vector.broadcast %cst_77 : f32 to vector<8x128xf32>
    %173 = arith.subf %167, %172 : vector<8x128xf32>
    %174 = arith.mulf %171, %173 : vector<8x128xf32>
    %cst_78 = arith.constant 1.700000e+01 : f32
    %175 = vector.broadcast %cst_78 : f32 to vector<8x128xf32>
    %176 = arith.addf %175, %174 : vector<8x128xf32>
    %cst_79 = arith.constant 1.800000e+01 : f32
    %177 = vector.broadcast %cst_79 : f32 to vector<8x128xf32>
    %178 = arith.cmpf oge, %71, %177 : vector<8x128xf32>
    %cst_80 = arith.constant 1.700000e+01 : f32
    %179 = vector.broadcast %cst_80 : f32 to vector<8x128xf32>
    %180 = arith.select %178, %176, %179 : vector<8x128xi1>, vector<8x128xf32>
    %cst_81 = arith.constant -3.000000e+01 : f32
    %cst_82 = arith.constant 5.000000e+01 : f32
    %181 = vector.broadcast %cst_81 : f32 to vector<8x128xf32>
    %182 = arith.maximumf %181, %1 : vector<8x128xf32>
    %183 = vector.broadcast %cst_82 : f32 to vector<8x128xf32>
    %184 = arith.minimumf %183, %182 : vector<8x128xf32>
    %cst_83 = arith.constant 0.000000e+00 : f32
    %185 = vector.broadcast %cst_83 : f32 to vector<8x128xf32>
    %186 = arith.mulf %184, %185 : vector<8x128xf32>
    %cst_84 = arith.constant 2.200000e+01 : f32
    %187 = vector.broadcast %cst_84 : f32 to vector<8x128xf32>
    %188 = arith.addf %186, %187 : vector<8x128xf32>
    %cst_85 = arith.constant -3.000000e+01 : f32
    %189 = vector.broadcast %cst_85 : f32 to vector<8x128xf32>
    %190 = arith.cmpf oge, %184, %189 : vector<8x128xf32>
    %cst_86 = arith.constant 2.200000e+01 : f32
    %191 = vector.broadcast %cst_86 : f32 to vector<8x128xf32>
    %192 = arith.select %190, %188, %191 : vector<8x128xi1>, vector<8x128xf32>
    %cst_87 = arith.constant 0.000000e+00 : f32
    %193 = vector.broadcast %cst_87 : f32 to vector<8x128xf32>
    %194 = arith.mulf %184, %193 : vector<8x128xf32>
    %cst_88 = arith.constant 2.200000e+01 : f32
    %195 = vector.broadcast %cst_88 : f32 to vector<8x128xf32>
    %196 = arith.addf %194, %195 : vector<8x128xf32>
    %cst_89 = arith.constant -2.000000e+01 : f32
    %197 = vector.broadcast %cst_89 : f32 to vector<8x128xf32>
    %198 = arith.cmpf oge, %184, %197 : vector<8x128xf32>
    %199 = arith.select %198, %196, %192 : vector<8x128xi1>, vector<8x128xf32>
    %cst_90 = arith.constant 5.000000e-02 : f32
    %200 = vector.broadcast %cst_90 : f32 to vector<8x128xf32>
    %201 = arith.mulf %184, %200 : vector<8x128xf32>
    %cst_91 = arith.constant 2.250000e+01 : f32
    %202 = vector.broadcast %cst_91 : f32 to vector<8x128xf32>
    %203 = arith.addf %201, %202 : vector<8x128xf32>
    %cst_92 = arith.constant -1.000000e+01 : f32
    %204 = vector.broadcast %cst_92 : f32 to vector<8x128xf32>
    %205 = arith.cmpf oge, %184, %204 : vector<8x128xf32>
    %206 = arith.select %205, %203, %199 : vector<8x128xi1>, vector<8x128xf32>
    %cst_93 = arith.constant 0.000000e+00 : f32
    %207 = vector.broadcast %cst_93 : f32 to vector<8x128xf32>
    %208 = arith.mulf %184, %207 : vector<8x128xf32>
    %cst_94 = arith.constant 2.250000e+01 : f32
    %209 = vector.broadcast %cst_94 : f32 to vector<8x128xf32>
    %210 = arith.addf %208, %209 : vector<8x128xf32>
    %cst_95 = arith.constant 0.000000e+00 : f32
    %211 = vector.broadcast %cst_95 : f32 to vector<8x128xf32>
    %212 = arith.cmpf oge, %184, %211 : vector<8x128xf32>
    %213 = arith.select %212, %210, %206 : vector<8x128xi1>, vector<8x128xf32>
    %cst_96 = arith.constant 0.000000e+00 : f32
    %214 = vector.broadcast %cst_96 : f32 to vector<8x128xf32>
    %215 = arith.mulf %184, %214 : vector<8x128xf32>
    %cst_97 = arith.constant 2.250000e+01 : f32
    %216 = vector.broadcast %cst_97 : f32 to vector<8x128xf32>
    %217 = arith.addf %215, %216 : vector<8x128xf32>
    %cst_98 = arith.constant 5.000000e+00 : f32
    %218 = vector.broadcast %cst_98 : f32 to vector<8x128xf32>
    %219 = arith.cmpf oge, %184, %218 : vector<8x128xf32>
    %220 = arith.select %219, %217, %213 : vector<8x128xi1>, vector<8x128xf32>
    %cst_99 = arith.constant -1.000000e-01 : f32
    %221 = vector.broadcast %cst_99 : f32 to vector<8x128xf32>
    %222 = arith.mulf %184, %221 : vector<8x128xf32>
    %cst_100 = arith.constant 2.350000e+01 : f32
    %223 = vector.broadcast %cst_100 : f32 to vector<8x128xf32>
    %224 = arith.addf %222, %223 : vector<8x128xf32>
    %cst_101 = arith.constant 1.000000e+01 : f32
    %225 = vector.broadcast %cst_101 : f32 to vector<8x128xf32>
    %226 = arith.cmpf oge, %184, %225 : vector<8x128xf32>
    %227 = arith.select %226, %224, %220 : vector<8x128xi1>, vector<8x128xf32>
    %cst_102 = arith.constant 0.000000e+00 : f32
    %228 = vector.broadcast %cst_102 : f32 to vector<8x128xf32>
    %229 = arith.mulf %184, %228 : vector<8x128xf32>
    %cst_103 = arith.constant 2.200000e+01 : f32
    %230 = vector.broadcast %cst_103 : f32 to vector<8x128xf32>
    %231 = arith.addf %229, %230 : vector<8x128xf32>
    %cst_104 = arith.constant 1.500000e+01 : f32
    %232 = vector.broadcast %cst_104 : f32 to vector<8x128xf32>
    %233 = arith.cmpf oge, %184, %232 : vector<8x128xf32>
    %234 = arith.select %233, %231, %227 : vector<8x128xi1>, vector<8x128xf32>
    %cst_105 = arith.constant -2.000000e-01 : f32
    %235 = vector.broadcast %cst_105 : f32 to vector<8x128xf32>
    %236 = arith.mulf %184, %235 : vector<8x128xf32>
    %cst_106 = arith.constant 2.600000e+01 : f32
    %237 = vector.broadcast %cst_106 : f32 to vector<8x128xf32>
    %238 = arith.addf %236, %237 : vector<8x128xf32>
    %cst_107 = arith.constant 2.000000e+01 : f32
    %239 = vector.broadcast %cst_107 : f32 to vector<8x128xf32>
    %240 = arith.cmpf oge, %184, %239 : vector<8x128xf32>
    %241 = arith.select %240, %238, %234 : vector<8x128xi1>, vector<8x128xf32>
    %cst_108 = arith.constant 0.000000e+00 : f32
    %242 = vector.broadcast %cst_108 : f32 to vector<8x128xf32>
    %243 = arith.mulf %184, %242 : vector<8x128xf32>
    %cst_109 = arith.constant 2.100000e+01 : f32
    %244 = vector.broadcast %cst_109 : f32 to vector<8x128xf32>
    %245 = arith.addf %243, %244 : vector<8x128xf32>
    %cst_110 = arith.constant 2.500000e+01 : f32
    %246 = vector.broadcast %cst_110 : f32 to vector<8x128xf32>
    %247 = arith.cmpf oge, %184, %246 : vector<8x128xf32>
    %248 = arith.select %247, %245, %241 : vector<8x128xi1>, vector<8x128xf32>
    %cst_111 = arith.constant 0.000000e+00 : f32
    %249 = vector.broadcast %cst_111 : f32 to vector<8x128xf32>
    %250 = arith.mulf %184, %249 : vector<8x128xf32>
    %cst_112 = arith.constant 2.100000e+01 : f32
    %251 = vector.broadcast %cst_112 : f32 to vector<8x128xf32>
    %252 = arith.addf %250, %251 : vector<8x128xf32>
    %cst_113 = arith.constant 3.000000e+01 : f32
    %253 = vector.broadcast %cst_113 : f32 to vector<8x128xf32>
    %254 = arith.cmpf oge, %184, %253 : vector<8x128xf32>
    %255 = arith.select %254, %252, %248 : vector<8x128xi1>, vector<8x128xf32>
    %cst_114 = arith.constant 0.000000e+00 : f32
    %256 = vector.broadcast %cst_114 : f32 to vector<8x128xf32>
    %257 = arith.mulf %184, %256 : vector<8x128xf32>
    %cst_115 = arith.constant 2.100000e+01 : f32
    %258 = vector.broadcast %cst_115 : f32 to vector<8x128xf32>
    %259 = arith.addf %257, %258 : vector<8x128xf32>
    %cst_116 = arith.constant 3.500000e+01 : f32
    %260 = vector.broadcast %cst_116 : f32 to vector<8x128xf32>
    %261 = arith.cmpf oge, %184, %260 : vector<8x128xf32>
    %262 = arith.select %261, %259, %255 : vector<8x128xi1>, vector<8x128xf32>
    %cst_117 = arith.constant -1.000000e-01 : f32
    %263 = vector.broadcast %cst_117 : f32 to vector<8x128xf32>
    %264 = arith.mulf %184, %263 : vector<8x128xf32>
    %cst_118 = arith.constant 2.500000e+01 : f32
    %265 = vector.broadcast %cst_118 : f32 to vector<8x128xf32>
    %266 = arith.addf %264, %265 : vector<8x128xf32>
    %cst_119 = arith.constant 4.000000e+01 : f32
    %267 = vector.broadcast %cst_119 : f32 to vector<8x128xf32>
    %268 = arith.cmpf oge, %184, %267 : vector<8x128xf32>
    %269 = arith.select %268, %266, %262 : vector<8x128xi1>, vector<8x128xf32>
    %cst_120 = arith.constant -1.000000e-01 : f32
    %270 = vector.broadcast %cst_120 : f32 to vector<8x128xf32>
    %271 = arith.mulf %184, %270 : vector<8x128xf32>
    %cst_121 = arith.constant 2.500000e+01 : f32
    %272 = vector.broadcast %cst_121 : f32 to vector<8x128xf32>
    %273 = arith.addf %271, %272 : vector<8x128xf32>
    %cst_122 = arith.constant 4.500000e+01 : f32
    %274 = vector.broadcast %cst_122 : f32 to vector<8x128xf32>
    %275 = arith.cmpf oge, %184, %274 : vector<8x128xf32>
    %276 = arith.select %275, %273, %269 : vector<8x128xi1>, vector<8x128xf32>
    %cst_123 = arith.constant 5.000000e-01 : f32
    %277 = vector.broadcast %cst_123 : f32 to vector<8x128xf32>
    %278 = arith.mulf %71, %277 : vector<8x128xf32>
    %cst_124 = arith.constant -1.000000e+01 : f32
    %279 = vector.broadcast %cst_124 : f32 to vector<8x128xf32>
    %280 = arith.addf %278, %279 : vector<8x128xf32>
    %281 = arith.subf %276, %167 : vector<8x128xf32>
    %282 = arith.mulf %280, %281 : vector<8x128xf32>
    %283 = arith.addf %167, %282 : vector<8x128xf32>
    %cst_125 = arith.constant 2.000000e+01 : f32
    %284 = vector.broadcast %cst_125 : f32 to vector<8x128xf32>
    %285 = arith.cmpf oge, %71, %284 : vector<8x128xf32>
    %286 = arith.select %285, %283, %180 : vector<8x128xi1>, vector<8x128xf32>
    %cst_126 = arith.constant -3.000000e+01 : f32
    %cst_127 = arith.constant 5.000000e+01 : f32
    %287 = vector.broadcast %cst_126 : f32 to vector<8x128xf32>
    %288 = arith.maximumf %287, %1 : vector<8x128xf32>
    %289 = vector.broadcast %cst_127 : f32 to vector<8x128xf32>
    %290 = arith.minimumf %289, %288 : vector<8x128xf32>
    %cst_128 = arith.constant 5.000000e-02 : f32
    %291 = vector.broadcast %cst_128 : f32 to vector<8x128xf32>
    %292 = arith.mulf %290, %291 : vector<8x128xf32>
    %cst_129 = arith.constant 2.550000e+01 : f32
    %293 = vector.broadcast %cst_129 : f32 to vector<8x128xf32>
    %294 = arith.addf %292, %293 : vector<8x128xf32>
    %cst_130 = arith.constant -3.000000e+01 : f32
    %295 = vector.broadcast %cst_130 : f32 to vector<8x128xf32>
    %296 = arith.cmpf oge, %290, %295 : vector<8x128xf32>
    %cst_131 = arith.constant 2.400000e+01 : f32
    %297 = vector.broadcast %cst_131 : f32 to vector<8x128xf32>
    %298 = arith.select %296, %294, %297 : vector<8x128xi1>, vector<8x128xf32>
    %cst_132 = arith.constant 1.000000e-01 : f32
    %299 = vector.broadcast %cst_132 : f32 to vector<8x128xf32>
    %300 = arith.mulf %290, %299 : vector<8x128xf32>
    %cst_133 = arith.constant 2.650000e+01 : f32
    %301 = vector.broadcast %cst_133 : f32 to vector<8x128xf32>
    %302 = arith.addf %300, %301 : vector<8x128xf32>
    %cst_134 = arith.constant -2.000000e+01 : f32
    %303 = vector.broadcast %cst_134 : f32 to vector<8x128xf32>
    %304 = arith.cmpf oge, %290, %303 : vector<8x128xf32>
    %305 = arith.select %304, %302, %298 : vector<8x128xi1>, vector<8x128xf32>
    %cst_135 = arith.constant 0.000000e+00 : f32
    %306 = vector.broadcast %cst_135 : f32 to vector<8x128xf32>
    %307 = arith.mulf %290, %306 : vector<8x128xf32>
    %cst_136 = arith.constant 2.550000e+01 : f32
    %308 = vector.broadcast %cst_136 : f32 to vector<8x128xf32>
    %309 = arith.addf %307, %308 : vector<8x128xf32>
    %cst_137 = arith.constant -1.000000e+01 : f32
    %310 = vector.broadcast %cst_137 : f32 to vector<8x128xf32>
    %311 = arith.cmpf oge, %290, %310 : vector<8x128xf32>
    %312 = arith.select %311, %309, %305 : vector<8x128xi1>, vector<8x128xf32>
    %cst_138 = arith.constant 1.000000e-01 : f32
    %313 = vector.broadcast %cst_138 : f32 to vector<8x128xf32>
    %314 = arith.mulf %290, %313 : vector<8x128xf32>
    %cst_139 = arith.constant 2.550000e+01 : f32
    %315 = vector.broadcast %cst_139 : f32 to vector<8x128xf32>
    %316 = arith.addf %314, %315 : vector<8x128xf32>
    %cst_140 = arith.constant 0.000000e+00 : f32
    %317 = vector.broadcast %cst_140 : f32 to vector<8x128xf32>
    %318 = arith.cmpf oge, %290, %317 : vector<8x128xf32>
    %319 = arith.select %318, %316, %312 : vector<8x128xi1>, vector<8x128xf32>
    %cst_141 = arith.constant 0.000000e+00 : f32
    %320 = vector.broadcast %cst_141 : f32 to vector<8x128xf32>
    %321 = arith.mulf %290, %320 : vector<8x128xf32>
    %cst_142 = arith.constant 2.600000e+01 : f32
    %322 = vector.broadcast %cst_142 : f32 to vector<8x128xf32>
    %323 = arith.addf %321, %322 : vector<8x128xf32>
    %cst_143 = arith.constant 5.000000e+00 : f32
    %324 = vector.broadcast %cst_143 : f32 to vector<8x128xf32>
    %325 = arith.cmpf oge, %290, %324 : vector<8x128xf32>
    %326 = arith.select %325, %323, %319 : vector<8x128xi1>, vector<8x128xf32>
    %cst_144 = arith.constant -1.000000e-01 : f32
    %327 = vector.broadcast %cst_144 : f32 to vector<8x128xf32>
    %328 = arith.mulf %290, %327 : vector<8x128xf32>
    %cst_145 = arith.constant 2.700000e+01 : f32
    %329 = vector.broadcast %cst_145 : f32 to vector<8x128xf32>
    %330 = arith.addf %328, %329 : vector<8x128xf32>
    %cst_146 = arith.constant 1.000000e+01 : f32
    %331 = vector.broadcast %cst_146 : f32 to vector<8x128xf32>
    %332 = arith.cmpf oge, %290, %331 : vector<8x128xf32>
    %333 = arith.select %332, %330, %326 : vector<8x128xi1>, vector<8x128xf32>
    %cst_147 = arith.constant -1.000000e-01 : f32
    %334 = vector.broadcast %cst_147 : f32 to vector<8x128xf32>
    %335 = arith.mulf %290, %334 : vector<8x128xf32>
    %cst_148 = arith.constant 2.700000e+01 : f32
    %336 = vector.broadcast %cst_148 : f32 to vector<8x128xf32>
    %337 = arith.addf %335, %336 : vector<8x128xf32>
    %cst_149 = arith.constant 1.500000e+01 : f32
    %338 = vector.broadcast %cst_149 : f32 to vector<8x128xf32>
    %339 = arith.cmpf oge, %290, %338 : vector<8x128xf32>
    %340 = arith.select %339, %337, %333 : vector<8x128xi1>, vector<8x128xf32>
    %cst_150 = arith.constant -1.000000e-01 : f32
    %341 = vector.broadcast %cst_150 : f32 to vector<8x128xf32>
    %342 = arith.mulf %290, %341 : vector<8x128xf32>
    %cst_151 = arith.constant 2.700000e+01 : f32
    %343 = vector.broadcast %cst_151 : f32 to vector<8x128xf32>
    %344 = arith.addf %342, %343 : vector<8x128xf32>
    %cst_152 = arith.constant 2.000000e+01 : f32
    %345 = vector.broadcast %cst_152 : f32 to vector<8x128xf32>
    %346 = arith.cmpf oge, %290, %345 : vector<8x128xf32>
    %347 = arith.select %346, %344, %340 : vector<8x128xi1>, vector<8x128xf32>
    %cst_153 = arith.constant -1.000000e-01 : f32
    %348 = vector.broadcast %cst_153 : f32 to vector<8x128xf32>
    %349 = arith.mulf %290, %348 : vector<8x128xf32>
    %cst_154 = arith.constant 2.700000e+01 : f32
    %350 = vector.broadcast %cst_154 : f32 to vector<8x128xf32>
    %351 = arith.addf %349, %350 : vector<8x128xf32>
    %cst_155 = arith.constant 2.500000e+01 : f32
    %352 = vector.broadcast %cst_155 : f32 to vector<8x128xf32>
    %353 = arith.cmpf oge, %290, %352 : vector<8x128xf32>
    %354 = arith.select %353, %351, %347 : vector<8x128xi1>, vector<8x128xf32>
    %cst_156 = arith.constant -1.000000e-01 : f32
    %355 = vector.broadcast %cst_156 : f32 to vector<8x128xf32>
    %356 = arith.mulf %290, %355 : vector<8x128xf32>
    %cst_157 = arith.constant 2.700000e+01 : f32
    %357 = vector.broadcast %cst_157 : f32 to vector<8x128xf32>
    %358 = arith.addf %356, %357 : vector<8x128xf32>
    %cst_158 = arith.constant 3.000000e+01 : f32
    %359 = vector.broadcast %cst_158 : f32 to vector<8x128xf32>
    %360 = arith.cmpf oge, %290, %359 : vector<8x128xf32>
    %361 = arith.select %360, %358, %354 : vector<8x128xi1>, vector<8x128xf32>
    %cst_159 = arith.constant -1.000000e-01 : f32
    %362 = vector.broadcast %cst_159 : f32 to vector<8x128xf32>
    %363 = arith.mulf %290, %362 : vector<8x128xf32>
    %cst_160 = arith.constant 2.700000e+01 : f32
    %364 = vector.broadcast %cst_160 : f32 to vector<8x128xf32>
    %365 = arith.addf %363, %364 : vector<8x128xf32>
    %cst_161 = arith.constant 3.500000e+01 : f32
    %366 = vector.broadcast %cst_161 : f32 to vector<8x128xf32>
    %367 = arith.cmpf oge, %290, %366 : vector<8x128xf32>
    %368 = arith.select %367, %365, %361 : vector<8x128xi1>, vector<8x128xf32>
    %cst_162 = arith.constant 0.000000e+00 : f32
    %369 = vector.broadcast %cst_162 : f32 to vector<8x128xf32>
    %370 = arith.mulf %290, %369 : vector<8x128xf32>
    %cst_163 = arith.constant 2.300000e+01 : f32
    %371 = vector.broadcast %cst_163 : f32 to vector<8x128xf32>
    %372 = arith.addf %370, %371 : vector<8x128xf32>
    %cst_164 = arith.constant 4.000000e+01 : f32
    %373 = vector.broadcast %cst_164 : f32 to vector<8x128xf32>
    %374 = arith.cmpf oge, %290, %373 : vector<8x128xf32>
    %375 = arith.select %374, %372, %368 : vector<8x128xi1>, vector<8x128xf32>
    %cst_165 = arith.constant 0.000000e+00 : f32
    %376 = vector.broadcast %cst_165 : f32 to vector<8x128xf32>
    %377 = arith.mulf %290, %376 : vector<8x128xf32>
    %cst_166 = arith.constant 2.300000e+01 : f32
    %378 = vector.broadcast %cst_166 : f32 to vector<8x128xf32>
    %379 = arith.addf %377, %378 : vector<8x128xf32>
    %cst_167 = arith.constant 4.500000e+01 : f32
    %380 = vector.broadcast %cst_167 : f32 to vector<8x128xf32>
    %381 = arith.cmpf oge, %290, %380 : vector<8x128xf32>
    %382 = arith.select %381, %379, %375 : vector<8x128xi1>, vector<8x128xf32>
    %cst_168 = arith.constant 5.000000e-01 : f32
    %383 = vector.broadcast %cst_168 : f32 to vector<8x128xf32>
    %384 = arith.mulf %71, %383 : vector<8x128xf32>
    %cst_169 = arith.constant -1.100000e+01 : f32
    %385 = vector.broadcast %cst_169 : f32 to vector<8x128xf32>
    %386 = arith.addf %384, %385 : vector<8x128xf32>
    %387 = arith.subf %382, %276 : vector<8x128xf32>
    %388 = arith.mulf %386, %387 : vector<8x128xf32>
    %389 = arith.addf %276, %388 : vector<8x128xf32>
    %cst_170 = arith.constant 2.200000e+01 : f32
    %390 = vector.broadcast %cst_170 : f32 to vector<8x128xf32>
    %391 = arith.cmpf oge, %71, %390 : vector<8x128xf32>
    %392 = arith.select %391, %389, %286 : vector<8x128xi1>, vector<8x128xf32>
    %cst_171 = arith.constant -3.000000e+01 : f32
    %cst_172 = arith.constant 5.000000e+01 : f32
    %393 = vector.broadcast %cst_171 : f32 to vector<8x128xf32>
    %394 = arith.maximumf %393, %1 : vector<8x128xf32>
    %395 = vector.broadcast %cst_172 : f32 to vector<8x128xf32>
    %396 = arith.minimumf %395, %394 : vector<8x128xf32>
    %cst_173 = arith.constant -5.000000e-02 : f32
    %397 = vector.broadcast %cst_173 : f32 to vector<8x128xf32>
    %398 = arith.mulf %396, %397 : vector<8x128xf32>
    %cst_174 = arith.constant 2.550000e+01 : f32
    %399 = vector.broadcast %cst_174 : f32 to vector<8x128xf32>
    %400 = arith.addf %398, %399 : vector<8x128xf32>
    %cst_175 = arith.constant -3.000000e+01 : f32
    %401 = vector.broadcast %cst_175 : f32 to vector<8x128xf32>
    %402 = arith.cmpf oge, %396, %401 : vector<8x128xf32>
    %cst_176 = arith.constant 2.700000e+01 : f32
    %403 = vector.broadcast %cst_176 : f32 to vector<8x128xf32>
    %404 = arith.select %402, %400, %403 : vector<8x128xi1>, vector<8x128xf32>
    %cst_177 = arith.constant 5.000000e-02 : f32
    %405 = vector.broadcast %cst_177 : f32 to vector<8x128xf32>
    %406 = arith.mulf %396, %405 : vector<8x128xf32>
    %cst_178 = arith.constant 2.750000e+01 : f32
    %407 = vector.broadcast %cst_178 : f32 to vector<8x128xf32>
    %408 = arith.addf %406, %407 : vector<8x128xf32>
    %cst_179 = arith.constant -2.000000e+01 : f32
    %409 = vector.broadcast %cst_179 : f32 to vector<8x128xf32>
    %410 = arith.cmpf oge, %396, %409 : vector<8x128xf32>
    %411 = arith.select %410, %408, %404 : vector<8x128xi1>, vector<8x128xf32>
    %cst_180 = arith.constant 5.000000e-02 : f32
    %412 = vector.broadcast %cst_180 : f32 to vector<8x128xf32>
    %413 = arith.mulf %396, %412 : vector<8x128xf32>
    %cst_181 = arith.constant 2.750000e+01 : f32
    %414 = vector.broadcast %cst_181 : f32 to vector<8x128xf32>
    %415 = arith.addf %413, %414 : vector<8x128xf32>
    %cst_182 = arith.constant -1.000000e+01 : f32
    %416 = vector.broadcast %cst_182 : f32 to vector<8x128xf32>
    %417 = arith.cmpf oge, %396, %416 : vector<8x128xf32>
    %418 = arith.select %417, %415, %411 : vector<8x128xi1>, vector<8x128xf32>
    %cst_183 = arith.constant 1.000000e-01 : f32
    %419 = vector.broadcast %cst_183 : f32 to vector<8x128xf32>
    %420 = arith.mulf %396, %419 : vector<8x128xf32>
    %cst_184 = arith.constant 2.750000e+01 : f32
    %421 = vector.broadcast %cst_184 : f32 to vector<8x128xf32>
    %422 = arith.addf %420, %421 : vector<8x128xf32>
    %cst_185 = arith.constant 0.000000e+00 : f32
    %423 = vector.broadcast %cst_185 : f32 to vector<8x128xf32>
    %424 = arith.cmpf oge, %396, %423 : vector<8x128xf32>
    %425 = arith.select %424, %422, %418 : vector<8x128xi1>, vector<8x128xf32>
    %cst_186 = arith.constant 0.000000e+00 : f32
    %426 = vector.broadcast %cst_186 : f32 to vector<8x128xf32>
    %427 = arith.mulf %396, %426 : vector<8x128xf32>
    %cst_187 = arith.constant 2.800000e+01 : f32
    %428 = vector.broadcast %cst_187 : f32 to vector<8x128xf32>
    %429 = arith.addf %427, %428 : vector<8x128xf32>
    %cst_188 = arith.constant 5.000000e+00 : f32
    %430 = vector.broadcast %cst_188 : f32 to vector<8x128xf32>
    %431 = arith.cmpf oge, %396, %430 : vector<8x128xf32>
    %432 = arith.select %431, %429, %425 : vector<8x128xi1>, vector<8x128xf32>
    %cst_189 = arith.constant -1.000000e-01 : f32
    %433 = vector.broadcast %cst_189 : f32 to vector<8x128xf32>
    %434 = arith.mulf %396, %433 : vector<8x128xf32>
    %cst_190 = arith.constant 2.900000e+01 : f32
    %435 = vector.broadcast %cst_190 : f32 to vector<8x128xf32>
    %436 = arith.addf %434, %435 : vector<8x128xf32>
    %cst_191 = arith.constant 1.000000e+01 : f32
    %437 = vector.broadcast %cst_191 : f32 to vector<8x128xf32>
    %438 = arith.cmpf oge, %396, %437 : vector<8x128xf32>
    %439 = arith.select %438, %436, %432 : vector<8x128xi1>, vector<8x128xf32>
    %cst_192 = arith.constant -1.000000e-01 : f32
    %440 = vector.broadcast %cst_192 : f32 to vector<8x128xf32>
    %441 = arith.mulf %396, %440 : vector<8x128xf32>
    %cst_193 = arith.constant 2.900000e+01 : f32
    %442 = vector.broadcast %cst_193 : f32 to vector<8x128xf32>
    %443 = arith.addf %441, %442 : vector<8x128xf32>
    %cst_194 = arith.constant 1.500000e+01 : f32
    %444 = vector.broadcast %cst_194 : f32 to vector<8x128xf32>
    %445 = arith.cmpf oge, %396, %444 : vector<8x128xf32>
    %446 = arith.select %445, %443, %439 : vector<8x128xi1>, vector<8x128xf32>
    %cst_195 = arith.constant -1.000000e-01 : f32
    %447 = vector.broadcast %cst_195 : f32 to vector<8x128xf32>
    %448 = arith.mulf %396, %447 : vector<8x128xf32>
    %cst_196 = arith.constant 2.900000e+01 : f32
    %449 = vector.broadcast %cst_196 : f32 to vector<8x128xf32>
    %450 = arith.addf %448, %449 : vector<8x128xf32>
    %cst_197 = arith.constant 2.000000e+01 : f32
    %451 = vector.broadcast %cst_197 : f32 to vector<8x128xf32>
    %452 = arith.cmpf oge, %396, %451 : vector<8x128xf32>
    %453 = arith.select %452, %450, %446 : vector<8x128xi1>, vector<8x128xf32>
    %cst_198 = arith.constant -1.000000e-01 : f32
    %454 = vector.broadcast %cst_198 : f32 to vector<8x128xf32>
    %455 = arith.mulf %396, %454 : vector<8x128xf32>
    %cst_199 = arith.constant 2.900000e+01 : f32
    %456 = vector.broadcast %cst_199 : f32 to vector<8x128xf32>
    %457 = arith.addf %455, %456 : vector<8x128xf32>
    %cst_200 = arith.constant 2.500000e+01 : f32
    %458 = vector.broadcast %cst_200 : f32 to vector<8x128xf32>
    %459 = arith.cmpf oge, %396, %458 : vector<8x128xf32>
    %460 = arith.select %459, %457, %453 : vector<8x128xi1>, vector<8x128xf32>
    %cst_201 = arith.constant -1.000000e-01 : f32
    %461 = vector.broadcast %cst_201 : f32 to vector<8x128xf32>
    %462 = arith.mulf %396, %461 : vector<8x128xf32>
    %cst_202 = arith.constant 2.900000e+01 : f32
    %463 = vector.broadcast %cst_202 : f32 to vector<8x128xf32>
    %464 = arith.addf %462, %463 : vector<8x128xf32>
    %cst_203 = arith.constant 3.000000e+01 : f32
    %465 = vector.broadcast %cst_203 : f32 to vector<8x128xf32>
    %466 = arith.cmpf oge, %396, %465 : vector<8x128xf32>
    %467 = arith.select %466, %464, %460 : vector<8x128xi1>, vector<8x128xf32>
    %cst_204 = arith.constant 1.000000e-01 : f32
    %468 = vector.broadcast %cst_204 : f32 to vector<8x128xf32>
    %469 = arith.mulf %396, %468 : vector<8x128xf32>
    %cst_205 = arith.constant 2.200000e+01 : f32
    %470 = vector.broadcast %cst_205 : f32 to vector<8x128xf32>
    %471 = arith.addf %469, %470 : vector<8x128xf32>
    %cst_206 = arith.constant 3.500000e+01 : f32
    %472 = vector.broadcast %cst_206 : f32 to vector<8x128xf32>
    %473 = arith.cmpf oge, %396, %472 : vector<8x128xf32>
    %474 = arith.select %473, %471, %467 : vector<8x128xi1>, vector<8x128xf32>
    %cst_207 = arith.constant 0.000000e+00 : f32
    %475 = vector.broadcast %cst_207 : f32 to vector<8x128xf32>
    %476 = arith.mulf %396, %475 : vector<8x128xf32>
    %cst_208 = arith.constant 2.600000e+01 : f32
    %477 = vector.broadcast %cst_208 : f32 to vector<8x128xf32>
    %478 = arith.addf %476, %477 : vector<8x128xf32>
    %cst_209 = arith.constant 4.000000e+01 : f32
    %479 = vector.broadcast %cst_209 : f32 to vector<8x128xf32>
    %480 = arith.cmpf oge, %396, %479 : vector<8x128xf32>
    %481 = arith.select %480, %478, %474 : vector<8x128xi1>, vector<8x128xf32>
    %cst_210 = arith.constant 0.000000e+00 : f32
    %482 = vector.broadcast %cst_210 : f32 to vector<8x128xf32>
    %483 = arith.mulf %396, %482 : vector<8x128xf32>
    %cst_211 = arith.constant 2.600000e+01 : f32
    %484 = vector.broadcast %cst_211 : f32 to vector<8x128xf32>
    %485 = arith.addf %483, %484 : vector<8x128xf32>
    %cst_212 = arith.constant 4.500000e+01 : f32
    %486 = vector.broadcast %cst_212 : f32 to vector<8x128xf32>
    %487 = arith.cmpf oge, %396, %486 : vector<8x128xf32>
    %488 = arith.select %487, %485, %481 : vector<8x128xi1>, vector<8x128xf32>
    %cst_213 = arith.constant 5.000000e-01 : f32
    %489 = vector.broadcast %cst_213 : f32 to vector<8x128xf32>
    %490 = arith.mulf %71, %489 : vector<8x128xf32>
    %cst_214 = arith.constant -1.200000e+01 : f32
    %491 = vector.broadcast %cst_214 : f32 to vector<8x128xf32>
    %492 = arith.addf %490, %491 : vector<8x128xf32>
    %493 = arith.subf %488, %382 : vector<8x128xf32>
    %494 = arith.mulf %492, %493 : vector<8x128xf32>
    %495 = arith.addf %382, %494 : vector<8x128xf32>
    %cst_215 = arith.constant 2.400000e+01 : f32
    %496 = vector.broadcast %cst_215 : f32 to vector<8x128xf32>
    %497 = arith.cmpf oge, %71, %496 : vector<8x128xf32>
    %498 = arith.select %497, %495, %392 : vector<8x128xi1>, vector<8x128xf32>
    %cst_216 = arith.constant -3.000000e+01 : f32
    %cst_217 = arith.constant 5.000000e+01 : f32
    %499 = vector.broadcast %cst_216 : f32 to vector<8x128xf32>
    %500 = arith.maximumf %499, %1 : vector<8x128xf32>
    %501 = vector.broadcast %cst_217 : f32 to vector<8x128xf32>
    %502 = arith.minimumf %501, %500 : vector<8x128xf32>
    %cst_218 = arith.constant -5.000000e-02 : f32
    %503 = vector.broadcast %cst_218 : f32 to vector<8x128xf32>
    %504 = arith.mulf %502, %503 : vector<8x128xf32>
    %cst_219 = arith.constant 2.750000e+01 : f32
    %505 = vector.broadcast %cst_219 : f32 to vector<8x128xf32>
    %506 = arith.addf %504, %505 : vector<8x128xf32>
    %cst_220 = arith.constant -3.000000e+01 : f32
    %507 = vector.broadcast %cst_220 : f32 to vector<8x128xf32>
    %508 = arith.cmpf oge, %502, %507 : vector<8x128xf32>
    %cst_221 = arith.constant 2.900000e+01 : f32
    %509 = vector.broadcast %cst_221 : f32 to vector<8x128xf32>
    %510 = arith.select %508, %506, %509 : vector<8x128xi1>, vector<8x128xf32>
    %cst_222 = arith.constant 0.000000e+00 : f32
    %511 = vector.broadcast %cst_222 : f32 to vector<8x128xf32>
    %512 = arith.mulf %502, %511 : vector<8x128xf32>
    %cst_223 = arith.constant 2.850000e+01 : f32
    %513 = vector.broadcast %cst_223 : f32 to vector<8x128xf32>
    %514 = arith.addf %512, %513 : vector<8x128xf32>
    %cst_224 = arith.constant -2.000000e+01 : f32
    %515 = vector.broadcast %cst_224 : f32 to vector<8x128xf32>
    %516 = arith.cmpf oge, %502, %515 : vector<8x128xf32>
    %517 = arith.select %516, %514, %510 : vector<8x128xi1>, vector<8x128xf32>
    %cst_225 = arith.constant 1.000000e-01 : f32
    %518 = vector.broadcast %cst_225 : f32 to vector<8x128xf32>
    %519 = arith.mulf %502, %518 : vector<8x128xf32>
    %cst_226 = arith.constant 2.950000e+01 : f32
    %520 = vector.broadcast %cst_226 : f32 to vector<8x128xf32>
    %521 = arith.addf %519, %520 : vector<8x128xf32>
    %cst_227 = arith.constant -1.000000e+01 : f32
    %522 = vector.broadcast %cst_227 : f32 to vector<8x128xf32>
    %523 = arith.cmpf oge, %502, %522 : vector<8x128xf32>
    %524 = arith.select %523, %521, %517 : vector<8x128xi1>, vector<8x128xf32>
    %cst_228 = arith.constant 1.000000e-01 : f32
    %525 = vector.broadcast %cst_228 : f32 to vector<8x128xf32>
    %526 = arith.mulf %502, %525 : vector<8x128xf32>
    %cst_229 = arith.constant 2.950000e+01 : f32
    %527 = vector.broadcast %cst_229 : f32 to vector<8x128xf32>
    %528 = arith.addf %526, %527 : vector<8x128xf32>
    %cst_230 = arith.constant 0.000000e+00 : f32
    %529 = vector.broadcast %cst_230 : f32 to vector<8x128xf32>
    %530 = arith.cmpf oge, %502, %529 : vector<8x128xf32>
    %531 = arith.select %530, %528, %524 : vector<8x128xi1>, vector<8x128xf32>
    %cst_231 = arith.constant 0.000000e+00 : f32
    %532 = vector.broadcast %cst_231 : f32 to vector<8x128xf32>
    %533 = arith.mulf %502, %532 : vector<8x128xf32>
    %cst_232 = arith.constant 3.000000e+01 : f32
    %534 = vector.broadcast %cst_232 : f32 to vector<8x128xf32>
    %535 = arith.addf %533, %534 : vector<8x128xf32>
    %cst_233 = arith.constant 5.000000e+00 : f32
    %536 = vector.broadcast %cst_233 : f32 to vector<8x128xf32>
    %537 = arith.cmpf oge, %502, %536 : vector<8x128xf32>
    %538 = arith.select %537, %535, %531 : vector<8x128xi1>, vector<8x128xf32>
    %cst_234 = arith.constant -1.000000e-01 : f32
    %539 = vector.broadcast %cst_234 : f32 to vector<8x128xf32>
    %540 = arith.mulf %502, %539 : vector<8x128xf32>
    %cst_235 = arith.constant 3.100000e+01 : f32
    %541 = vector.broadcast %cst_235 : f32 to vector<8x128xf32>
    %542 = arith.addf %540, %541 : vector<8x128xf32>
    %cst_236 = arith.constant 1.000000e+01 : f32
    %543 = vector.broadcast %cst_236 : f32 to vector<8x128xf32>
    %544 = arith.cmpf oge, %502, %543 : vector<8x128xf32>
    %545 = arith.select %544, %542, %538 : vector<8x128xi1>, vector<8x128xf32>
    %cst_237 = arith.constant -1.000000e-01 : f32
    %546 = vector.broadcast %cst_237 : f32 to vector<8x128xf32>
    %547 = arith.mulf %502, %546 : vector<8x128xf32>
    %cst_238 = arith.constant 3.100000e+01 : f32
    %548 = vector.broadcast %cst_238 : f32 to vector<8x128xf32>
    %549 = arith.addf %547, %548 : vector<8x128xf32>
    %cst_239 = arith.constant 1.500000e+01 : f32
    %550 = vector.broadcast %cst_239 : f32 to vector<8x128xf32>
    %551 = arith.cmpf oge, %502, %550 : vector<8x128xf32>
    %552 = arith.select %551, %549, %545 : vector<8x128xi1>, vector<8x128xf32>
    %cst_240 = arith.constant 0.000000e+00 : f32
    %553 = vector.broadcast %cst_240 : f32 to vector<8x128xf32>
    %554 = arith.mulf %502, %553 : vector<8x128xf32>
    %cst_241 = arith.constant 2.900000e+01 : f32
    %555 = vector.broadcast %cst_241 : f32 to vector<8x128xf32>
    %556 = arith.addf %554, %555 : vector<8x128xf32>
    %cst_242 = arith.constant 2.000000e+01 : f32
    %557 = vector.broadcast %cst_242 : f32 to vector<8x128xf32>
    %558 = arith.cmpf oge, %502, %557 : vector<8x128xf32>
    %559 = arith.select %558, %556, %552 : vector<8x128xi1>, vector<8x128xf32>
    %cst_243 = arith.constant 0.000000e+00 : f32
    %560 = vector.broadcast %cst_243 : f32 to vector<8x128xf32>
    %561 = arith.mulf %502, %560 : vector<8x128xf32>
    %cst_244 = arith.constant 2.900000e+01 : f32
    %562 = vector.broadcast %cst_244 : f32 to vector<8x128xf32>
    %563 = arith.addf %561, %562 : vector<8x128xf32>
    %cst_245 = arith.constant 2.500000e+01 : f32
    %564 = vector.broadcast %cst_245 : f32 to vector<8x128xf32>
    %565 = arith.cmpf oge, %502, %564 : vector<8x128xf32>
    %566 = arith.select %565, %563, %559 : vector<8x128xi1>, vector<8x128xf32>
    %cst_246 = arith.constant -2.000000e-01 : f32
    %567 = vector.broadcast %cst_246 : f32 to vector<8x128xf32>
    %568 = arith.mulf %502, %567 : vector<8x128xf32>
    %cst_247 = arith.constant 3.500000e+01 : f32
    %569 = vector.broadcast %cst_247 : f32 to vector<8x128xf32>
    %570 = arith.addf %568, %569 : vector<8x128xf32>
    %cst_248 = arith.constant 3.000000e+01 : f32
    %571 = vector.broadcast %cst_248 : f32 to vector<8x128xf32>
    %572 = arith.cmpf oge, %502, %571 : vector<8x128xf32>
    %573 = arith.select %572, %570, %566 : vector<8x128xi1>, vector<8x128xf32>
    %cst_249 = arith.constant 0.000000e+00 : f32
    %574 = vector.broadcast %cst_249 : f32 to vector<8x128xf32>
    %575 = arith.mulf %502, %574 : vector<8x128xf32>
    %cst_250 = arith.constant 2.800000e+01 : f32
    %576 = vector.broadcast %cst_250 : f32 to vector<8x128xf32>
    %577 = arith.addf %575, %576 : vector<8x128xf32>
    %cst_251 = arith.constant 3.500000e+01 : f32
    %578 = vector.broadcast %cst_251 : f32 to vector<8x128xf32>
    %579 = arith.cmpf oge, %502, %578 : vector<8x128xf32>
    %580 = arith.select %579, %577, %573 : vector<8x128xi1>, vector<8x128xf32>
    %cst_252 = arith.constant 2.000000e-01 : f32
    %581 = vector.broadcast %cst_252 : f32 to vector<8x128xf32>
    %582 = arith.mulf %502, %581 : vector<8x128xf32>
    %cst_253 = arith.constant 2.000000e+01 : f32
    %583 = vector.broadcast %cst_253 : f32 to vector<8x128xf32>
    %584 = arith.addf %582, %583 : vector<8x128xf32>
    %cst_254 = arith.constant 4.000000e+01 : f32
    %585 = vector.broadcast %cst_254 : f32 to vector<8x128xf32>
    %586 = arith.cmpf oge, %502, %585 : vector<8x128xf32>
    %587 = arith.select %586, %584, %580 : vector<8x128xi1>, vector<8x128xf32>
    %cst_255 = arith.constant 0.000000e+00 : f32
    %588 = vector.broadcast %cst_255 : f32 to vector<8x128xf32>
    %589 = arith.mulf %502, %588 : vector<8x128xf32>
    %cst_256 = arith.constant 2.900000e+01 : f32
    %590 = vector.broadcast %cst_256 : f32 to vector<8x128xf32>
    %591 = arith.addf %589, %590 : vector<8x128xf32>
    %cst_257 = arith.constant 4.500000e+01 : f32
    %592 = vector.broadcast %cst_257 : f32 to vector<8x128xf32>
    %593 = arith.cmpf oge, %502, %592 : vector<8x128xf32>
    %594 = arith.select %593, %591, %587 : vector<8x128xi1>, vector<8x128xf32>
    %cst_258 = arith.constant 5.000000e-01 : f32
    %595 = vector.broadcast %cst_258 : f32 to vector<8x128xf32>
    %596 = arith.mulf %71, %595 : vector<8x128xf32>
    %cst_259 = arith.constant -1.300000e+01 : f32
    %597 = vector.broadcast %cst_259 : f32 to vector<8x128xf32>
    %598 = arith.addf %596, %597 : vector<8x128xf32>
    %599 = arith.subf %594, %488 : vector<8x128xf32>
    %600 = arith.mulf %598, %599 : vector<8x128xf32>
    %601 = arith.addf %488, %600 : vector<8x128xf32>
    %cst_260 = arith.constant 2.600000e+01 : f32
    %602 = vector.broadcast %cst_260 : f32 to vector<8x128xf32>
    %603 = arith.cmpf oge, %71, %602 : vector<8x128xf32>
    %604 = arith.select %603, %601, %498 : vector<8x128xi1>, vector<8x128xf32>
    %cst_261 = arith.constant -3.000000e+01 : f32
    %cst_262 = arith.constant 5.000000e+01 : f32
    %605 = vector.broadcast %cst_261 : f32 to vector<8x128xf32>
    %606 = arith.maximumf %605, %1 : vector<8x128xf32>
    %607 = vector.broadcast %cst_262 : f32 to vector<8x128xf32>
    %608 = arith.minimumf %607, %606 : vector<8x128xf32>
    %cst_263 = arith.constant -5.000000e-02 : f32
    %609 = vector.broadcast %cst_263 : f32 to vector<8x128xf32>
    %610 = arith.mulf %608, %609 : vector<8x128xf32>
    %cst_264 = arith.constant 2.950000e+01 : f32
    %611 = vector.broadcast %cst_264 : f32 to vector<8x128xf32>
    %612 = arith.addf %610, %611 : vector<8x128xf32>
    %cst_265 = arith.constant -3.000000e+01 : f32
    %613 = vector.broadcast %cst_265 : f32 to vector<8x128xf32>
    %614 = arith.cmpf oge, %608, %613 : vector<8x128xf32>
    %cst_266 = arith.constant 3.100000e+01 : f32
    %615 = vector.broadcast %cst_266 : f32 to vector<8x128xf32>
    %616 = arith.select %614, %612, %615 : vector<8x128xi1>, vector<8x128xf32>
    %cst_267 = arith.constant 0.000000e+00 : f32
    %617 = vector.broadcast %cst_267 : f32 to vector<8x128xf32>
    %618 = arith.mulf %608, %617 : vector<8x128xf32>
    %cst_268 = arith.constant 3.050000e+01 : f32
    %619 = vector.broadcast %cst_268 : f32 to vector<8x128xf32>
    %620 = arith.addf %618, %619 : vector<8x128xf32>
    %cst_269 = arith.constant -2.000000e+01 : f32
    %621 = vector.broadcast %cst_269 : f32 to vector<8x128xf32>
    %622 = arith.cmpf oge, %608, %621 : vector<8x128xf32>
    %623 = arith.select %622, %620, %616 : vector<8x128xi1>, vector<8x128xf32>
    %cst_270 = arith.constant 1.000000e-01 : f32
    %624 = vector.broadcast %cst_270 : f32 to vector<8x128xf32>
    %625 = arith.mulf %608, %624 : vector<8x128xf32>
    %cst_271 = arith.constant 3.150000e+01 : f32
    %626 = vector.broadcast %cst_271 : f32 to vector<8x128xf32>
    %627 = arith.addf %625, %626 : vector<8x128xf32>
    %cst_272 = arith.constant -1.000000e+01 : f32
    %628 = vector.broadcast %cst_272 : f32 to vector<8x128xf32>
    %629 = arith.cmpf oge, %608, %628 : vector<8x128xf32>
    %630 = arith.select %629, %627, %623 : vector<8x128xi1>, vector<8x128xf32>
    %cst_273 = arith.constant 1.000000e-01 : f32
    %631 = vector.broadcast %cst_273 : f32 to vector<8x128xf32>
    %632 = arith.mulf %608, %631 : vector<8x128xf32>
    %cst_274 = arith.constant 3.150000e+01 : f32
    %633 = vector.broadcast %cst_274 : f32 to vector<8x128xf32>
    %634 = arith.addf %632, %633 : vector<8x128xf32>
    %cst_275 = arith.constant 0.000000e+00 : f32
    %635 = vector.broadcast %cst_275 : f32 to vector<8x128xf32>
    %636 = arith.cmpf oge, %608, %635 : vector<8x128xf32>
    %637 = arith.select %636, %634, %630 : vector<8x128xi1>, vector<8x128xf32>
    %cst_276 = arith.constant 0.000000e+00 : f32
    %638 = vector.broadcast %cst_276 : f32 to vector<8x128xf32>
    %639 = arith.mulf %608, %638 : vector<8x128xf32>
    %cst_277 = arith.constant 3.200000e+01 : f32
    %640 = vector.broadcast %cst_277 : f32 to vector<8x128xf32>
    %641 = arith.addf %639, %640 : vector<8x128xf32>
    %cst_278 = arith.constant 5.000000e+00 : f32
    %642 = vector.broadcast %cst_278 : f32 to vector<8x128xf32>
    %643 = arith.cmpf oge, %608, %642 : vector<8x128xf32>
    %644 = arith.select %643, %641, %637 : vector<8x128xi1>, vector<8x128xf32>
    %cst_279 = arith.constant 0.000000e+00 : f32
    %645 = vector.broadcast %cst_279 : f32 to vector<8x128xf32>
    %646 = arith.mulf %608, %645 : vector<8x128xf32>
    %cst_280 = arith.constant 3.200000e+01 : f32
    %647 = vector.broadcast %cst_280 : f32 to vector<8x128xf32>
    %648 = arith.addf %646, %647 : vector<8x128xf32>
    %cst_281 = arith.constant 1.000000e+01 : f32
    %649 = vector.broadcast %cst_281 : f32 to vector<8x128xf32>
    %650 = arith.cmpf oge, %608, %649 : vector<8x128xf32>
    %651 = arith.select %650, %648, %644 : vector<8x128xi1>, vector<8x128xf32>
    %cst_282 = arith.constant -2.000000e-01 : f32
    %652 = vector.broadcast %cst_282 : f32 to vector<8x128xf32>
    %653 = arith.mulf %608, %652 : vector<8x128xf32>
    %cst_283 = arith.constant 3.500000e+01 : f32
    %654 = vector.broadcast %cst_283 : f32 to vector<8x128xf32>
    %655 = arith.addf %653, %654 : vector<8x128xf32>
    %cst_284 = arith.constant 1.500000e+01 : f32
    %656 = vector.broadcast %cst_284 : f32 to vector<8x128xf32>
    %657 = arith.cmpf oge, %608, %656 : vector<8x128xf32>
    %658 = arith.select %657, %655, %651 : vector<8x128xi1>, vector<8x128xf32>
    %cst_285 = arith.constant 0.000000e+00 : f32
    %659 = vector.broadcast %cst_285 : f32 to vector<8x128xf32>
    %660 = arith.mulf %608, %659 : vector<8x128xf32>
    %cst_286 = arith.constant 3.100000e+01 : f32
    %661 = vector.broadcast %cst_286 : f32 to vector<8x128xf32>
    %662 = arith.addf %660, %661 : vector<8x128xf32>
    %cst_287 = arith.constant 2.000000e+01 : f32
    %663 = vector.broadcast %cst_287 : f32 to vector<8x128xf32>
    %664 = arith.cmpf oge, %608, %663 : vector<8x128xf32>
    %665 = arith.select %664, %662, %658 : vector<8x128xi1>, vector<8x128xf32>
    %cst_288 = arith.constant 0.000000e+00 : f32
    %666 = vector.broadcast %cst_288 : f32 to vector<8x128xf32>
    %667 = arith.mulf %608, %666 : vector<8x128xf32>
    %cst_289 = arith.constant 3.100000e+01 : f32
    %668 = vector.broadcast %cst_289 : f32 to vector<8x128xf32>
    %669 = arith.addf %667, %668 : vector<8x128xf32>
    %cst_290 = arith.constant 2.500000e+01 : f32
    %670 = vector.broadcast %cst_290 : f32 to vector<8x128xf32>
    %671 = arith.cmpf oge, %608, %670 : vector<8x128xf32>
    %672 = arith.select %671, %669, %665 : vector<8x128xi1>, vector<8x128xf32>
    %cst_291 = arith.constant 0.000000e+00 : f32
    %673 = vector.broadcast %cst_291 : f32 to vector<8x128xf32>
    %674 = arith.mulf %608, %673 : vector<8x128xf32>
    %cst_292 = arith.constant 3.100000e+01 : f32
    %675 = vector.broadcast %cst_292 : f32 to vector<8x128xf32>
    %676 = arith.addf %674, %675 : vector<8x128xf32>
    %cst_293 = arith.constant 3.000000e+01 : f32
    %677 = vector.broadcast %cst_293 : f32 to vector<8x128xf32>
    %678 = arith.cmpf oge, %608, %677 : vector<8x128xf32>
    %679 = arith.select %678, %676, %672 : vector<8x128xi1>, vector<8x128xf32>
    %cst_294 = arith.constant 0.000000e+00 : f32
    %680 = vector.broadcast %cst_294 : f32 to vector<8x128xf32>
    %681 = arith.mulf %608, %680 : vector<8x128xf32>
    %cst_295 = arith.constant 3.100000e+01 : f32
    %682 = vector.broadcast %cst_295 : f32 to vector<8x128xf32>
    %683 = arith.addf %681, %682 : vector<8x128xf32>
    %cst_296 = arith.constant 3.500000e+01 : f32
    %684 = vector.broadcast %cst_296 : f32 to vector<8x128xf32>
    %685 = arith.cmpf oge, %608, %684 : vector<8x128xf32>
    %686 = arith.select %685, %683, %679 : vector<8x128xi1>, vector<8x128xf32>
    %cst_297 = arith.constant 0.000000e+00 : f32
    %687 = vector.broadcast %cst_297 : f32 to vector<8x128xf32>
    %688 = arith.mulf %608, %687 : vector<8x128xf32>
    %cst_298 = arith.constant 3.100000e+01 : f32
    %689 = vector.broadcast %cst_298 : f32 to vector<8x128xf32>
    %690 = arith.addf %688, %689 : vector<8x128xf32>
    %cst_299 = arith.constant 4.000000e+01 : f32
    %691 = vector.broadcast %cst_299 : f32 to vector<8x128xf32>
    %692 = arith.cmpf oge, %608, %691 : vector<8x128xf32>
    %693 = arith.select %692, %690, %686 : vector<8x128xi1>, vector<8x128xf32>
    %cst_300 = arith.constant 0.000000e+00 : f32
    %694 = vector.broadcast %cst_300 : f32 to vector<8x128xf32>
    %695 = arith.mulf %608, %694 : vector<8x128xf32>
    %cst_301 = arith.constant 3.100000e+01 : f32
    %696 = vector.broadcast %cst_301 : f32 to vector<8x128xf32>
    %697 = arith.addf %695, %696 : vector<8x128xf32>
    %cst_302 = arith.constant 4.500000e+01 : f32
    %698 = vector.broadcast %cst_302 : f32 to vector<8x128xf32>
    %699 = arith.cmpf oge, %608, %698 : vector<8x128xf32>
    %700 = arith.select %699, %697, %693 : vector<8x128xi1>, vector<8x128xf32>
    %cst_303 = arith.constant 5.000000e-01 : f32
    %701 = vector.broadcast %cst_303 : f32 to vector<8x128xf32>
    %702 = arith.mulf %71, %701 : vector<8x128xf32>
    %cst_304 = arith.constant -1.400000e+01 : f32
    %703 = vector.broadcast %cst_304 : f32 to vector<8x128xf32>
    %704 = arith.addf %702, %703 : vector<8x128xf32>
    %705 = arith.subf %700, %594 : vector<8x128xf32>
    %706 = arith.mulf %704, %705 : vector<8x128xf32>
    %707 = arith.addf %594, %706 : vector<8x128xf32>
    %cst_305 = arith.constant 2.800000e+01 : f32
    %708 = vector.broadcast %cst_305 : f32 to vector<8x128xf32>
    %709 = arith.cmpf oge, %71, %708 : vector<8x128xf32>
    %710 = arith.select %709, %707, %604 : vector<8x128xi1>, vector<8x128xf32>
    %cst_306 = arith.constant -3.000000e+01 : f32
    %cst_307 = arith.constant 5.000000e+01 : f32
    %711 = vector.broadcast %cst_306 : f32 to vector<8x128xf32>
    %712 = arith.maximumf %711, %1 : vector<8x128xf32>
    %713 = vector.broadcast %cst_307 : f32 to vector<8x128xf32>
    %714 = arith.minimumf %713, %712 : vector<8x128xf32>
    %cst_308 = arith.constant 0.000000e+00 : f32
    %715 = vector.broadcast %cst_308 : f32 to vector<8x128xf32>
    %716 = arith.mulf %714, %715 : vector<8x128xf32>
    %cst_309 = arith.constant 3.200000e+01 : f32
    %717 = vector.broadcast %cst_309 : f32 to vector<8x128xf32>
    %718 = arith.addf %716, %717 : vector<8x128xf32>
    %cst_310 = arith.constant -3.000000e+01 : f32
    %719 = vector.broadcast %cst_310 : f32 to vector<8x128xf32>
    %720 = arith.cmpf oge, %714, %719 : vector<8x128xf32>
    %cst_311 = arith.constant 3.200000e+01 : f32
    %721 = vector.broadcast %cst_311 : f32 to vector<8x128xf32>
    %722 = arith.select %720, %718, %721 : vector<8x128xi1>, vector<8x128xf32>
    %cst_312 = arith.constant 0.000000e+00 : f32
    %723 = vector.broadcast %cst_312 : f32 to vector<8x128xf32>
    %724 = arith.mulf %714, %723 : vector<8x128xf32>
    %cst_313 = arith.constant 3.200000e+01 : f32
    %725 = vector.broadcast %cst_313 : f32 to vector<8x128xf32>
    %726 = arith.addf %724, %725 : vector<8x128xf32>
    %cst_314 = arith.constant -2.000000e+01 : f32
    %727 = vector.broadcast %cst_314 : f32 to vector<8x128xf32>
    %728 = arith.cmpf oge, %714, %727 : vector<8x128xf32>
    %729 = arith.select %728, %726, %722 : vector<8x128xi1>, vector<8x128xf32>
    %cst_315 = arith.constant 1.000000e-01 : f32
    %730 = vector.broadcast %cst_315 : f32 to vector<8x128xf32>
    %731 = arith.mulf %714, %730 : vector<8x128xf32>
    %cst_316 = arith.constant 3.300000e+01 : f32
    %732 = vector.broadcast %cst_316 : f32 to vector<8x128xf32>
    %733 = arith.addf %731, %732 : vector<8x128xf32>
    %cst_317 = arith.constant -1.000000e+01 : f32
    %734 = vector.broadcast %cst_317 : f32 to vector<8x128xf32>
    %735 = arith.cmpf oge, %714, %734 : vector<8x128xf32>
    %736 = arith.select %735, %733, %729 : vector<8x128xi1>, vector<8x128xf32>
    %cst_318 = arith.constant 0.000000e+00 : f32
    %737 = vector.broadcast %cst_318 : f32 to vector<8x128xf32>
    %738 = arith.mulf %714, %737 : vector<8x128xf32>
    %cst_319 = arith.constant 3.300000e+01 : f32
    %739 = vector.broadcast %cst_319 : f32 to vector<8x128xf32>
    %740 = arith.addf %738, %739 : vector<8x128xf32>
    %cst_320 = arith.constant 0.000000e+00 : f32
    %741 = vector.broadcast %cst_320 : f32 to vector<8x128xf32>
    %742 = arith.cmpf oge, %714, %741 : vector<8x128xf32>
    %743 = arith.select %742, %740, %736 : vector<8x128xi1>, vector<8x128xf32>
    %cst_321 = arith.constant 0.000000e+00 : f32
    %744 = vector.broadcast %cst_321 : f32 to vector<8x128xf32>
    %745 = arith.mulf %714, %744 : vector<8x128xf32>
    %cst_322 = arith.constant 3.300000e+01 : f32
    %746 = vector.broadcast %cst_322 : f32 to vector<8x128xf32>
    %747 = arith.addf %745, %746 : vector<8x128xf32>
    %cst_323 = arith.constant 5.000000e+00 : f32
    %748 = vector.broadcast %cst_323 : f32 to vector<8x128xf32>
    %749 = arith.cmpf oge, %714, %748 : vector<8x128xf32>
    %750 = arith.select %749, %747, %743 : vector<8x128xi1>, vector<8x128xf32>
    %cst_324 = arith.constant 0.000000e+00 : f32
    %751 = vector.broadcast %cst_324 : f32 to vector<8x128xf32>
    %752 = arith.mulf %714, %751 : vector<8x128xf32>
    %cst_325 = arith.constant 3.300000e+01 : f32
    %753 = vector.broadcast %cst_325 : f32 to vector<8x128xf32>
    %754 = arith.addf %752, %753 : vector<8x128xf32>
    %cst_326 = arith.constant 1.000000e+01 : f32
    %755 = vector.broadcast %cst_326 : f32 to vector<8x128xf32>
    %756 = arith.cmpf oge, %714, %755 : vector<8x128xf32>
    %757 = arith.select %756, %754, %750 : vector<8x128xi1>, vector<8x128xf32>
    %cst_327 = arith.constant 0.000000e+00 : f32
    %758 = vector.broadcast %cst_327 : f32 to vector<8x128xf32>
    %759 = arith.mulf %714, %758 : vector<8x128xf32>
    %cst_328 = arith.constant 3.300000e+01 : f32
    %760 = vector.broadcast %cst_328 : f32 to vector<8x128xf32>
    %761 = arith.addf %759, %760 : vector<8x128xf32>
    %cst_329 = arith.constant 1.500000e+01 : f32
    %762 = vector.broadcast %cst_329 : f32 to vector<8x128xf32>
    %763 = arith.cmpf oge, %714, %762 : vector<8x128xf32>
    %764 = arith.select %763, %761, %757 : vector<8x128xi1>, vector<8x128xf32>
    %cst_330 = arith.constant 0.000000e+00 : f32
    %765 = vector.broadcast %cst_330 : f32 to vector<8x128xf32>
    %766 = arith.mulf %714, %765 : vector<8x128xf32>
    %cst_331 = arith.constant 3.300000e+01 : f32
    %767 = vector.broadcast %cst_331 : f32 to vector<8x128xf32>
    %768 = arith.addf %766, %767 : vector<8x128xf32>
    %cst_332 = arith.constant 2.000000e+01 : f32
    %769 = vector.broadcast %cst_332 : f32 to vector<8x128xf32>
    %770 = arith.cmpf oge, %714, %769 : vector<8x128xf32>
    %771 = arith.select %770, %768, %764 : vector<8x128xi1>, vector<8x128xf32>
    %cst_333 = arith.constant 0.000000e+00 : f32
    %772 = vector.broadcast %cst_333 : f32 to vector<8x128xf32>
    %773 = arith.mulf %714, %772 : vector<8x128xf32>
    %cst_334 = arith.constant 3.300000e+01 : f32
    %774 = vector.broadcast %cst_334 : f32 to vector<8x128xf32>
    %775 = arith.addf %773, %774 : vector<8x128xf32>
    %cst_335 = arith.constant 2.500000e+01 : f32
    %776 = vector.broadcast %cst_335 : f32 to vector<8x128xf32>
    %777 = arith.cmpf oge, %714, %776 : vector<8x128xf32>
    %778 = arith.select %777, %775, %771 : vector<8x128xi1>, vector<8x128xf32>
    %cst_336 = arith.constant 0.000000e+00 : f32
    %779 = vector.broadcast %cst_336 : f32 to vector<8x128xf32>
    %780 = arith.mulf %714, %779 : vector<8x128xf32>
    %cst_337 = arith.constant 3.300000e+01 : f32
    %781 = vector.broadcast %cst_337 : f32 to vector<8x128xf32>
    %782 = arith.addf %780, %781 : vector<8x128xf32>
    %cst_338 = arith.constant 3.000000e+01 : f32
    %783 = vector.broadcast %cst_338 : f32 to vector<8x128xf32>
    %784 = arith.cmpf oge, %714, %783 : vector<8x128xf32>
    %785 = arith.select %784, %782, %778 : vector<8x128xi1>, vector<8x128xf32>
    %cst_339 = arith.constant 0.000000e+00 : f32
    %786 = vector.broadcast %cst_339 : f32 to vector<8x128xf32>
    %787 = arith.mulf %714, %786 : vector<8x128xf32>
    %cst_340 = arith.constant 3.300000e+01 : f32
    %788 = vector.broadcast %cst_340 : f32 to vector<8x128xf32>
    %789 = arith.addf %787, %788 : vector<8x128xf32>
    %cst_341 = arith.constant 3.500000e+01 : f32
    %790 = vector.broadcast %cst_341 : f32 to vector<8x128xf32>
    %791 = arith.cmpf oge, %714, %790 : vector<8x128xf32>
    %792 = arith.select %791, %789, %785 : vector<8x128xi1>, vector<8x128xf32>
    %cst_342 = arith.constant -2.000000e-01 : f32
    %793 = vector.broadcast %cst_342 : f32 to vector<8x128xf32>
    %794 = arith.mulf %714, %793 : vector<8x128xf32>
    %cst_343 = arith.constant 4.100000e+01 : f32
    %795 = vector.broadcast %cst_343 : f32 to vector<8x128xf32>
    %796 = arith.addf %794, %795 : vector<8x128xf32>
    %cst_344 = arith.constant 4.000000e+01 : f32
    %797 = vector.broadcast %cst_344 : f32 to vector<8x128xf32>
    %798 = arith.cmpf oge, %714, %797 : vector<8x128xf32>
    %799 = arith.select %798, %796, %792 : vector<8x128xi1>, vector<8x128xf32>
    %cst_345 = arith.constant 0.000000e+00 : f32
    %800 = vector.broadcast %cst_345 : f32 to vector<8x128xf32>
    %801 = arith.mulf %714, %800 : vector<8x128xf32>
    %cst_346 = arith.constant 3.200000e+01 : f32
    %802 = vector.broadcast %cst_346 : f32 to vector<8x128xf32>
    %803 = arith.addf %801, %802 : vector<8x128xf32>
    %cst_347 = arith.constant 4.500000e+01 : f32
    %804 = vector.broadcast %cst_347 : f32 to vector<8x128xf32>
    %805 = arith.cmpf oge, %714, %804 : vector<8x128xf32>
    %806 = arith.select %805, %803, %799 : vector<8x128xi1>, vector<8x128xf32>
    %cst_348 = arith.constant 0.666666686 : f32
    %807 = vector.broadcast %cst_348 : f32 to vector<8x128xf32>
    %808 = arith.mulf %71, %807 : vector<8x128xf32>
    %cst_349 = arith.constant -2.000000e+01 : f32
    %809 = vector.broadcast %cst_349 : f32 to vector<8x128xf32>
    %810 = arith.addf %808, %809 : vector<8x128xf32>
    %811 = arith.subf %806, %700 : vector<8x128xf32>
    %812 = arith.mulf %810, %811 : vector<8x128xf32>
    %813 = arith.addf %700, %812 : vector<8x128xf32>
    %cst_350 = arith.constant 3.000000e+01 : f32
    %814 = vector.broadcast %cst_350 : f32 to vector<8x128xf32>
    %815 = arith.cmpf oge, %71, %814 : vector<8x128xf32>
    %816 = arith.select %815, %813, %710 : vector<8x128xi1>, vector<8x128xf32>
    %cst_351 = arith.constant -3.000000e+01 : f32
    %cst_352 = arith.constant 5.000000e+01 : f32
    %817 = vector.broadcast %cst_351 : f32 to vector<8x128xf32>
    %818 = arith.maximumf %817, %1 : vector<8x128xf32>
    %819 = vector.broadcast %cst_352 : f32 to vector<8x128xf32>
    %820 = arith.minimumf %819, %818 : vector<8x128xf32>
    %cst_353 = arith.constant 0.000000e+00 : f32
    %821 = vector.broadcast %cst_353 : f32 to vector<8x128xf32>
    %822 = arith.mulf %820, %821 : vector<8x128xf32>
    %cst_354 = arith.constant 3.200000e+01 : f32
    %823 = vector.broadcast %cst_354 : f32 to vector<8x128xf32>
    %824 = arith.addf %822, %823 : vector<8x128xf32>
    %cst_355 = arith.constant -3.000000e+01 : f32
    %825 = vector.broadcast %cst_355 : f32 to vector<8x128xf32>
    %826 = arith.cmpf oge, %820, %825 : vector<8x128xf32>
    %cst_356 = arith.constant 3.200000e+01 : f32
    %827 = vector.broadcast %cst_356 : f32 to vector<8x128xf32>
    %828 = arith.select %826, %824, %827 : vector<8x128xi1>, vector<8x128xf32>
    %cst_357 = arith.constant 4.000000e-01 : f32
    %829 = vector.broadcast %cst_357 : f32 to vector<8x128xf32>
    %830 = arith.mulf %820, %829 : vector<8x128xf32>
    %cst_358 = arith.constant 4.000000e+01 : f32
    %831 = vector.broadcast %cst_358 : f32 to vector<8x128xf32>
    %832 = arith.addf %830, %831 : vector<8x128xf32>
    %cst_359 = arith.constant -2.000000e+01 : f32
    %833 = vector.broadcast %cst_359 : f32 to vector<8x128xf32>
    %834 = arith.cmpf oge, %820, %833 : vector<8x128xf32>
    %835 = arith.select %834, %832, %828 : vector<8x128xi1>, vector<8x128xf32>
    %cst_360 = arith.constant 0.000000e+00 : f32
    %836 = vector.broadcast %cst_360 : f32 to vector<8x128xf32>
    %837 = arith.mulf %820, %836 : vector<8x128xf32>
    %cst_361 = arith.constant 3.600000e+01 : f32
    %838 = vector.broadcast %cst_361 : f32 to vector<8x128xf32>
    %839 = arith.addf %837, %838 : vector<8x128xf32>
    %cst_362 = arith.constant -1.000000e+01 : f32
    %840 = vector.broadcast %cst_362 : f32 to vector<8x128xf32>
    %841 = arith.cmpf oge, %820, %840 : vector<8x128xf32>
    %842 = arith.select %841, %839, %835 : vector<8x128xi1>, vector<8x128xf32>
    %cst_363 = arith.constant 0.000000e+00 : f32
    %843 = vector.broadcast %cst_363 : f32 to vector<8x128xf32>
    %844 = arith.mulf %820, %843 : vector<8x128xf32>
    %cst_364 = arith.constant 3.600000e+01 : f32
    %845 = vector.broadcast %cst_364 : f32 to vector<8x128xf32>
    %846 = arith.addf %844, %845 : vector<8x128xf32>
    %cst_365 = arith.constant 0.000000e+00 : f32
    %847 = vector.broadcast %cst_365 : f32 to vector<8x128xf32>
    %848 = arith.cmpf oge, %820, %847 : vector<8x128xf32>
    %849 = arith.select %848, %846, %842 : vector<8x128xi1>, vector<8x128xf32>
    %cst_366 = arith.constant 0.000000e+00 : f32
    %850 = vector.broadcast %cst_366 : f32 to vector<8x128xf32>
    %851 = arith.mulf %820, %850 : vector<8x128xf32>
    %cst_367 = arith.constant 3.600000e+01 : f32
    %852 = vector.broadcast %cst_367 : f32 to vector<8x128xf32>
    %853 = arith.addf %851, %852 : vector<8x128xf32>
    %cst_368 = arith.constant 5.000000e+00 : f32
    %854 = vector.broadcast %cst_368 : f32 to vector<8x128xf32>
    %855 = arith.cmpf oge, %820, %854 : vector<8x128xf32>
    %856 = arith.select %855, %853, %849 : vector<8x128xi1>, vector<8x128xf32>
    %cst_369 = arith.constant 0.000000e+00 : f32
    %857 = vector.broadcast %cst_369 : f32 to vector<8x128xf32>
    %858 = arith.mulf %820, %857 : vector<8x128xf32>
    %cst_370 = arith.constant 3.600000e+01 : f32
    %859 = vector.broadcast %cst_370 : f32 to vector<8x128xf32>
    %860 = arith.addf %858, %859 : vector<8x128xf32>
    %cst_371 = arith.constant 1.000000e+01 : f32
    %861 = vector.broadcast %cst_371 : f32 to vector<8x128xf32>
    %862 = arith.cmpf oge, %820, %861 : vector<8x128xf32>
    %863 = arith.select %862, %860, %856 : vector<8x128xi1>, vector<8x128xf32>
    %cst_372 = arith.constant 0.000000e+00 : f32
    %864 = vector.broadcast %cst_372 : f32 to vector<8x128xf32>
    %865 = arith.mulf %820, %864 : vector<8x128xf32>
    %cst_373 = arith.constant 3.600000e+01 : f32
    %866 = vector.broadcast %cst_373 : f32 to vector<8x128xf32>
    %867 = arith.addf %865, %866 : vector<8x128xf32>
    %cst_374 = arith.constant 1.500000e+01 : f32
    %868 = vector.broadcast %cst_374 : f32 to vector<8x128xf32>
    %869 = arith.cmpf oge, %820, %868 : vector<8x128xf32>
    %870 = arith.select %869, %867, %863 : vector<8x128xi1>, vector<8x128xf32>
    %cst_375 = arith.constant 0.000000e+00 : f32
    %871 = vector.broadcast %cst_375 : f32 to vector<8x128xf32>
    %872 = arith.mulf %820, %871 : vector<8x128xf32>
    %cst_376 = arith.constant 3.600000e+01 : f32
    %873 = vector.broadcast %cst_376 : f32 to vector<8x128xf32>
    %874 = arith.addf %872, %873 : vector<8x128xf32>
    %cst_377 = arith.constant 2.000000e+01 : f32
    %875 = vector.broadcast %cst_377 : f32 to vector<8x128xf32>
    %876 = arith.cmpf oge, %820, %875 : vector<8x128xf32>
    %877 = arith.select %876, %874, %870 : vector<8x128xi1>, vector<8x128xf32>
    %cst_378 = arith.constant 0.000000e+00 : f32
    %878 = vector.broadcast %cst_378 : f32 to vector<8x128xf32>
    %879 = arith.mulf %820, %878 : vector<8x128xf32>
    %cst_379 = arith.constant 3.600000e+01 : f32
    %880 = vector.broadcast %cst_379 : f32 to vector<8x128xf32>
    %881 = arith.addf %879, %880 : vector<8x128xf32>
    %cst_380 = arith.constant 2.500000e+01 : f32
    %882 = vector.broadcast %cst_380 : f32 to vector<8x128xf32>
    %883 = arith.cmpf oge, %820, %882 : vector<8x128xf32>
    %884 = arith.select %883, %881, %877 : vector<8x128xi1>, vector<8x128xf32>
    %cst_381 = arith.constant 0.000000e+00 : f32
    %885 = vector.broadcast %cst_381 : f32 to vector<8x128xf32>
    %886 = arith.mulf %820, %885 : vector<8x128xf32>
    %cst_382 = arith.constant 3.600000e+01 : f32
    %887 = vector.broadcast %cst_382 : f32 to vector<8x128xf32>
    %888 = arith.addf %886, %887 : vector<8x128xf32>
    %cst_383 = arith.constant 3.000000e+01 : f32
    %889 = vector.broadcast %cst_383 : f32 to vector<8x128xf32>
    %890 = arith.cmpf oge, %820, %889 : vector<8x128xf32>
    %891 = arith.select %890, %888, %884 : vector<8x128xi1>, vector<8x128xf32>
    %cst_384 = arith.constant 0.000000e+00 : f32
    %892 = vector.broadcast %cst_384 : f32 to vector<8x128xf32>
    %893 = arith.mulf %820, %892 : vector<8x128xf32>
    %cst_385 = arith.constant 3.600000e+01 : f32
    %894 = vector.broadcast %cst_385 : f32 to vector<8x128xf32>
    %895 = arith.addf %893, %894 : vector<8x128xf32>
    %cst_386 = arith.constant 3.500000e+01 : f32
    %896 = vector.broadcast %cst_386 : f32 to vector<8x128xf32>
    %897 = arith.cmpf oge, %820, %896 : vector<8x128xf32>
    %898 = arith.select %897, %895, %891 : vector<8x128xi1>, vector<8x128xf32>
    %cst_387 = arith.constant 0.000000e+00 : f32
    %899 = vector.broadcast %cst_387 : f32 to vector<8x128xf32>
    %900 = arith.mulf %820, %899 : vector<8x128xf32>
    %cst_388 = arith.constant 3.600000e+01 : f32
    %901 = vector.broadcast %cst_388 : f32 to vector<8x128xf32>
    %902 = arith.addf %900, %901 : vector<8x128xf32>
    %cst_389 = arith.constant 4.000000e+01 : f32
    %903 = vector.broadcast %cst_389 : f32 to vector<8x128xf32>
    %904 = arith.cmpf oge, %820, %903 : vector<8x128xf32>
    %905 = arith.select %904, %902, %898 : vector<8x128xi1>, vector<8x128xf32>
    %cst_390 = arith.constant 0.000000e+00 : f32
    %906 = vector.broadcast %cst_390 : f32 to vector<8x128xf32>
    %907 = arith.mulf %820, %906 : vector<8x128xf32>
    %cst_391 = arith.constant 3.600000e+01 : f32
    %908 = vector.broadcast %cst_391 : f32 to vector<8x128xf32>
    %909 = arith.addf %907, %908 : vector<8x128xf32>
    %cst_392 = arith.constant 4.500000e+01 : f32
    %910 = vector.broadcast %cst_392 : f32 to vector<8x128xf32>
    %911 = arith.cmpf oge, %820, %910 : vector<8x128xf32>
    %912 = arith.select %911, %909, %905 : vector<8x128xi1>, vector<8x128xf32>
    %cst_393 = arith.constant 2.000000e+00 : f32
    %913 = vector.broadcast %cst_393 : f32 to vector<8x128xf32>
    %914 = arith.mulf %71, %913 : vector<8x128xf32>
    %cst_394 = arith.constant -6.300000e+01 : f32
    %915 = vector.broadcast %cst_394 : f32 to vector<8x128xf32>
    %916 = arith.addf %914, %915 : vector<8x128xf32>
    %917 = arith.subf %912, %806 : vector<8x128xf32>
    %918 = arith.mulf %916, %917 : vector<8x128xf32>
    %919 = arith.addf %806, %918 : vector<8x128xf32>
    %cst_395 = arith.constant 3.150000e+01 : f32
    %920 = vector.broadcast %cst_395 : f32 to vector<8x128xf32>
    %921 = arith.cmpf oge, %71, %920 : vector<8x128xf32>
    %922 = arith.select %921, %919, %816 : vector<8x128xi1>, vector<8x128xf32>
    %c8 = arith.constant 8 : index
    %c0_396 = arith.constant 0 : index
    %c0_397 = arith.constant 0 : index
    %923 = vector.load %arg1[%c8, %c0_396, %c0_397] : memref<12x8x128xf32, #tpu.memory_space<vmem>>, vector<1x8x128xf32>
    %924 = vector.shape_cast %923 : vector<1x8x128xf32> to vector<8x128xf32>
    %925 = arith.subf %922, %924 : vector<8x128xf32>
    %cst_398 = arith.constant -2.000000e+01 : f32
    %cst_399 = arith.constant 2.000000e+01 : f32
    %926 = vector.broadcast %cst_398 : f32 to vector<8x128xf32>
    %927 = arith.maximumf %926, %925 : vector<8x128xf32>
    %928 = vector.broadcast %cst_399 : f32 to vector<8x128xf32>
    %929 = arith.minimumf %928, %927 : vector<8x128xf32>
    %cst_400 = arith.constant -2.000000e-01 : f32
    %930 = vector.broadcast %cst_400 : f32 to vector<8x128xf32>
    %931 = arith.mulf %929, %930 : vector<8x128xf32>
    %cst_401 = arith.constant -1.000000e+00 : f32
    %932 = vector.broadcast %cst_401 : f32 to vector<8x128xf32>
    %933 = arith.addf %931, %932 : vector<8x128xf32>
    %cst_402 = arith.constant -2.000000e+01 : f32
    %934 = vector.broadcast %cst_402 : f32 to vector<8x128xf32>
    %935 = arith.cmpf oge, %929, %934 : vector<8x128xf32>
    %cst_403 = arith.constant 3.000000e+00 : f32
    %936 = vector.broadcast %cst_403 : f32 to vector<8x128xf32>
    %937 = arith.select %935, %933, %936 : vector<8x128xi1>, vector<8x128xf32>
    %cst_404 = arith.constant -2.000000e-01 : f32
    %938 = vector.broadcast %cst_404 : f32 to vector<8x128xf32>
    %939 = arith.mulf %929, %938 : vector<8x128xf32>
    %cst_405 = arith.constant -1.000000e+00 : f32
    %940 = vector.broadcast %cst_405 : f32 to vector<8x128xf32>
    %941 = arith.addf %939, %940 : vector<8x128xf32>
    %cst_406 = arith.constant -1.500000e+01 : f32
    %942 = vector.broadcast %cst_406 : f32 to vector<8x128xf32>
    %943 = arith.cmpf oge, %929, %942 : vector<8x128xf32>
    %944 = arith.select %943, %941, %937 : vector<8x128xi1>, vector<8x128xf32>
    %cst_407 = arith.constant -1.000000e-01 : f32
    %945 = vector.broadcast %cst_407 : f32 to vector<8x128xf32>
    %946 = arith.mulf %929, %945 : vector<8x128xf32>
    %cst_408 = arith.constant 0.000000e+00 : f32
    %947 = vector.broadcast %cst_408 : f32 to vector<8x128xf32>
    %948 = arith.addf %946, %947 : vector<8x128xf32>
    %cst_409 = arith.constant -1.000000e+01 : f32
    %949 = vector.broadcast %cst_409 : f32 to vector<8x128xf32>
    %950 = arith.cmpf oge, %929, %949 : vector<8x128xf32>
    %951 = arith.select %950, %948, %944 : vector<8x128xi1>, vector<8x128xf32>
    %cst_410 = arith.constant -2.000000e-02 : f32
    %952 = vector.broadcast %cst_410 : f32 to vector<8x128xf32>
    %953 = arith.mulf %929, %952 : vector<8x128xf32>
    %cst_411 = arith.constant 4.000000e-01 : f32
    %954 = vector.broadcast %cst_411 : f32 to vector<8x128xf32>
    %955 = arith.addf %953, %954 : vector<8x128xf32>
    %cst_412 = arith.constant -5.000000e+00 : f32
    %956 = vector.broadcast %cst_412 : f32 to vector<8x128xf32>
    %957 = arith.cmpf oge, %929, %956 : vector<8x128xf32>
    %958 = arith.select %957, %955, %951 : vector<8x128xi1>, vector<8x128xf32>
    %cst_413 = arith.constant 2.000000e-02 : f32
    %959 = vector.broadcast %cst_413 : f32 to vector<8x128xf32>
    %960 = arith.mulf %929, %959 : vector<8x128xf32>
    %cst_414 = arith.constant 4.000000e-01 : f32
    %961 = vector.broadcast %cst_414 : f32 to vector<8x128xf32>
    %962 = arith.addf %960, %961 : vector<8x128xf32>
    %cst_415 = arith.constant 0.000000e+00 : f32
    %963 = vector.broadcast %cst_415 : f32 to vector<8x128xf32>
    %964 = arith.cmpf oge, %929, %963 : vector<8x128xf32>
    %965 = arith.select %964, %962, %958 : vector<8x128xi1>, vector<8x128xf32>
    %cst_416 = arith.constant 2.000000e-01 : f32
    %966 = vector.broadcast %cst_416 : f32 to vector<8x128xf32>
    %967 = arith.mulf %929, %966 : vector<8x128xf32>
    %cst_417 = arith.constant -5.000000e-01 : f32
    %968 = vector.broadcast %cst_417 : f32 to vector<8x128xf32>
    %969 = arith.addf %967, %968 : vector<8x128xf32>
    %cst_418 = arith.constant 5.000000e+00 : f32
    %970 = vector.broadcast %cst_418 : f32 to vector<8x128xf32>
    %971 = arith.cmpf oge, %929, %970 : vector<8x128xf32>
    %972 = arith.select %971, %969, %965 : vector<8x128xi1>, vector<8x128xf32>
    %cst_419 = arith.constant 3.000000e-01 : f32
    %973 = vector.broadcast %cst_419 : f32 to vector<8x128xf32>
    %974 = arith.mulf %929, %973 : vector<8x128xf32>
    %cst_420 = arith.constant -1.500000e+00 : f32
    %975 = vector.broadcast %cst_420 : f32 to vector<8x128xf32>
    %976 = arith.addf %974, %975 : vector<8x128xf32>
    %cst_421 = arith.constant 1.000000e+01 : f32
    %977 = vector.broadcast %cst_421 : f32 to vector<8x128xf32>
    %978 = arith.cmpf oge, %929, %977 : vector<8x128xf32>
    %979 = arith.select %978, %976, %972 : vector<8x128xi1>, vector<8x128xf32>
    %cst_422 = arith.constant 6.000000e-01 : f32
    %980 = vector.broadcast %cst_422 : f32 to vector<8x128xf32>
    %981 = arith.mulf %929, %980 : vector<8x128xf32>
    %cst_423 = arith.constant -6.000000e+00 : f32
    %982 = vector.broadcast %cst_423 : f32 to vector<8x128xf32>
    %983 = arith.addf %981, %982 : vector<8x128xf32>
    %cst_424 = arith.constant 1.500000e+01 : f32
    %984 = vector.broadcast %cst_424 : f32 to vector<8x128xf32>
    %985 = arith.cmpf oge, %929, %984 : vector<8x128xf32>
    %986 = arith.select %985, %983, %979 : vector<8x128xi1>, vector<8x128xf32>
    %987 = arith.minimumf %62, %986 : vector<8x128xf32>
    %c4 = arith.constant 4 : index
    %c0_425 = arith.constant 0 : index
    %c0_426 = arith.constant 0 : index
    %988 = vector.load %arg1[%c4, %c0_425, %c0_426] : memref<12x8x128xf32, #tpu.memory_space<vmem>>, vector<1x8x128xf32>
    %989 = vector.shape_cast %988 : vector<1x8x128xf32> to vector<8x128xf32>
    %c5 = arith.constant 5 : index
    %c0_427 = arith.constant 0 : index
    %c0_428 = arith.constant 0 : index
    %990 = vector.load %arg1[%c5, %c0_427, %c0_428] : memref<12x8x128xf32, #tpu.memory_space<vmem>>, vector<1x8x128xf32>
    %991 = vector.shape_cast %990 : vector<1x8x128xf32> to vector<8x128xf32>
    %c7 = arith.constant 7 : index
    %c0_429 = arith.constant 0 : index
    %c0_430 = arith.constant 0 : index
    %992 = vector.load %arg1[%c7, %c0_429, %c0_430] : memref<12x8x128xf32, #tpu.memory_space<vmem>>, vector<1x8x128xf32>
    %993 = vector.shape_cast %992 : vector<1x8x128xf32> to vector<8x128xf32>
    %994 = arith.subf %993, %991 : vector<8x128xf32>
    %cst_431 = arith.constant 2.440000e-02 : f32
    %995 = vector.broadcast %cst_431 : f32 to vector<8x128xf32>
    %996 = arith.mulf %994, %995 : vector<8x128xf32>
    %c6 = arith.constant 6 : index
    %c0_432 = arith.constant 0 : index
    %c0_433 = arith.constant 0 : index
    %997 = vector.load %arg1[%c6, %c0_432, %c0_433] : memref<12x8x128xf32, #tpu.memory_space<vmem>>, vector<1x8x128xf32>
    %998 = vector.shape_cast %997 : vector<1x8x128xf32> to vector<8x128xf32>
    %999 = arith.subf %989, %998 : vector<8x128xf32>
    %cst_434 = arith.constant 9.960000e-02 : f32
    %1000 = vector.broadcast %cst_434 : f32 to vector<8x128xf32>
    %1001 = arith.mulf %999, %1000 : vector<8x128xf32>
    %cst_435 = arith.constant -1.000000e+01 : f32
    %cst_436 = arith.constant 1.000000e+01 : f32
    %1002 = vector.broadcast %cst_435 : f32 to vector<8x128xf32>
    %1003 = arith.maximumf %1002, %996 : vector<8x128xf32>
    %1004 = vector.broadcast %cst_436 : f32 to vector<8x128xf32>
    %1005 = arith.minimumf %1004, %1003 : vector<8x128xf32>
    %cst_437 = arith.constant -0.0210937597 : f32
    %1006 = vector.broadcast %cst_437 : f32 to vector<8x128xf32>
    %1007 = arith.mulf %1005, %1006 : vector<8x128xf32>
    %cst_438 = arith.constant 0.289062411 : f32
    %1008 = vector.broadcast %cst_438 : f32 to vector<8x128xf32>
    %1009 = arith.addf %1007, %1008 : vector<8x128xf32>
    %cst_439 = arith.constant -1.000000e+01 : f32
    %1010 = vector.broadcast %cst_439 : f32 to vector<8x128xf32>
    %1011 = arith.cmpf oge, %1005, %1010 : vector<8x128xf32>
    %cst_440 = arith.constant 5.000000e-01 : f32
    %1012 = vector.broadcast %cst_440 : f32 to vector<8x128xf32>
    %1013 = arith.select %1011, %1009, %1012 : vector<8x128xi1>, vector<8x128xf32>
    %cst_441 = arith.constant 0.000000e+00 : f32
    %1014 = vector.broadcast %cst_441 : f32 to vector<8x128xf32>
    %1015 = arith.mulf %1005, %1014 : vector<8x128xf32>
    %cst_442 = arith.constant 0.341796786 : f32
    %1016 = vector.broadcast %cst_442 : f32 to vector<8x128xf32>
    %1017 = arith.addf %1015, %1016 : vector<8x128xf32>
    %cst_443 = arith.constant -2.500000e+00 : f32
    %1018 = vector.broadcast %cst_443 : f32 to vector<8x128xf32>
    %1019 = arith.cmpf oge, %1005, %1018 : vector<8x128xf32>
    %1020 = arith.select %1019, %1017, %1013 : vector<8x128xi1>, vector<8x128xf32>
    %cst_444 = arith.constant 0.000000e+00 : f32
    %1021 = vector.broadcast %cst_444 : f32 to vector<8x128xf32>
    %1022 = arith.mulf %1005, %1021 : vector<8x128xf32>
    %cst_445 = arith.constant 0.341796786 : f32
    %1023 = vector.broadcast %cst_445 : f32 to vector<8x128xf32>
    %1024 = arith.addf %1022, %1023 : vector<8x128xf32>
    %cst_446 = arith.constant -1.000000e+00 : f32
    %1025 = vector.broadcast %cst_446 : f32 to vector<8x128xf32>
    %1026 = arith.cmpf oge, %1005, %1025 : vector<8x128xf32>
    %1027 = arith.select %1026, %1024, %1020 : vector<8x128xi1>, vector<8x128xf32>
    %cst_447 = arith.constant 0.000000e+00 : f32
    %1028 = vector.broadcast %cst_447 : f32 to vector<8x128xf32>
    %1029 = arith.mulf %1005, %1028 : vector<8x128xf32>
    %cst_448 = arith.constant 0.341796786 : f32
    %1030 = vector.broadcast %cst_448 : f32 to vector<8x128xf32>
    %1031 = arith.addf %1029, %1030 : vector<8x128xf32>
    %cst_449 = arith.constant 1.000000e+00 : f32
    %1032 = vector.broadcast %cst_449 : f32 to vector<8x128xf32>
    %1033 = arith.cmpf oge, %1005, %1032 : vector<8x128xf32>
    %1034 = arith.select %1033, %1031, %1027 : vector<8x128xi1>, vector<8x128xf32>
    %cst_450 = arith.constant 0.0210937597 : f32
    %1035 = vector.broadcast %cst_450 : f32 to vector<8x128xf32>
    %1036 = arith.mulf %1005, %1035 : vector<8x128xf32>
    %cst_451 = arith.constant 0.289062411 : f32
    %1037 = vector.broadcast %cst_451 : f32 to vector<8x128xf32>
    %1038 = arith.addf %1036, %1037 : vector<8x128xf32>
    %cst_452 = arith.constant 2.500000e+00 : f32
    %1039 = vector.broadcast %cst_452 : f32 to vector<8x128xf32>
    %1040 = arith.cmpf oge, %1005, %1039 : vector<8x128xf32>
    %1041 = arith.select %1040, %1038, %1034 : vector<8x128xi1>, vector<8x128xf32>
    %1042 = arith.mulf %1041, %987 : vector<8x128xf32>
    %cst_453 = arith.constant -1.000000e+01 : f32
    %cst_454 = arith.constant 1.000000e+01 : f32
    %1043 = vector.broadcast %cst_453 : f32 to vector<8x128xf32>
    %1044 = arith.maximumf %1043, %1001 : vector<8x128xf32>
    %1045 = vector.broadcast %cst_454 : f32 to vector<8x128xf32>
    %1046 = arith.minimumf %1045, %1044 : vector<8x128xf32>
    %cst_455 = arith.constant 0.000000e+00 : f32
    %1047 = vector.broadcast %cst_455 : f32 to vector<8x128xf32>
    %1048 = arith.mulf %1046, %1047 : vector<8x128xf32>
    %cst_456 = arith.constant 4.900000e-01 : f32
    %1049 = vector.broadcast %cst_456 : f32 to vector<8x128xf32>
    %1050 = arith.addf %1048, %1049 : vector<8x128xf32>
    %cst_457 = arith.constant -1.000000e+01 : f32
    %1051 = vector.broadcast %cst_457 : f32 to vector<8x128xf32>
    %1052 = arith.cmpf oge, %1046, %1051 : vector<8x128xf32>
    %cst_458 = arith.constant 4.900000e-01 : f32
    %1053 = vector.broadcast %cst_458 : f32 to vector<8x128xf32>
    %1054 = arith.select %1052, %1050, %1053 : vector<8x128xi1>, vector<8x128xf32>
    %cst_459 = arith.constant -0.293333322 : f32
    %1055 = vector.broadcast %cst_459 : f32 to vector<8x128xf32>
    %1056 = arith.mulf %1046, %1055 : vector<8x128xf32>
    %cst_460 = arith.constant -0.24333334 : f32
    %1057 = vector.broadcast %cst_460 : f32 to vector<8x128xf32>
    %1058 = arith.addf %1056, %1057 : vector<8x128xf32>
    %cst_461 = arith.constant -2.500000e+00 : f32
    %1059 = vector.broadcast %cst_461 : f32 to vector<8x128xf32>
    %1060 = arith.cmpf oge, %1046, %1059 : vector<8x128xf32>
    %1061 = arith.select %1060, %1058, %1054 : vector<8x128xi1>, vector<8x128xf32>
    %cst_462 = arith.constant 0.000000e+00 : f32
    %1062 = vector.broadcast %cst_462 : f32 to vector<8x128xf32>
    %1063 = arith.mulf %1046, %1062 : vector<8x128xf32>
    %cst_463 = arith.constant 5.000000e-02 : f32
    %1064 = vector.broadcast %cst_463 : f32 to vector<8x128xf32>
    %1065 = arith.addf %1063, %1064 : vector<8x128xf32>
    %cst_464 = arith.constant -1.000000e+00 : f32
    %1066 = vector.broadcast %cst_464 : f32 to vector<8x128xf32>
    %1067 = arith.cmpf oge, %1046, %1066 : vector<8x128xf32>
    %1068 = arith.select %1067, %1065, %1061 : vector<8x128xi1>, vector<8x128xf32>
    %cst_465 = arith.constant 0.293333322 : f32
    %1069 = vector.broadcast %cst_465 : f32 to vector<8x128xf32>
    %1070 = arith.mulf %1046, %1069 : vector<8x128xf32>
    %cst_466 = arith.constant -0.24333334 : f32
    %1071 = vector.broadcast %cst_466 : f32 to vector<8x128xf32>
    %1072 = arith.addf %1070, %1071 : vector<8x128xf32>
    %cst_467 = arith.constant 1.000000e+00 : f32
    %1073 = vector.broadcast %cst_467 : f32 to vector<8x128xf32>
    %1074 = arith.cmpf oge, %1046, %1073 : vector<8x128xf32>
    %1075 = arith.select %1074, %1072, %1068 : vector<8x128xi1>, vector<8x128xf32>
    %cst_468 = arith.constant 0.000000e+00 : f32
    %1076 = vector.broadcast %cst_468 : f32 to vector<8x128xf32>
    %1077 = arith.mulf %1046, %1076 : vector<8x128xf32>
    %cst_469 = arith.constant 4.900000e-01 : f32
    %1078 = vector.broadcast %cst_469 : f32 to vector<8x128xf32>
    %1079 = arith.addf %1077, %1078 : vector<8x128xf32>
    %cst_470 = arith.constant 2.500000e+00 : f32
    %1080 = vector.broadcast %cst_470 : f32 to vector<8x128xf32>
    %1081 = arith.cmpf oge, %1046, %1080 : vector<8x128xf32>
    %1082 = arith.select %1081, %1079, %1075 : vector<8x128xi1>, vector<8x128xf32>
    %1083 = arith.mulf %1082, %987 : vector<8x128xf32>
    %cst_471 = arith.constant -1.000000e+01 : f32
    %cst_472 = arith.constant 1.000000e+01 : f32
    %1084 = vector.broadcast %cst_471 : f32 to vector<8x128xf32>
    %1085 = arith.maximumf %1084, %1001 : vector<8x128xf32>
    %1086 = vector.broadcast %cst_472 : f32 to vector<8x128xf32>
    %1087 = arith.minimumf %1086, %1085 : vector<8x128xf32>
    %cst_473 = arith.constant -0.00266666664 : f32
    %1088 = vector.broadcast %cst_473 : f32 to vector<8x128xf32>
    %1089 = arith.mulf %1087, %1088 : vector<8x128xf32>
    %cst_474 = arith.constant 0.123333335 : f32
    %1090 = vector.broadcast %cst_474 : f32 to vector<8x128xf32>
    %1091 = arith.addf %1089, %1090 : vector<8x128xf32>
    %cst_475 = arith.constant -1.000000e+01 : f32
    %1092 = vector.broadcast %cst_475 : f32 to vector<8x128xf32>
    %1093 = arith.cmpf oge, %1087, %1092 : vector<8x128xf32>
    %cst_476 = arith.constant 1.500000e-01 : f32
    %1094 = vector.broadcast %cst_476 : f32 to vector<8x128xf32>
    %1095 = arith.select %1093, %1091, %1094 : vector<8x128xi1>, vector<8x128xf32>
    %cst_477 = arith.constant -0.00666666683 : f32
    %1096 = vector.broadcast %cst_477 : f32 to vector<8x128xf32>
    %1097 = arith.mulf %1087, %1096 : vector<8x128xf32>
    %cst_478 = arith.constant 0.113333337 : f32
    %1098 = vector.broadcast %cst_478 : f32 to vector<8x128xf32>
    %1099 = arith.addf %1097, %1098 : vector<8x128xf32>
    %cst_479 = arith.constant -2.500000e+00 : f32
    %1100 = vector.broadcast %cst_479 : f32 to vector<8x128xf32>
    %1101 = arith.cmpf oge, %1087, %1100 : vector<8x128xf32>
    %1102 = arith.select %1101, %1099, %1095 : vector<8x128xi1>, vector<8x128xf32>
    %cst_480 = arith.constant -3.000000e-02 : f32
    %1103 = vector.broadcast %cst_480 : f32 to vector<8x128xf32>
    %1104 = arith.mulf %1087, %1103 : vector<8x128xf32>
    %cst_481 = arith.constant 9.000000e-02 : f32
    %1105 = vector.broadcast %cst_481 : f32 to vector<8x128xf32>
    %1106 = arith.addf %1104, %1105 : vector<8x128xf32>
    %cst_482 = arith.constant -1.000000e+00 : f32
    %1107 = vector.broadcast %cst_482 : f32 to vector<8x128xf32>
    %1108 = arith.cmpf oge, %1087, %1107 : vector<8x128xf32>
    %1109 = arith.select %1108, %1106, %1102 : vector<8x128xi1>, vector<8x128xf32>
    %cst_483 = arith.constant 0.000000e+00 : f32
    %1110 = vector.broadcast %cst_483 : f32 to vector<8x128xf32>
    %1111 = arith.mulf %1087, %1110 : vector<8x128xf32>
    %cst_484 = arith.constant 6.000000e-02 : f32
    %1112 = vector.broadcast %cst_484 : f32 to vector<8x128xf32>
    %1113 = arith.addf %1111, %1112 : vector<8x128xf32>
    %cst_485 = arith.constant 1.000000e+00 : f32
    %1114 = vector.broadcast %cst_485 : f32 to vector<8x128xf32>
    %1115 = arith.cmpf oge, %1087, %1114 : vector<8x128xf32>
    %1116 = arith.select %1115, %1113, %1109 : vector<8x128xi1>, vector<8x128xf32>
    %cst_486 = arith.constant 4.000000e-03 : f32
    %1117 = vector.broadcast %cst_486 : f32 to vector<8x128xf32>
    %1118 = arith.mulf %1087, %1117 : vector<8x128xf32>
    %cst_487 = arith.constant 5.000000e-02 : f32
    %1119 = vector.broadcast %cst_487 : f32 to vector<8x128xf32>
    %1120 = arith.addf %1118, %1119 : vector<8x128xf32>
    %cst_488 = arith.constant 2.500000e+00 : f32
    %1121 = vector.broadcast %cst_488 : f32 to vector<8x128xf32>
    %1122 = arith.cmpf oge, %1087, %1121 : vector<8x128xf32>
    %1123 = arith.select %1122, %1120, %1116 : vector<8x128xi1>, vector<8x128xf32>
    %1124 = arith.mulf %1123, %987 : vector<8x128xf32>
    %cst_489 = arith.constant 0.150390595 : f32
    %1125 = vector.broadcast %cst_489 : f32 to vector<8x128xf32>
    %1126 = arith.mulf %1125, %987 : vector<8x128xf32>
    %1127 = math.absf %996 : vector<8x128xf32>
    %cst_490 = arith.constant 3.906300e-01 : f32
    %1128 = vector.broadcast %cst_490 : f32 to vector<8x128xf32>
    %1129 = arith.cmpf olt, %1127, %1128 : vector<8x128xf32>
    %cst_491 = arith.constant 2.500000e-01 : f32
    %1130 = vector.broadcast %cst_491 : f32 to vector<8x128xf32>
    %1131 = arith.mulf %996, %1130 : vector<8x128xf32>
    %cst_492 = arith.constant 0.000000e+00 : f32
    %1132 = vector.broadcast %cst_492 : f32 to vector<8x128xf32>
    %1133 = arith.select %1129, %1132, %1131 : vector<8x128xi1>, vector<8x128xf32>
    %1134 = arith.mulf %1126, %1133 : vector<8x128xf32>
    %1135 = arith.mulf %1042, %996 : vector<8x128xf32>
    %1136 = arith.addf %1134, %1135 : vector<8x128xf32>
    %1137 = math.absf %996 : vector<8x128xf32>
    %cst_493 = arith.constant 5.937500e-01 : f32
    %1138 = vector.broadcast %cst_493 : f32 to vector<8x128xf32>
    %1139 = arith.cmpf olt, %1137, %1138 : vector<8x128xf32>
    %cst_494 = arith.constant 2.500000e-01 : f32
    %1140 = vector.broadcast %cst_494 : f32 to vector<8x128xf32>
    %1141 = arith.mulf %1001, %1140 : vector<8x128xf32>
    %cst_495 = arith.constant 0.000000e+00 : f32
    %1142 = vector.broadcast %cst_495 : f32 to vector<8x128xf32>
    %1143 = arith.select %1139, %1142, %1141 : vector<8x128xi1>, vector<8x128xf32>
    %1144 = arith.mulf %1124, %1143 : vector<8x128xf32>
    %1145 = arith.mulf %1083, %1001 : vector<8x128xf32>
    %1146 = arith.addf %1144, %1145 : vector<8x128xf32>
    %1147 = arith.minimumf %1136, %1146 : vector<8x128xf32>
    %cst_496 = arith.constant 8.500000e+01 : f32
    %1148 = vector.broadcast %cst_496 : f32 to vector<8x128xf32>
    %1149 = arith.mulf %1147, %1148 : vector<8x128xf32>
    %cst_497 = arith.constant 1.000000e+02 : f32
    %cst_498 = arith.constant 5.500000e+02 : f32
    %1150 = vector.broadcast %cst_497 : f32 to vector<8x128xf32>
    %1151 = arith.maximumf %1150, %989 : vector<8x128xf32>
    %1152 = vector.broadcast %cst_498 : f32 to vector<8x128xf32>
    %1153 = arith.minimumf %1152, %1151 : vector<8x128xf32>
    %cst_499 = arith.constant 2.000000e+02 : f32
    %cst_500 = arith.constant 2.000000e+03 : f32
    %1154 = vector.broadcast %cst_499 : f32 to vector<8x128xf32>
    %1155 = arith.maximumf %1154, %991 : vector<8x128xf32>
    %1156 = vector.broadcast %cst_500 : f32 to vector<8x128xf32>
    %1157 = arith.minimumf %1156, %1155 : vector<8x128xf32>
    %cst_501 = arith.constant 0.000000e+00 : f32
    %1158 = vector.broadcast %cst_501 : f32 to vector<8x128xf32>
    %1159 = arith.mulf %1157, %1158 : vector<8x128xf32>
    %cst_502 = arith.constant 1.600000e+03 : f32
    %1160 = vector.broadcast %cst_502 : f32 to vector<8x128xf32>
    %1161 = arith.addf %1159, %1160 : vector<8x128xf32>
    %cst_503 = arith.constant 2.000000e+02 : f32
    %1162 = vector.broadcast %cst_503 : f32 to vector<8x128xf32>
    %1163 = arith.cmpf oge, %1157, %1162 : vector<8x128xf32>
    %cst_504 = arith.constant 1.600000e+03 : f32
    %1164 = vector.broadcast %cst_504 : f32 to vector<8x128xf32>
    %1165 = arith.select %1163, %1161, %1164 : vector<8x128xi1>, vector<8x128xf32>
    %cst_505 = arith.constant 0.000000e+00 : f32
    %1166 = vector.broadcast %cst_505 : f32 to vector<8x128xf32>
    %1167 = arith.mulf %1157, %1166 : vector<8x128xf32>
    %cst_506 = arith.constant 1.600000e+03 : f32
    %1168 = vector.broadcast %cst_506 : f32 to vector<8x128xf32>
    %1169 = arith.addf %1167, %1168 : vector<8x128xf32>
    %cst_507 = arith.constant 4.000000e+02 : f32
    %1170 = vector.broadcast %cst_507 : f32 to vector<8x128xf32>
    %1171 = arith.cmpf oge, %1157, %1170 : vector<8x128xf32>
    %1172 = arith.select %1171, %1169, %1165 : vector<8x128xi1>, vector<8x128xf32>
    %cst_508 = arith.constant 0.000000e+00 : f32
    %1173 = vector.broadcast %cst_508 : f32 to vector<8x128xf32>
    %1174 = arith.mulf %1157, %1173 : vector<8x128xf32>
    %cst_509 = arith.constant 1.600000e+03 : f32
    %1175 = vector.broadcast %cst_509 : f32 to vector<8x128xf32>
    %1176 = arith.addf %1174, %1175 : vector<8x128xf32>
    %cst_510 = arith.constant 6.000000e+02 : f32
    %1177 = vector.broadcast %cst_510 : f32 to vector<8x128xf32>
    %1178 = arith.cmpf oge, %1157, %1177 : vector<8x128xf32>
    %1179 = arith.select %1178, %1176, %1172 : vector<8x128xi1>, vector<8x128xf32>
    %cst_511 = arith.constant 0.000000e+00 : f32
    %1180 = vector.broadcast %cst_511 : f32 to vector<8x128xf32>
    %1181 = arith.mulf %1157, %1180 : vector<8x128xf32>
    %cst_512 = arith.constant 1.600000e+03 : f32
    %1182 = vector.broadcast %cst_512 : f32 to vector<8x128xf32>
    %1183 = arith.addf %1181, %1182 : vector<8x128xf32>
    %cst_513 = arith.constant 8.000000e+02 : f32
    %1184 = vector.broadcast %cst_513 : f32 to vector<8x128xf32>
    %1185 = arith.cmpf oge, %1157, %1184 : vector<8x128xf32>
    %1186 = arith.select %1185, %1183, %1179 : vector<8x128xi1>, vector<8x128xf32>
    %cst_514 = arith.constant 5.000000e-01 : f32
    %1187 = vector.broadcast %cst_514 : f32 to vector<8x128xf32>
    %1188 = arith.mulf %1157, %1187 : vector<8x128xf32>
    %cst_515 = arith.constant 1.100000e+03 : f32
    %1189 = vector.broadcast %cst_515 : f32 to vector<8x128xf32>
    %1190 = arith.addf %1188, %1189 : vector<8x128xf32>
    %cst_516 = arith.constant 1.000000e+03 : f32
    %1191 = vector.broadcast %cst_516 : f32 to vector<8x128xf32>
    %1192 = arith.cmpf oge, %1157, %1191 : vector<8x128xf32>
    %1193 = arith.select %1192, %1190, %1186 : vector<8x128xi1>, vector<8x128xf32>
    %cst_517 = arith.constant 5.000000e-01 : f32
    %1194 = vector.broadcast %cst_517 : f32 to vector<8x128xf32>
    %1195 = arith.mulf %1157, %1194 : vector<8x128xf32>
    %cst_518 = arith.constant 1.100000e+03 : f32
    %1196 = vector.broadcast %cst_518 : f32 to vector<8x128xf32>
    %1197 = arith.addf %1195, %1196 : vector<8x128xf32>
    %cst_519 = arith.constant 1.200000e+03 : f32
    %1198 = vector.broadcast %cst_519 : f32 to vector<8x128xf32>
    %1199 = arith.cmpf oge, %1157, %1198 : vector<8x128xf32>
    %1200 = arith.select %1199, %1197, %1193 : vector<8x128xi1>, vector<8x128xf32>
    %cst_520 = arith.constant 5.000000e-01 : f32
    %1201 = vector.broadcast %cst_520 : f32 to vector<8x128xf32>
    %1202 = arith.mulf %1157, %1201 : vector<8x128xf32>
    %cst_521 = arith.constant 1.100000e+03 : f32
    %1203 = vector.broadcast %cst_521 : f32 to vector<8x128xf32>
    %1204 = arith.addf %1202, %1203 : vector<8x128xf32>
    %cst_522 = arith.constant 1.400000e+03 : f32
    %1205 = vector.broadcast %cst_522 : f32 to vector<8x128xf32>
    %1206 = arith.cmpf oge, %1157, %1205 : vector<8x128xf32>
    %1207 = arith.select %1206, %1204, %1200 : vector<8x128xi1>, vector<8x128xf32>
    %cst_523 = arith.constant 5.000000e-01 : f32
    %1208 = vector.broadcast %cst_523 : f32 to vector<8x128xf32>
    %1209 = arith.mulf %1157, %1208 : vector<8x128xf32>
    %cst_524 = arith.constant 1.100000e+03 : f32
    %1210 = vector.broadcast %cst_524 : f32 to vector<8x128xf32>
    %1211 = arith.addf %1209, %1210 : vector<8x128xf32>
    %cst_525 = arith.constant 1.600000e+03 : f32
    %1212 = vector.broadcast %cst_525 : f32 to vector<8x128xf32>
    %1213 = arith.cmpf oge, %1157, %1212 : vector<8x128xf32>
    %1214 = arith.select %1213, %1211, %1207 : vector<8x128xi1>, vector<8x128xf32>
    %cst_526 = arith.constant 0.000000e+00 : f32
    %1215 = vector.broadcast %cst_526 : f32 to vector<8x128xf32>
    %1216 = arith.mulf %1157, %1215 : vector<8x128xf32>
    %cst_527 = arith.constant 2.000000e+03 : f32
    %1217 = vector.broadcast %cst_527 : f32 to vector<8x128xf32>
    %1218 = arith.addf %1216, %1217 : vector<8x128xf32>
    %cst_528 = arith.constant 1.800000e+03 : f32
    %1219 = vector.broadcast %cst_528 : f32 to vector<8x128xf32>
    %1220 = arith.cmpf oge, %1157, %1219 : vector<8x128xf32>
    %1221 = arith.select %1220, %1218, %1214 : vector<8x128xi1>, vector<8x128xf32>
    %cst_529 = arith.constant 2.000000e-02 : f32
    %1222 = vector.broadcast %cst_529 : f32 to vector<8x128xf32>
    %1223 = arith.mulf %1153, %1222 : vector<8x128xf32>
    %cst_530 = arith.constant -2.000000e+00 : f32
    %1224 = vector.broadcast %cst_530 : f32 to vector<8x128xf32>
    %1225 = arith.addf %1223, %1224 : vector<8x128xf32>
    %cst_531 = arith.constant 2.000000e+03 : f32
    %1226 = vector.broadcast %cst_531 : f32 to vector<8x128xf32>
    %1227 = arith.subf %1221, %1226 : vector<8x128xf32>
    %1228 = arith.mulf %1225, %1227 : vector<8x128xf32>
    %cst_532 = arith.constant 2.000000e+03 : f32
    %1229 = vector.broadcast %cst_532 : f32 to vector<8x128xf32>
    %1230 = arith.addf %1229, %1228 : vector<8x128xf32>
    %cst_533 = arith.constant 1.000000e+02 : f32
    %1231 = vector.broadcast %cst_533 : f32 to vector<8x128xf32>
    %1232 = arith.cmpf oge, %1153, %1231 : vector<8x128xf32>
    %cst_534 = arith.constant 2.000000e+03 : f32
    %1233 = vector.broadcast %cst_534 : f32 to vector<8x128xf32>
    %1234 = arith.select %1232, %1230, %1233 : vector<8x128xi1>, vector<8x128xf32>
    %cst_535 = arith.constant 2.000000e+02 : f32
    %cst_536 = arith.constant 2.000000e+03 : f32
    %1235 = vector.broadcast %cst_535 : f32 to vector<8x128xf32>
    %1236 = arith.maximumf %1235, %991 : vector<8x128xf32>
    %1237 = vector.broadcast %cst_536 : f32 to vector<8x128xf32>
    %1238 = arith.minimumf %1237, %1236 : vector<8x128xf32>
    %cst_537 = arith.constant 0.000000e+00 : f32
    %1239 = vector.broadcast %cst_537 : f32 to vector<8x128xf32>
    %1240 = arith.mulf %1238, %1239 : vector<8x128xf32>
    %cst_538 = arith.constant 1.200000e+03 : f32
    %1241 = vector.broadcast %cst_538 : f32 to vector<8x128xf32>
    %1242 = arith.addf %1240, %1241 : vector<8x128xf32>
    %cst_539 = arith.constant 2.000000e+02 : f32
    %1243 = vector.broadcast %cst_539 : f32 to vector<8x128xf32>
    %1244 = arith.cmpf oge, %1238, %1243 : vector<8x128xf32>
    %cst_540 = arith.constant 1.200000e+03 : f32
    %1245 = vector.broadcast %cst_540 : f32 to vector<8x128xf32>
    %1246 = arith.select %1244, %1242, %1245 : vector<8x128xi1>, vector<8x128xf32>
    %cst_541 = arith.constant 0.000000e+00 : f32
    %1247 = vector.broadcast %cst_541 : f32 to vector<8x128xf32>
    %1248 = arith.mulf %1238, %1247 : vector<8x128xf32>
    %cst_542 = arith.constant 1.200000e+03 : f32
    %1249 = vector.broadcast %cst_542 : f32 to vector<8x128xf32>
    %1250 = arith.addf %1248, %1249 : vector<8x128xf32>
    %cst_543 = arith.constant 4.000000e+02 : f32
    %1251 = vector.broadcast %cst_543 : f32 to vector<8x128xf32>
    %1252 = arith.cmpf oge, %1238, %1251 : vector<8x128xf32>
    %1253 = arith.select %1252, %1250, %1246 : vector<8x128xi1>, vector<8x128xf32>
    %cst_544 = arith.constant 0.000000e+00 : f32
    %1254 = vector.broadcast %cst_544 : f32 to vector<8x128xf32>
    %1255 = arith.mulf %1238, %1254 : vector<8x128xf32>
    %cst_545 = arith.constant 1.200000e+03 : f32
    %1256 = vector.broadcast %cst_545 : f32 to vector<8x128xf32>
    %1257 = arith.addf %1255, %1256 : vector<8x128xf32>
    %cst_546 = arith.constant 6.000000e+02 : f32
    %1258 = vector.broadcast %cst_546 : f32 to vector<8x128xf32>
    %1259 = arith.cmpf oge, %1238, %1258 : vector<8x128xf32>
    %1260 = arith.select %1259, %1257, %1253 : vector<8x128xi1>, vector<8x128xf32>
    %cst_547 = arith.constant 0.000000e+00 : f32
    %1261 = vector.broadcast %cst_547 : f32 to vector<8x128xf32>
    %1262 = arith.mulf %1238, %1261 : vector<8x128xf32>
    %cst_548 = arith.constant 1.200000e+03 : f32
    %1263 = vector.broadcast %cst_548 : f32 to vector<8x128xf32>
    %1264 = arith.addf %1262, %1263 : vector<8x128xf32>
    %cst_549 = arith.constant 8.000000e+02 : f32
    %1265 = vector.broadcast %cst_549 : f32 to vector<8x128xf32>
    %1266 = arith.cmpf oge, %1238, %1265 : vector<8x128xf32>
    %1267 = arith.select %1266, %1264, %1260 : vector<8x128xi1>, vector<8x128xf32>
    %cst_550 = arith.constant 0.000000e+00 : f32
    %1268 = vector.broadcast %cst_550 : f32 to vector<8x128xf32>
    %1269 = arith.mulf %1238, %1268 : vector<8x128xf32>
    %cst_551 = arith.constant 1.200000e+03 : f32
    %1270 = vector.broadcast %cst_551 : f32 to vector<8x128xf32>
    %1271 = arith.addf %1269, %1270 : vector<8x128xf32>
    %cst_552 = arith.constant 1.000000e+03 : f32
    %1272 = vector.broadcast %cst_552 : f32 to vector<8x128xf32>
    %1273 = arith.cmpf oge, %1238, %1272 : vector<8x128xf32>
    %1274 = arith.select %1273, %1271, %1267 : vector<8x128xi1>, vector<8x128xf32>
    %cst_553 = arith.constant 0.000000e+00 : f32
    %1275 = vector.broadcast %cst_553 : f32 to vector<8x128xf32>
    %1276 = arith.mulf %1238, %1275 : vector<8x128xf32>
    %cst_554 = arith.constant 1.200000e+03 : f32
    %1277 = vector.broadcast %cst_554 : f32 to vector<8x128xf32>
    %1278 = arith.addf %1276, %1277 : vector<8x128xf32>
    %cst_555 = arith.constant 1.200000e+03 : f32
    %1279 = vector.broadcast %cst_555 : f32 to vector<8x128xf32>
    %1280 = arith.cmpf oge, %1238, %1279 : vector<8x128xf32>
    %1281 = arith.select %1280, %1278, %1274 : vector<8x128xi1>, vector<8x128xf32>
    %cst_556 = arith.constant 0.000000e+00 : f32
    %1282 = vector.broadcast %cst_556 : f32 to vector<8x128xf32>
    %1283 = arith.mulf %1238, %1282 : vector<8x128xf32>
    %cst_557 = arith.constant 1.200000e+03 : f32
    %1284 = vector.broadcast %cst_557 : f32 to vector<8x128xf32>
    %1285 = arith.addf %1283, %1284 : vector<8x128xf32>
    %cst_558 = arith.constant 1.400000e+03 : f32
    %1286 = vector.broadcast %cst_558 : f32 to vector<8x128xf32>
    %1287 = arith.cmpf oge, %1238, %1286 : vector<8x128xf32>
    %1288 = arith.select %1287, %1285, %1281 : vector<8x128xi1>, vector<8x128xf32>
    %cst_559 = arith.constant 2.000000e+00 : f32
    %1289 = vector.broadcast %cst_559 : f32 to vector<8x128xf32>
    %1290 = arith.mulf %1238, %1289 : vector<8x128xf32>
    %cst_560 = arith.constant -2.000000e+03 : f32
    %1291 = vector.broadcast %cst_560 : f32 to vector<8x128xf32>
    %1292 = arith.addf %1290, %1291 : vector<8x128xf32>
    %cst_561 = arith.constant 1.600000e+03 : f32
    %1293 = vector.broadcast %cst_561 : f32 to vector<8x128xf32>
    %1294 = arith.cmpf oge, %1238, %1293 : vector<8x128xf32>
    %1295 = arith.select %1294, %1292, %1288 : vector<8x128xi1>, vector<8x128xf32>
    %cst_562 = arith.constant 2.000000e+00 : f32
    %1296 = vector.broadcast %cst_562 : f32 to vector<8x128xf32>
    %1297 = arith.mulf %1238, %1296 : vector<8x128xf32>
    %cst_563 = arith.constant -2.000000e+03 : f32
    %1298 = vector.broadcast %cst_563 : f32 to vector<8x128xf32>
    %1299 = arith.addf %1297, %1298 : vector<8x128xf32>
    %cst_564 = arith.constant 1.800000e+03 : f32
    %1300 = vector.broadcast %cst_564 : f32 to vector<8x128xf32>
    %1301 = arith.cmpf oge, %1238, %1300 : vector<8x128xf32>
    %1302 = arith.select %1301, %1299, %1295 : vector<8x128xi1>, vector<8x128xf32>
    %cst_565 = arith.constant 2.000000e-02 : f32
    %1303 = vector.broadcast %cst_565 : f32 to vector<8x128xf32>
    %1304 = arith.mulf %1153, %1303 : vector<8x128xf32>
    %cst_566 = arith.constant -3.000000e+00 : f32
    %1305 = vector.broadcast %cst_566 : f32 to vector<8x128xf32>
    %1306 = arith.addf %1304, %1305 : vector<8x128xf32>
    %1307 = arith.subf %1302, %1221 : vector<8x128xf32>
    %1308 = arith.mulf %1306, %1307 : vector<8x128xf32>
    %1309 = arith.addf %1221, %1308 : vector<8x128xf32>
    %cst_567 = arith.constant 1.500000e+02 : f32
    %1310 = vector.broadcast %cst_567 : f32 to vector<8x128xf32>
    %1311 = arith.cmpf oge, %1153, %1310 : vector<8x128xf32>
    %1312 = arith.select %1311, %1309, %1234 : vector<8x128xi1>, vector<8x128xf32>
    %cst_568 = arith.constant 2.000000e+02 : f32
    %cst_569 = arith.constant 2.000000e+03 : f32
    %1313 = vector.broadcast %cst_568 : f32 to vector<8x128xf32>
    %1314 = arith.maximumf %1313, %991 : vector<8x128xf32>
    %1315 = vector.broadcast %cst_569 : f32 to vector<8x128xf32>
    %1316 = arith.minimumf %1315, %1314 : vector<8x128xf32>
    %cst_570 = arith.constant 0.000000e+00 : f32
    %1317 = vector.broadcast %cst_570 : f32 to vector<8x128xf32>
    %1318 = arith.mulf %1316, %1317 : vector<8x128xf32>
    %cst_571 = arith.constant 9.000000e+02 : f32
    %1319 = vector.broadcast %cst_571 : f32 to vector<8x128xf32>
    %1320 = arith.addf %1318, %1319 : vector<8x128xf32>
    %cst_572 = arith.constant 2.000000e+02 : f32
    %1321 = vector.broadcast %cst_572 : f32 to vector<8x128xf32>
    %1322 = arith.cmpf oge, %1316, %1321 : vector<8x128xf32>
    %cst_573 = arith.constant 9.000000e+02 : f32
    %1323 = vector.broadcast %cst_573 : f32 to vector<8x128xf32>
    %1324 = arith.select %1322, %1320, %1323 : vector<8x128xi1>, vector<8x128xf32>
    %cst_574 = arith.constant 2.500000e-01 : f32
    %1325 = vector.broadcast %cst_574 : f32 to vector<8x128xf32>
    %1326 = arith.mulf %1316, %1325 : vector<8x128xf32>
    %cst_575 = arith.constant 8.000000e+02 : f32
    %1327 = vector.broadcast %cst_575 : f32 to vector<8x128xf32>
    %1328 = arith.addf %1326, %1327 : vector<8x128xf32>
    %cst_576 = arith.constant 4.000000e+02 : f32
    %1329 = vector.broadcast %cst_576 : f32 to vector<8x128xf32>
    %1330 = arith.cmpf oge, %1316, %1329 : vector<8x128xf32>
    %1331 = arith.select %1330, %1328, %1324 : vector<8x128xi1>, vector<8x128xf32>
    %cst_577 = arith.constant 2.500000e-01 : f32
    %1332 = vector.broadcast %cst_577 : f32 to vector<8x128xf32>
    %1333 = arith.mulf %1316, %1332 : vector<8x128xf32>
    %cst_578 = arith.constant 8.000000e+02 : f32
    %1334 = vector.broadcast %cst_578 : f32 to vector<8x128xf32>
    %1335 = arith.addf %1333, %1334 : vector<8x128xf32>
    %cst_579 = arith.constant 6.000000e+02 : f32
    %1336 = vector.broadcast %cst_579 : f32 to vector<8x128xf32>
    %1337 = arith.cmpf oge, %1316, %1336 : vector<8x128xf32>
    %1338 = arith.select %1337, %1335, %1331 : vector<8x128xi1>, vector<8x128xf32>
    %cst_580 = arith.constant 2.500000e-01 : f32
    %1339 = vector.broadcast %cst_580 : f32 to vector<8x128xf32>
    %1340 = arith.mulf %1316, %1339 : vector<8x128xf32>
    %cst_581 = arith.constant 8.000000e+02 : f32
    %1341 = vector.broadcast %cst_581 : f32 to vector<8x128xf32>
    %1342 = arith.addf %1340, %1341 : vector<8x128xf32>
    %cst_582 = arith.constant 8.000000e+02 : f32
    %1343 = vector.broadcast %cst_582 : f32 to vector<8x128xf32>
    %1344 = arith.cmpf oge, %1316, %1343 : vector<8x128xf32>
    %1345 = arith.select %1344, %1342, %1338 : vector<8x128xi1>, vector<8x128xf32>
    %cst_583 = arith.constant 2.500000e-01 : f32
    %1346 = vector.broadcast %cst_583 : f32 to vector<8x128xf32>
    %1347 = arith.mulf %1316, %1346 : vector<8x128xf32>
    %cst_584 = arith.constant 8.000000e+02 : f32
    %1348 = vector.broadcast %cst_584 : f32 to vector<8x128xf32>
    %1349 = arith.addf %1347, %1348 : vector<8x128xf32>
    %cst_585 = arith.constant 1.000000e+03 : f32
    %1350 = vector.broadcast %cst_585 : f32 to vector<8x128xf32>
    %1351 = arith.cmpf oge, %1316, %1350 : vector<8x128xf32>
    %1352 = arith.select %1351, %1349, %1345 : vector<8x128xi1>, vector<8x128xf32>
    %cst_586 = arith.constant 2.500000e-01 : f32
    %1353 = vector.broadcast %cst_586 : f32 to vector<8x128xf32>
    %1354 = arith.mulf %1316, %1353 : vector<8x128xf32>
    %cst_587 = arith.constant 8.000000e+02 : f32
    %1355 = vector.broadcast %cst_587 : f32 to vector<8x128xf32>
    %1356 = arith.addf %1354, %1355 : vector<8x128xf32>
    %cst_588 = arith.constant 1.200000e+03 : f32
    %1357 = vector.broadcast %cst_588 : f32 to vector<8x128xf32>
    %1358 = arith.cmpf oge, %1316, %1357 : vector<8x128xf32>
    %1359 = arith.select %1358, %1356, %1352 : vector<8x128xi1>, vector<8x128xf32>
    %cst_589 = arith.constant 2.500000e-01 : f32
    %1360 = vector.broadcast %cst_589 : f32 to vector<8x128xf32>
    %1361 = arith.mulf %1316, %1360 : vector<8x128xf32>
    %cst_590 = arith.constant 8.000000e+02 : f32
    %1362 = vector.broadcast %cst_590 : f32 to vector<8x128xf32>
    %1363 = arith.addf %1361, %1362 : vector<8x128xf32>
    %cst_591 = arith.constant 1.400000e+03 : f32
    %1364 = vector.broadcast %cst_591 : f32 to vector<8x128xf32>
    %1365 = arith.cmpf oge, %1316, %1364 : vector<8x128xf32>
    %1366 = arith.select %1365, %1363, %1359 : vector<8x128xi1>, vector<8x128xf32>
    %cst_592 = arith.constant 2.000000e+00 : f32
    %1367 = vector.broadcast %cst_592 : f32 to vector<8x128xf32>
    %1368 = arith.mulf %1316, %1367 : vector<8x128xf32>
    %cst_593 = arith.constant -2.000000e+03 : f32
    %1369 = vector.broadcast %cst_593 : f32 to vector<8x128xf32>
    %1370 = arith.addf %1368, %1369 : vector<8x128xf32>
    %cst_594 = arith.constant 1.600000e+03 : f32
    %1371 = vector.broadcast %cst_594 : f32 to vector<8x128xf32>
    %1372 = arith.cmpf oge, %1316, %1371 : vector<8x128xf32>
    %1373 = arith.select %1372, %1370, %1366 : vector<8x128xi1>, vector<8x128xf32>
    %cst_595 = arith.constant 2.000000e+00 : f32
    %1374 = vector.broadcast %cst_595 : f32 to vector<8x128xf32>
    %1375 = arith.mulf %1316, %1374 : vector<8x128xf32>
    %cst_596 = arith.constant -2.000000e+03 : f32
    %1376 = vector.broadcast %cst_596 : f32 to vector<8x128xf32>
    %1377 = arith.addf %1375, %1376 : vector<8x128xf32>
    %cst_597 = arith.constant 1.800000e+03 : f32
    %1378 = vector.broadcast %cst_597 : f32 to vector<8x128xf32>
    %1379 = arith.cmpf oge, %1316, %1378 : vector<8x128xf32>
    %1380 = arith.select %1379, %1377, %1373 : vector<8x128xi1>, vector<8x128xf32>
    %cst_598 = arith.constant 2.000000e-02 : f32
    %1381 = vector.broadcast %cst_598 : f32 to vector<8x128xf32>
    %1382 = arith.mulf %1153, %1381 : vector<8x128xf32>
    %cst_599 = arith.constant -4.000000e+00 : f32
    %1383 = vector.broadcast %cst_599 : f32 to vector<8x128xf32>
    %1384 = arith.addf %1382, %1383 : vector<8x128xf32>
    %1385 = arith.subf %1380, %1302 : vector<8x128xf32>
    %1386 = arith.mulf %1384, %1385 : vector<8x128xf32>
    %1387 = arith.addf %1302, %1386 : vector<8x128xf32>
    %cst_600 = arith.constant 2.000000e+02 : f32
    %1388 = vector.broadcast %cst_600 : f32 to vector<8x128xf32>
    %1389 = arith.cmpf oge, %1153, %1388 : vector<8x128xf32>
    %1390 = arith.select %1389, %1387, %1312 : vector<8x128xi1>, vector<8x128xf32>
    %cst_601 = arith.constant 2.000000e+02 : f32
    %cst_602 = arith.constant 2.000000e+03 : f32
    %1391 = vector.broadcast %cst_601 : f32 to vector<8x128xf32>
    %1392 = arith.maximumf %1391, %991 : vector<8x128xf32>
    %1393 = vector.broadcast %cst_602 : f32 to vector<8x128xf32>
    %1394 = arith.minimumf %1393, %1392 : vector<8x128xf32>
    %cst_603 = arith.constant 0.000000e+00 : f32
    %1395 = vector.broadcast %cst_603 : f32 to vector<8x128xf32>
    %1396 = arith.mulf %1394, %1395 : vector<8x128xf32>
    %cst_604 = arith.constant 8.000000e+02 : f32
    %1397 = vector.broadcast %cst_604 : f32 to vector<8x128xf32>
    %1398 = arith.addf %1396, %1397 : vector<8x128xf32>
    %cst_605 = arith.constant 2.000000e+02 : f32
    %1399 = vector.broadcast %cst_605 : f32 to vector<8x128xf32>
    %1400 = arith.cmpf oge, %1394, %1399 : vector<8x128xf32>
    %cst_606 = arith.constant 8.000000e+02 : f32
    %1401 = vector.broadcast %cst_606 : f32 to vector<8x128xf32>
    %1402 = arith.select %1400, %1398, %1401 : vector<8x128xi1>, vector<8x128xf32>
    %cst_607 = arith.constant 0.000000e+00 : f32
    %1403 = vector.broadcast %cst_607 : f32 to vector<8x128xf32>
    %1404 = arith.mulf %1394, %1403 : vector<8x128xf32>
    %cst_608 = arith.constant 8.000000e+02 : f32
    %1405 = vector.broadcast %cst_608 : f32 to vector<8x128xf32>
    %1406 = arith.addf %1404, %1405 : vector<8x128xf32>
    %cst_609 = arith.constant 4.000000e+02 : f32
    %1407 = vector.broadcast %cst_609 : f32 to vector<8x128xf32>
    %1408 = arith.cmpf oge, %1394, %1407 : vector<8x128xf32>
    %1409 = arith.select %1408, %1406, %1402 : vector<8x128xi1>, vector<8x128xf32>
    %cst_610 = arith.constant 0.000000e+00 : f32
    %1410 = vector.broadcast %cst_610 : f32 to vector<8x128xf32>
    %1411 = arith.mulf %1394, %1410 : vector<8x128xf32>
    %cst_611 = arith.constant 8.000000e+02 : f32
    %1412 = vector.broadcast %cst_611 : f32 to vector<8x128xf32>
    %1413 = arith.addf %1411, %1412 : vector<8x128xf32>
    %cst_612 = arith.constant 6.000000e+02 : f32
    %1414 = vector.broadcast %cst_612 : f32 to vector<8x128xf32>
    %1415 = arith.cmpf oge, %1394, %1414 : vector<8x128xf32>
    %1416 = arith.select %1415, %1413, %1409 : vector<8x128xi1>, vector<8x128xf32>
    %cst_613 = arith.constant 5.000000e-01 : f32
    %1417 = vector.broadcast %cst_613 : f32 to vector<8x128xf32>
    %1418 = arith.mulf %1394, %1417 : vector<8x128xf32>
    %cst_614 = arith.constant 4.000000e+02 : f32
    %1419 = vector.broadcast %cst_614 : f32 to vector<8x128xf32>
    %1420 = arith.addf %1418, %1419 : vector<8x128xf32>
    %cst_615 = arith.constant 8.000000e+02 : f32
    %1421 = vector.broadcast %cst_615 : f32 to vector<8x128xf32>
    %1422 = arith.cmpf oge, %1394, %1421 : vector<8x128xf32>
    %1423 = arith.select %1422, %1420, %1416 : vector<8x128xi1>, vector<8x128xf32>
    %cst_616 = arith.constant 5.000000e-01 : f32
    %1424 = vector.broadcast %cst_616 : f32 to vector<8x128xf32>
    %1425 = arith.mulf %1394, %1424 : vector<8x128xf32>
    %cst_617 = arith.constant 4.000000e+02 : f32
    %1426 = vector.broadcast %cst_617 : f32 to vector<8x128xf32>
    %1427 = arith.addf %1425, %1426 : vector<8x128xf32>
    %cst_618 = arith.constant 1.000000e+03 : f32
    %1428 = vector.broadcast %cst_618 : f32 to vector<8x128xf32>
    %1429 = arith.cmpf oge, %1394, %1428 : vector<8x128xf32>
    %1430 = arith.select %1429, %1427, %1423 : vector<8x128xi1>, vector<8x128xf32>
    %cst_619 = arith.constant 5.000000e-01 : f32
    %1431 = vector.broadcast %cst_619 : f32 to vector<8x128xf32>
    %1432 = arith.mulf %1394, %1431 : vector<8x128xf32>
    %cst_620 = arith.constant 4.000000e+02 : f32
    %1433 = vector.broadcast %cst_620 : f32 to vector<8x128xf32>
    %1434 = arith.addf %1432, %1433 : vector<8x128xf32>
    %cst_621 = arith.constant 1.200000e+03 : f32
    %1435 = vector.broadcast %cst_621 : f32 to vector<8x128xf32>
    %1436 = arith.cmpf oge, %1394, %1435 : vector<8x128xf32>
    %1437 = arith.select %1436, %1434, %1430 : vector<8x128xi1>, vector<8x128xf32>
    %cst_622 = arith.constant 5.000000e-01 : f32
    %1438 = vector.broadcast %cst_622 : f32 to vector<8x128xf32>
    %1439 = arith.mulf %1394, %1438 : vector<8x128xf32>
    %cst_623 = arith.constant 4.000000e+02 : f32
    %1440 = vector.broadcast %cst_623 : f32 to vector<8x128xf32>
    %1441 = arith.addf %1439, %1440 : vector<8x128xf32>
    %cst_624 = arith.constant 1.400000e+03 : f32
    %1442 = vector.broadcast %cst_624 : f32 to vector<8x128xf32>
    %1443 = arith.cmpf oge, %1394, %1442 : vector<8x128xf32>
    %1444 = arith.select %1443, %1441, %1437 : vector<8x128xi1>, vector<8x128xf32>
    %cst_625 = arith.constant 2.000000e+00 : f32
    %1445 = vector.broadcast %cst_625 : f32 to vector<8x128xf32>
    %1446 = arith.mulf %1394, %1445 : vector<8x128xf32>
    %cst_626 = arith.constant -2.000000e+03 : f32
    %1447 = vector.broadcast %cst_626 : f32 to vector<8x128xf32>
    %1448 = arith.addf %1446, %1447 : vector<8x128xf32>
    %cst_627 = arith.constant 1.600000e+03 : f32
    %1449 = vector.broadcast %cst_627 : f32 to vector<8x128xf32>
    %1450 = arith.cmpf oge, %1394, %1449 : vector<8x128xf32>
    %1451 = arith.select %1450, %1448, %1444 : vector<8x128xi1>, vector<8x128xf32>
    %cst_628 = arith.constant 2.000000e+00 : f32
    %1452 = vector.broadcast %cst_628 : f32 to vector<8x128xf32>
    %1453 = arith.mulf %1394, %1452 : vector<8x128xf32>
    %cst_629 = arith.constant -2.000000e+03 : f32
    %1454 = vector.broadcast %cst_629 : f32 to vector<8x128xf32>
    %1455 = arith.addf %1453, %1454 : vector<8x128xf32>
    %cst_630 = arith.constant 1.800000e+03 : f32
    %1456 = vector.broadcast %cst_630 : f32 to vector<8x128xf32>
    %1457 = arith.cmpf oge, %1394, %1456 : vector<8x128xf32>
    %1458 = arith.select %1457, %1455, %1451 : vector<8x128xi1>, vector<8x128xf32>
    %cst_631 = arith.constant 2.000000e-02 : f32
    %1459 = vector.broadcast %cst_631 : f32 to vector<8x128xf32>
    %1460 = arith.mulf %1153, %1459 : vector<8x128xf32>
    %cst_632 = arith.constant -5.000000e+00 : f32
    %1461 = vector.broadcast %cst_632 : f32 to vector<8x128xf32>
    %1462 = arith.addf %1460, %1461 : vector<8x128xf32>
    %1463 = arith.subf %1458, %1380 : vector<8x128xf32>
    %1464 = arith.mulf %1462, %1463 : vector<8x128xf32>
    %1465 = arith.addf %1380, %1464 : vector<8x128xf32>
    %cst_633 = arith.constant 2.500000e+02 : f32
    %1466 = vector.broadcast %cst_633 : f32 to vector<8x128xf32>
    %1467 = arith.cmpf oge, %1153, %1466 : vector<8x128xf32>
    %1468 = arith.select %1467, %1465, %1390 : vector<8x128xi1>, vector<8x128xf32>
    %cst_634 = arith.constant 2.000000e+02 : f32
    %cst_635 = arith.constant 2.000000e+03 : f32
    %1469 = vector.broadcast %cst_634 : f32 to vector<8x128xf32>
    %1470 = arith.maximumf %1469, %991 : vector<8x128xf32>
    %1471 = vector.broadcast %cst_635 : f32 to vector<8x128xf32>
    %1472 = arith.minimumf %1471, %1470 : vector<8x128xf32>
    %cst_636 = arith.constant 0.000000e+00 : f32
    %1473 = vector.broadcast %cst_636 : f32 to vector<8x128xf32>
    %1474 = arith.mulf %1472, %1473 : vector<8x128xf32>
    %cst_637 = arith.constant 8.000000e+02 : f32
    %1475 = vector.broadcast %cst_637 : f32 to vector<8x128xf32>
    %1476 = arith.addf %1474, %1475 : vector<8x128xf32>
    %cst_638 = arith.constant 2.000000e+02 : f32
    %1477 = vector.broadcast %cst_638 : f32 to vector<8x128xf32>
    %1478 = arith.cmpf oge, %1472, %1477 : vector<8x128xf32>
    %cst_639 = arith.constant 8.000000e+02 : f32
    %1479 = vector.broadcast %cst_639 : f32 to vector<8x128xf32>
    %1480 = arith.select %1478, %1476, %1479 : vector<8x128xi1>, vector<8x128xf32>
    %cst_640 = arith.constant 0.000000e+00 : f32
    %1481 = vector.broadcast %cst_640 : f32 to vector<8x128xf32>
    %1482 = arith.mulf %1472, %1481 : vector<8x128xf32>
    %cst_641 = arith.constant 8.000000e+02 : f32
    %1483 = vector.broadcast %cst_641 : f32 to vector<8x128xf32>
    %1484 = arith.addf %1482, %1483 : vector<8x128xf32>
    %cst_642 = arith.constant 4.000000e+02 : f32
    %1485 = vector.broadcast %cst_642 : f32 to vector<8x128xf32>
    %1486 = arith.cmpf oge, %1472, %1485 : vector<8x128xf32>
    %1487 = arith.select %1486, %1484, %1480 : vector<8x128xi1>, vector<8x128xf32>
    %cst_643 = arith.constant 0.000000e+00 : f32
    %1488 = vector.broadcast %cst_643 : f32 to vector<8x128xf32>
    %1489 = arith.mulf %1472, %1488 : vector<8x128xf32>
    %cst_644 = arith.constant 8.000000e+02 : f32
    %1490 = vector.broadcast %cst_644 : f32 to vector<8x128xf32>
    %1491 = arith.addf %1489, %1490 : vector<8x128xf32>
    %cst_645 = arith.constant 6.000000e+02 : f32
    %1492 = vector.broadcast %cst_645 : f32 to vector<8x128xf32>
    %1493 = arith.cmpf oge, %1472, %1492 : vector<8x128xf32>
    %1494 = arith.select %1493, %1491, %1487 : vector<8x128xi1>, vector<8x128xf32>
    %cst_646 = arith.constant 0.000000e+00 : f32
    %1495 = vector.broadcast %cst_646 : f32 to vector<8x128xf32>
    %1496 = arith.mulf %1472, %1495 : vector<8x128xf32>
    %cst_647 = arith.constant 8.000000e+02 : f32
    %1497 = vector.broadcast %cst_647 : f32 to vector<8x128xf32>
    %1498 = arith.addf %1496, %1497 : vector<8x128xf32>
    %cst_648 = arith.constant 8.000000e+02 : f32
    %1499 = vector.broadcast %cst_648 : f32 to vector<8x128xf32>
    %1500 = arith.cmpf oge, %1472, %1499 : vector<8x128xf32>
    %1501 = arith.select %1500, %1498, %1494 : vector<8x128xi1>, vector<8x128xf32>
    %cst_649 = arith.constant 5.000000e-01 : f32
    %1502 = vector.broadcast %cst_649 : f32 to vector<8x128xf32>
    %1503 = arith.mulf %1472, %1502 : vector<8x128xf32>
    %cst_650 = arith.constant 3.000000e+02 : f32
    %1504 = vector.broadcast %cst_650 : f32 to vector<8x128xf32>
    %1505 = arith.addf %1503, %1504 : vector<8x128xf32>
    %cst_651 = arith.constant 1.000000e+03 : f32
    %1506 = vector.broadcast %cst_651 : f32 to vector<8x128xf32>
    %1507 = arith.cmpf oge, %1472, %1506 : vector<8x128xf32>
    %1508 = arith.select %1507, %1505, %1501 : vector<8x128xi1>, vector<8x128xf32>
    %cst_652 = arith.constant 7.500000e-01 : f32
    %1509 = vector.broadcast %cst_652 : f32 to vector<8x128xf32>
    %1510 = arith.mulf %1472, %1509 : vector<8x128xf32>
    %cst_653 = arith.constant 0.000000e+00 : f32
    %1511 = vector.broadcast %cst_653 : f32 to vector<8x128xf32>
    %1512 = arith.addf %1510, %1511 : vector<8x128xf32>
    %cst_654 = arith.constant 1.200000e+03 : f32
    %1513 = vector.broadcast %cst_654 : f32 to vector<8x128xf32>
    %1514 = arith.cmpf oge, %1472, %1513 : vector<8x128xf32>
    %1515 = arith.select %1514, %1512, %1508 : vector<8x128xi1>, vector<8x128xf32>
    %cst_655 = arith.constant 7.500000e-01 : f32
    %1516 = vector.broadcast %cst_655 : f32 to vector<8x128xf32>
    %1517 = arith.mulf %1472, %1516 : vector<8x128xf32>
    %cst_656 = arith.constant 0.000000e+00 : f32
    %1518 = vector.broadcast %cst_656 : f32 to vector<8x128xf32>
    %1519 = arith.addf %1517, %1518 : vector<8x128xf32>
    %cst_657 = arith.constant 1.400000e+03 : f32
    %1520 = vector.broadcast %cst_657 : f32 to vector<8x128xf32>
    %1521 = arith.cmpf oge, %1472, %1520 : vector<8x128xf32>
    %1522 = arith.select %1521, %1519, %1515 : vector<8x128xi1>, vector<8x128xf32>
    %cst_658 = arith.constant 2.000000e+00 : f32
    %1523 = vector.broadcast %cst_658 : f32 to vector<8x128xf32>
    %1524 = arith.mulf %1472, %1523 : vector<8x128xf32>
    %cst_659 = arith.constant -2.000000e+03 : f32
    %1525 = vector.broadcast %cst_659 : f32 to vector<8x128xf32>
    %1526 = arith.addf %1524, %1525 : vector<8x128xf32>
    %cst_660 = arith.constant 1.600000e+03 : f32
    %1527 = vector.broadcast %cst_660 : f32 to vector<8x128xf32>
    %1528 = arith.cmpf oge, %1472, %1527 : vector<8x128xf32>
    %1529 = arith.select %1528, %1526, %1522 : vector<8x128xi1>, vector<8x128xf32>
    %cst_661 = arith.constant 2.000000e+00 : f32
    %1530 = vector.broadcast %cst_661 : f32 to vector<8x128xf32>
    %1531 = arith.mulf %1472, %1530 : vector<8x128xf32>
    %cst_662 = arith.constant -2.000000e+03 : f32
    %1532 = vector.broadcast %cst_662 : f32 to vector<8x128xf32>
    %1533 = arith.addf %1531, %1532 : vector<8x128xf32>
    %cst_663 = arith.constant 1.800000e+03 : f32
    %1534 = vector.broadcast %cst_663 : f32 to vector<8x128xf32>
    %1535 = arith.cmpf oge, %1472, %1534 : vector<8x128xf32>
    %1536 = arith.select %1535, %1533, %1529 : vector<8x128xi1>, vector<8x128xf32>
    %cst_664 = arith.constant 2.000000e-02 : f32
    %1537 = vector.broadcast %cst_664 : f32 to vector<8x128xf32>
    %1538 = arith.mulf %1153, %1537 : vector<8x128xf32>
    %cst_665 = arith.constant -6.000000e+00 : f32
    %1539 = vector.broadcast %cst_665 : f32 to vector<8x128xf32>
    %1540 = arith.addf %1538, %1539 : vector<8x128xf32>
    %1541 = arith.subf %1536, %1458 : vector<8x128xf32>
    %1542 = arith.mulf %1540, %1541 : vector<8x128xf32>
    %1543 = arith.addf %1458, %1542 : vector<8x128xf32>
    %cst_666 = arith.constant 3.000000e+02 : f32
    %1544 = vector.broadcast %cst_666 : f32 to vector<8x128xf32>
    %1545 = arith.cmpf oge, %1153, %1544 : vector<8x128xf32>
    %1546 = arith.select %1545, %1543, %1468 : vector<8x128xi1>, vector<8x128xf32>
    %cst_667 = arith.constant 2.000000e+02 : f32
    %cst_668 = arith.constant 2.000000e+03 : f32
    %1547 = vector.broadcast %cst_667 : f32 to vector<8x128xf32>
    %1548 = arith.maximumf %1547, %991 : vector<8x128xf32>
    %1549 = vector.broadcast %cst_668 : f32 to vector<8x128xf32>
    %1550 = arith.minimumf %1549, %1548 : vector<8x128xf32>
    %cst_669 = arith.constant 0.000000e+00 : f32
    %1551 = vector.broadcast %cst_669 : f32 to vector<8x128xf32>
    %1552 = arith.mulf %1550, %1551 : vector<8x128xf32>
    %cst_670 = arith.constant 8.000000e+02 : f32
    %1553 = vector.broadcast %cst_670 : f32 to vector<8x128xf32>
    %1554 = arith.addf %1552, %1553 : vector<8x128xf32>
    %cst_671 = arith.constant 2.000000e+02 : f32
    %1555 = vector.broadcast %cst_671 : f32 to vector<8x128xf32>
    %1556 = arith.cmpf oge, %1550, %1555 : vector<8x128xf32>
    %cst_672 = arith.constant 8.000000e+02 : f32
    %1557 = vector.broadcast %cst_672 : f32 to vector<8x128xf32>
    %1558 = arith.select %1556, %1554, %1557 : vector<8x128xi1>, vector<8x128xf32>
    %cst_673 = arith.constant 0.000000e+00 : f32
    %1559 = vector.broadcast %cst_673 : f32 to vector<8x128xf32>
    %1560 = arith.mulf %1550, %1559 : vector<8x128xf32>
    %cst_674 = arith.constant 8.000000e+02 : f32
    %1561 = vector.broadcast %cst_674 : f32 to vector<8x128xf32>
    %1562 = arith.addf %1560, %1561 : vector<8x128xf32>
    %cst_675 = arith.constant 4.000000e+02 : f32
    %1563 = vector.broadcast %cst_675 : f32 to vector<8x128xf32>
    %1564 = arith.cmpf oge, %1550, %1563 : vector<8x128xf32>
    %1565 = arith.select %1564, %1562, %1558 : vector<8x128xi1>, vector<8x128xf32>
    %cst_676 = arith.constant 0.000000e+00 : f32
    %1566 = vector.broadcast %cst_676 : f32 to vector<8x128xf32>
    %1567 = arith.mulf %1550, %1566 : vector<8x128xf32>
    %cst_677 = arith.constant 8.000000e+02 : f32
    %1568 = vector.broadcast %cst_677 : f32 to vector<8x128xf32>
    %1569 = arith.addf %1567, %1568 : vector<8x128xf32>
    %cst_678 = arith.constant 6.000000e+02 : f32
    %1570 = vector.broadcast %cst_678 : f32 to vector<8x128xf32>
    %1571 = arith.cmpf oge, %1550, %1570 : vector<8x128xf32>
    %1572 = arith.select %1571, %1569, %1565 : vector<8x128xi1>, vector<8x128xf32>
    %cst_679 = arith.constant 0.000000e+00 : f32
    %1573 = vector.broadcast %cst_679 : f32 to vector<8x128xf32>
    %1574 = arith.mulf %1550, %1573 : vector<8x128xf32>
    %cst_680 = arith.constant 8.000000e+02 : f32
    %1575 = vector.broadcast %cst_680 : f32 to vector<8x128xf32>
    %1576 = arith.addf %1574, %1575 : vector<8x128xf32>
    %cst_681 = arith.constant 8.000000e+02 : f32
    %1577 = vector.broadcast %cst_681 : f32 to vector<8x128xf32>
    %1578 = arith.cmpf oge, %1550, %1577 : vector<8x128xf32>
    %1579 = arith.select %1578, %1576, %1572 : vector<8x128xi1>, vector<8x128xf32>
    %cst_682 = arith.constant 0.000000e+00 : f32
    %1580 = vector.broadcast %cst_682 : f32 to vector<8x128xf32>
    %1581 = arith.mulf %1550, %1580 : vector<8x128xf32>
    %cst_683 = arith.constant 8.000000e+02 : f32
    %1582 = vector.broadcast %cst_683 : f32 to vector<8x128xf32>
    %1583 = arith.addf %1581, %1582 : vector<8x128xf32>
    %cst_684 = arith.constant 1.000000e+03 : f32
    %1584 = vector.broadcast %cst_684 : f32 to vector<8x128xf32>
    %1585 = arith.cmpf oge, %1550, %1584 : vector<8x128xf32>
    %1586 = arith.select %1585, %1583, %1579 : vector<8x128xi1>, vector<8x128xf32>
    %cst_685 = arith.constant 1.000000e+00 : f32
    %1587 = vector.broadcast %cst_685 : f32 to vector<8x128xf32>
    %1588 = arith.mulf %1550, %1587 : vector<8x128xf32>
    %cst_686 = arith.constant -4.000000e+02 : f32
    %1589 = vector.broadcast %cst_686 : f32 to vector<8x128xf32>
    %1590 = arith.addf %1588, %1589 : vector<8x128xf32>
    %cst_687 = arith.constant 1.200000e+03 : f32
    %1591 = vector.broadcast %cst_687 : f32 to vector<8x128xf32>
    %1592 = arith.cmpf oge, %1550, %1591 : vector<8x128xf32>
    %1593 = arith.select %1592, %1590, %1586 : vector<8x128xi1>, vector<8x128xf32>
    %cst_688 = arith.constant 1.000000e+00 : f32
    %1594 = vector.broadcast %cst_688 : f32 to vector<8x128xf32>
    %1595 = arith.mulf %1550, %1594 : vector<8x128xf32>
    %cst_689 = arith.constant -4.000000e+02 : f32
    %1596 = vector.broadcast %cst_689 : f32 to vector<8x128xf32>
    %1597 = arith.addf %1595, %1596 : vector<8x128xf32>
    %cst_690 = arith.constant 1.400000e+03 : f32
    %1598 = vector.broadcast %cst_690 : f32 to vector<8x128xf32>
    %1599 = arith.cmpf oge, %1550, %1598 : vector<8x128xf32>
    %1600 = arith.select %1599, %1597, %1593 : vector<8x128xi1>, vector<8x128xf32>
    %cst_691 = arith.constant 2.000000e+00 : f32
    %1601 = vector.broadcast %cst_691 : f32 to vector<8x128xf32>
    %1602 = arith.mulf %1550, %1601 : vector<8x128xf32>
    %cst_692 = arith.constant -2.000000e+03 : f32
    %1603 = vector.broadcast %cst_692 : f32 to vector<8x128xf32>
    %1604 = arith.addf %1602, %1603 : vector<8x128xf32>
    %cst_693 = arith.constant 1.600000e+03 : f32
    %1605 = vector.broadcast %cst_693 : f32 to vector<8x128xf32>
    %1606 = arith.cmpf oge, %1550, %1605 : vector<8x128xf32>
    %1607 = arith.select %1606, %1604, %1600 : vector<8x128xi1>, vector<8x128xf32>
    %cst_694 = arith.constant 2.000000e+00 : f32
    %1608 = vector.broadcast %cst_694 : f32 to vector<8x128xf32>
    %1609 = arith.mulf %1550, %1608 : vector<8x128xf32>
    %cst_695 = arith.constant -2.000000e+03 : f32
    %1610 = vector.broadcast %cst_695 : f32 to vector<8x128xf32>
    %1611 = arith.addf %1609, %1610 : vector<8x128xf32>
    %cst_696 = arith.constant 1.800000e+03 : f32
    %1612 = vector.broadcast %cst_696 : f32 to vector<8x128xf32>
    %1613 = arith.cmpf oge, %1550, %1612 : vector<8x128xf32>
    %1614 = arith.select %1613, %1611, %1607 : vector<8x128xi1>, vector<8x128xf32>
    %cst_697 = arith.constant 2.000000e-02 : f32
    %1615 = vector.broadcast %cst_697 : f32 to vector<8x128xf32>
    %1616 = arith.mulf %1153, %1615 : vector<8x128xf32>
    %cst_698 = arith.constant -7.000000e+00 : f32
    %1617 = vector.broadcast %cst_698 : f32 to vector<8x128xf32>
    %1618 = arith.addf %1616, %1617 : vector<8x128xf32>
    %1619 = arith.subf %1614, %1536 : vector<8x128xf32>
    %1620 = arith.mulf %1618, %1619 : vector<8x128xf32>
    %1621 = arith.addf %1536, %1620 : vector<8x128xf32>
    %cst_699 = arith.constant 3.500000e+02 : f32
    %1622 = vector.broadcast %cst_699 : f32 to vector<8x128xf32>
    %1623 = arith.cmpf oge, %1153, %1622 : vector<8x128xf32>
    %1624 = arith.select %1623, %1621, %1546 : vector<8x128xi1>, vector<8x128xf32>
    %cst_700 = arith.constant 2.000000e+02 : f32
    %cst_701 = arith.constant 2.000000e+03 : f32
    %1625 = vector.broadcast %cst_700 : f32 to vector<8x128xf32>
    %1626 = arith.maximumf %1625, %991 : vector<8x128xf32>
    %1627 = vector.broadcast %cst_701 : f32 to vector<8x128xf32>
    %1628 = arith.minimumf %1627, %1626 : vector<8x128xf32>
    %cst_702 = arith.constant 0.000000e+00 : f32
    %1629 = vector.broadcast %cst_702 : f32 to vector<8x128xf32>
    %1630 = arith.mulf %1628, %1629 : vector<8x128xf32>
    %cst_703 = arith.constant 8.000000e+02 : f32
    %1631 = vector.broadcast %cst_703 : f32 to vector<8x128xf32>
    %1632 = arith.addf %1630, %1631 : vector<8x128xf32>
    %cst_704 = arith.constant 2.000000e+02 : f32
    %1633 = vector.broadcast %cst_704 : f32 to vector<8x128xf32>
    %1634 = arith.cmpf oge, %1628, %1633 : vector<8x128xf32>
    %cst_705 = arith.constant 8.000000e+02 : f32
    %1635 = vector.broadcast %cst_705 : f32 to vector<8x128xf32>
    %1636 = arith.select %1634, %1632, %1635 : vector<8x128xi1>, vector<8x128xf32>
    %cst_706 = arith.constant 0.000000e+00 : f32
    %1637 = vector.broadcast %cst_706 : f32 to vector<8x128xf32>
    %1638 = arith.mulf %1628, %1637 : vector<8x128xf32>
    %cst_707 = arith.constant 8.000000e+02 : f32
    %1639 = vector.broadcast %cst_707 : f32 to vector<8x128xf32>
    %1640 = arith.addf %1638, %1639 : vector<8x128xf32>
    %cst_708 = arith.constant 4.000000e+02 : f32
    %1641 = vector.broadcast %cst_708 : f32 to vector<8x128xf32>
    %1642 = arith.cmpf oge, %1628, %1641 : vector<8x128xf32>
    %1643 = arith.select %1642, %1640, %1636 : vector<8x128xi1>, vector<8x128xf32>
    %cst_709 = arith.constant 0.000000e+00 : f32
    %1644 = vector.broadcast %cst_709 : f32 to vector<8x128xf32>
    %1645 = arith.mulf %1628, %1644 : vector<8x128xf32>
    %cst_710 = arith.constant 8.000000e+02 : f32
    %1646 = vector.broadcast %cst_710 : f32 to vector<8x128xf32>
    %1647 = arith.addf %1645, %1646 : vector<8x128xf32>
    %cst_711 = arith.constant 6.000000e+02 : f32
    %1648 = vector.broadcast %cst_711 : f32 to vector<8x128xf32>
    %1649 = arith.cmpf oge, %1628, %1648 : vector<8x128xf32>
    %1650 = arith.select %1649, %1647, %1643 : vector<8x128xi1>, vector<8x128xf32>
    %cst_712 = arith.constant 0.000000e+00 : f32
    %1651 = vector.broadcast %cst_712 : f32 to vector<8x128xf32>
    %1652 = arith.mulf %1628, %1651 : vector<8x128xf32>
    %cst_713 = arith.constant 8.000000e+02 : f32
    %1653 = vector.broadcast %cst_713 : f32 to vector<8x128xf32>
    %1654 = arith.addf %1652, %1653 : vector<8x128xf32>
    %cst_714 = arith.constant 8.000000e+02 : f32
    %1655 = vector.broadcast %cst_714 : f32 to vector<8x128xf32>
    %1656 = arith.cmpf oge, %1628, %1655 : vector<8x128xf32>
    %1657 = arith.select %1656, %1654, %1650 : vector<8x128xi1>, vector<8x128xf32>
    %cst_715 = arith.constant 0.000000e+00 : f32
    %1658 = vector.broadcast %cst_715 : f32 to vector<8x128xf32>
    %1659 = arith.mulf %1628, %1658 : vector<8x128xf32>
    %cst_716 = arith.constant 8.000000e+02 : f32
    %1660 = vector.broadcast %cst_716 : f32 to vector<8x128xf32>
    %1661 = arith.addf %1659, %1660 : vector<8x128xf32>
    %cst_717 = arith.constant 1.000000e+03 : f32
    %1662 = vector.broadcast %cst_717 : f32 to vector<8x128xf32>
    %1663 = arith.cmpf oge, %1628, %1662 : vector<8x128xf32>
    %1664 = arith.select %1663, %1661, %1657 : vector<8x128xi1>, vector<8x128xf32>
    %cst_718 = arith.constant 7.500000e-01 : f32
    %1665 = vector.broadcast %cst_718 : f32 to vector<8x128xf32>
    %1666 = arith.mulf %1628, %1665 : vector<8x128xf32>
    %cst_719 = arith.constant -1.000000e+02 : f32
    %1667 = vector.broadcast %cst_719 : f32 to vector<8x128xf32>
    %1668 = arith.addf %1666, %1667 : vector<8x128xf32>
    %cst_720 = arith.constant 1.200000e+03 : f32
    %1669 = vector.broadcast %cst_720 : f32 to vector<8x128xf32>
    %1670 = arith.cmpf oge, %1628, %1669 : vector<8x128xf32>
    %1671 = arith.select %1670, %1668, %1664 : vector<8x128xi1>, vector<8x128xf32>
    %cst_721 = arith.constant 1.250000e+00 : f32
    %1672 = vector.broadcast %cst_721 : f32 to vector<8x128xf32>
    %1673 = arith.mulf %1628, %1672 : vector<8x128xf32>
    %cst_722 = arith.constant -8.000000e+02 : f32
    %1674 = vector.broadcast %cst_722 : f32 to vector<8x128xf32>
    %1675 = arith.addf %1673, %1674 : vector<8x128xf32>
    %cst_723 = arith.constant 1.400000e+03 : f32
    %1676 = vector.broadcast %cst_723 : f32 to vector<8x128xf32>
    %1677 = arith.cmpf oge, %1628, %1676 : vector<8x128xf32>
    %1678 = arith.select %1677, %1675, %1671 : vector<8x128xi1>, vector<8x128xf32>
    %cst_724 = arith.constant 2.000000e+00 : f32
    %1679 = vector.broadcast %cst_724 : f32 to vector<8x128xf32>
    %1680 = arith.mulf %1628, %1679 : vector<8x128xf32>
    %cst_725 = arith.constant -2.000000e+03 : f32
    %1681 = vector.broadcast %cst_725 : f32 to vector<8x128xf32>
    %1682 = arith.addf %1680, %1681 : vector<8x128xf32>
    %cst_726 = arith.constant 1.600000e+03 : f32
    %1683 = vector.broadcast %cst_726 : f32 to vector<8x128xf32>
    %1684 = arith.cmpf oge, %1628, %1683 : vector<8x128xf32>
    %1685 = arith.select %1684, %1682, %1678 : vector<8x128xi1>, vector<8x128xf32>
    %cst_727 = arith.constant 2.000000e+00 : f32
    %1686 = vector.broadcast %cst_727 : f32 to vector<8x128xf32>
    %1687 = arith.mulf %1628, %1686 : vector<8x128xf32>
    %cst_728 = arith.constant -2.000000e+03 : f32
    %1688 = vector.broadcast %cst_728 : f32 to vector<8x128xf32>
    %1689 = arith.addf %1687, %1688 : vector<8x128xf32>
    %cst_729 = arith.constant 1.800000e+03 : f32
    %1690 = vector.broadcast %cst_729 : f32 to vector<8x128xf32>
    %1691 = arith.cmpf oge, %1628, %1690 : vector<8x128xf32>
    %1692 = arith.select %1691, %1689, %1685 : vector<8x128xi1>, vector<8x128xf32>
    %cst_730 = arith.constant 2.000000e-02 : f32
    %1693 = vector.broadcast %cst_730 : f32 to vector<8x128xf32>
    %1694 = arith.mulf %1153, %1693 : vector<8x128xf32>
    %cst_731 = arith.constant -8.000000e+00 : f32
    %1695 = vector.broadcast %cst_731 : f32 to vector<8x128xf32>
    %1696 = arith.addf %1694, %1695 : vector<8x128xf32>
    %1697 = arith.subf %1692, %1614 : vector<8x128xf32>
    %1698 = arith.mulf %1696, %1697 : vector<8x128xf32>
    %1699 = arith.addf %1614, %1698 : vector<8x128xf32>
    %cst_732 = arith.constant 4.000000e+02 : f32
    %1700 = vector.broadcast %cst_732 : f32 to vector<8x128xf32>
    %1701 = arith.cmpf oge, %1153, %1700 : vector<8x128xf32>
    %1702 = arith.select %1701, %1699, %1624 : vector<8x128xi1>, vector<8x128xf32>
    %cst_733 = arith.constant 2.000000e+02 : f32
    %cst_734 = arith.constant 2.000000e+03 : f32
    %1703 = vector.broadcast %cst_733 : f32 to vector<8x128xf32>
    %1704 = arith.maximumf %1703, %991 : vector<8x128xf32>
    %1705 = vector.broadcast %cst_734 : f32 to vector<8x128xf32>
    %1706 = arith.minimumf %1705, %1704 : vector<8x128xf32>
    %cst_735 = arith.constant 0.000000e+00 : f32
    %1707 = vector.broadcast %cst_735 : f32 to vector<8x128xf32>
    %1708 = arith.mulf %1706, %1707 : vector<8x128xf32>
    %cst_736 = arith.constant 8.000000e+02 : f32
    %1709 = vector.broadcast %cst_736 : f32 to vector<8x128xf32>
    %1710 = arith.addf %1708, %1709 : vector<8x128xf32>
    %cst_737 = arith.constant 2.000000e+02 : f32
    %1711 = vector.broadcast %cst_737 : f32 to vector<8x128xf32>
    %1712 = arith.cmpf oge, %1706, %1711 : vector<8x128xf32>
    %cst_738 = arith.constant 8.000000e+02 : f32
    %1713 = vector.broadcast %cst_738 : f32 to vector<8x128xf32>
    %1714 = arith.select %1712, %1710, %1713 : vector<8x128xi1>, vector<8x128xf32>
    %cst_739 = arith.constant 0.000000e+00 : f32
    %1715 = vector.broadcast %cst_739 : f32 to vector<8x128xf32>
    %1716 = arith.mulf %1706, %1715 : vector<8x128xf32>
    %cst_740 = arith.constant 8.000000e+02 : f32
    %1717 = vector.broadcast %cst_740 : f32 to vector<8x128xf32>
    %1718 = arith.addf %1716, %1717 : vector<8x128xf32>
    %cst_741 = arith.constant 4.000000e+02 : f32
    %1719 = vector.broadcast %cst_741 : f32 to vector<8x128xf32>
    %1720 = arith.cmpf oge, %1706, %1719 : vector<8x128xf32>
    %1721 = arith.select %1720, %1718, %1714 : vector<8x128xi1>, vector<8x128xf32>
    %cst_742 = arith.constant 0.000000e+00 : f32
    %1722 = vector.broadcast %cst_742 : f32 to vector<8x128xf32>
    %1723 = arith.mulf %1706, %1722 : vector<8x128xf32>
    %cst_743 = arith.constant 8.000000e+02 : f32
    %1724 = vector.broadcast %cst_743 : f32 to vector<8x128xf32>
    %1725 = arith.addf %1723, %1724 : vector<8x128xf32>
    %cst_744 = arith.constant 6.000000e+02 : f32
    %1726 = vector.broadcast %cst_744 : f32 to vector<8x128xf32>
    %1727 = arith.cmpf oge, %1706, %1726 : vector<8x128xf32>
    %1728 = arith.select %1727, %1725, %1721 : vector<8x128xi1>, vector<8x128xf32>
    %cst_745 = arith.constant 0.000000e+00 : f32
    %1729 = vector.broadcast %cst_745 : f32 to vector<8x128xf32>
    %1730 = arith.mulf %1706, %1729 : vector<8x128xf32>
    %cst_746 = arith.constant 8.000000e+02 : f32
    %1731 = vector.broadcast %cst_746 : f32 to vector<8x128xf32>
    %1732 = arith.addf %1730, %1731 : vector<8x128xf32>
    %cst_747 = arith.constant 8.000000e+02 : f32
    %1733 = vector.broadcast %cst_747 : f32 to vector<8x128xf32>
    %1734 = arith.cmpf oge, %1706, %1733 : vector<8x128xf32>
    %1735 = arith.select %1734, %1732, %1728 : vector<8x128xi1>, vector<8x128xf32>
    %cst_748 = arith.constant 0.000000e+00 : f32
    %1736 = vector.broadcast %cst_748 : f32 to vector<8x128xf32>
    %1737 = arith.mulf %1706, %1736 : vector<8x128xf32>
    %cst_749 = arith.constant 8.000000e+02 : f32
    %1738 = vector.broadcast %cst_749 : f32 to vector<8x128xf32>
    %1739 = arith.addf %1737, %1738 : vector<8x128xf32>
    %cst_750 = arith.constant 1.000000e+03 : f32
    %1740 = vector.broadcast %cst_750 : f32 to vector<8x128xf32>
    %1741 = arith.cmpf oge, %1706, %1740 : vector<8x128xf32>
    %1742 = arith.select %1741, %1739, %1735 : vector<8x128xi1>, vector<8x128xf32>
    %cst_751 = arith.constant 5.000000e-01 : f32
    %1743 = vector.broadcast %cst_751 : f32 to vector<8x128xf32>
    %1744 = arith.mulf %1706, %1743 : vector<8x128xf32>
    %cst_752 = arith.constant 2.000000e+02 : f32
    %1745 = vector.broadcast %cst_752 : f32 to vector<8x128xf32>
    %1746 = arith.addf %1744, %1745 : vector<8x128xf32>
    %cst_753 = arith.constant 1.200000e+03 : f32
    %1747 = vector.broadcast %cst_753 : f32 to vector<8x128xf32>
    %1748 = arith.cmpf oge, %1706, %1747 : vector<8x128xf32>
    %1749 = arith.select %1748, %1746, %1742 : vector<8x128xi1>, vector<8x128xf32>
    %cst_754 = arith.constant 1.500000e+00 : f32
    %1750 = vector.broadcast %cst_754 : f32 to vector<8x128xf32>
    %1751 = arith.mulf %1706, %1750 : vector<8x128xf32>
    %cst_755 = arith.constant -1.200000e+03 : f32
    %1752 = vector.broadcast %cst_755 : f32 to vector<8x128xf32>
    %1753 = arith.addf %1751, %1752 : vector<8x128xf32>
    %cst_756 = arith.constant 1.400000e+03 : f32
    %1754 = vector.broadcast %cst_756 : f32 to vector<8x128xf32>
    %1755 = arith.cmpf oge, %1706, %1754 : vector<8x128xf32>
    %1756 = arith.select %1755, %1753, %1749 : vector<8x128xi1>, vector<8x128xf32>
    %cst_757 = arith.constant 2.000000e+00 : f32
    %1757 = vector.broadcast %cst_757 : f32 to vector<8x128xf32>
    %1758 = arith.mulf %1706, %1757 : vector<8x128xf32>
    %cst_758 = arith.constant -2.000000e+03 : f32
    %1759 = vector.broadcast %cst_758 : f32 to vector<8x128xf32>
    %1760 = arith.addf %1758, %1759 : vector<8x128xf32>
    %cst_759 = arith.constant 1.600000e+03 : f32
    %1761 = vector.broadcast %cst_759 : f32 to vector<8x128xf32>
    %1762 = arith.cmpf oge, %1706, %1761 : vector<8x128xf32>
    %1763 = arith.select %1762, %1760, %1756 : vector<8x128xi1>, vector<8x128xf32>
    %cst_760 = arith.constant 2.000000e+00 : f32
    %1764 = vector.broadcast %cst_760 : f32 to vector<8x128xf32>
    %1765 = arith.mulf %1706, %1764 : vector<8x128xf32>
    %cst_761 = arith.constant -2.000000e+03 : f32
    %1766 = vector.broadcast %cst_761 : f32 to vector<8x128xf32>
    %1767 = arith.addf %1765, %1766 : vector<8x128xf32>
    %cst_762 = arith.constant 1.800000e+03 : f32
    %1768 = vector.broadcast %cst_762 : f32 to vector<8x128xf32>
    %1769 = arith.cmpf oge, %1706, %1768 : vector<8x128xf32>
    %1770 = arith.select %1769, %1767, %1763 : vector<8x128xi1>, vector<8x128xf32>
    %cst_763 = arith.constant 2.000000e-02 : f32
    %1771 = vector.broadcast %cst_763 : f32 to vector<8x128xf32>
    %1772 = arith.mulf %1153, %1771 : vector<8x128xf32>
    %cst_764 = arith.constant -9.000000e+00 : f32
    %1773 = vector.broadcast %cst_764 : f32 to vector<8x128xf32>
    %1774 = arith.addf %1772, %1773 : vector<8x128xf32>
    %1775 = arith.subf %1770, %1692 : vector<8x128xf32>
    %1776 = arith.mulf %1774, %1775 : vector<8x128xf32>
    %1777 = arith.addf %1692, %1776 : vector<8x128xf32>
    %cst_765 = arith.constant 4.500000e+02 : f32
    %1778 = vector.broadcast %cst_765 : f32 to vector<8x128xf32>
    %1779 = arith.cmpf oge, %1153, %1778 : vector<8x128xf32>
    %1780 = arith.select %1779, %1777, %1702 : vector<8x128xi1>, vector<8x128xf32>
    %cst_766 = arith.constant 2.000000e+02 : f32
    %cst_767 = arith.constant 2.000000e+03 : f32
    %1781 = vector.broadcast %cst_766 : f32 to vector<8x128xf32>
    %1782 = arith.maximumf %1781, %991 : vector<8x128xf32>
    %1783 = vector.broadcast %cst_767 : f32 to vector<8x128xf32>
    %1784 = arith.minimumf %1783, %1782 : vector<8x128xf32>
    %cst_768 = arith.constant 0.000000e+00 : f32
    %1785 = vector.broadcast %cst_768 : f32 to vector<8x128xf32>
    %1786 = arith.mulf %1784, %1785 : vector<8x128xf32>
    %cst_769 = arith.constant 8.000000e+02 : f32
    %1787 = vector.broadcast %cst_769 : f32 to vector<8x128xf32>
    %1788 = arith.addf %1786, %1787 : vector<8x128xf32>
    %cst_770 = arith.constant 2.000000e+02 : f32
    %1789 = vector.broadcast %cst_770 : f32 to vector<8x128xf32>
    %1790 = arith.cmpf oge, %1784, %1789 : vector<8x128xf32>
    %cst_771 = arith.constant 8.000000e+02 : f32
    %1791 = vector.broadcast %cst_771 : f32 to vector<8x128xf32>
    %1792 = arith.select %1790, %1788, %1791 : vector<8x128xi1>, vector<8x128xf32>
    %cst_772 = arith.constant 0.000000e+00 : f32
    %1793 = vector.broadcast %cst_772 : f32 to vector<8x128xf32>
    %1794 = arith.mulf %1784, %1793 : vector<8x128xf32>
    %cst_773 = arith.constant 8.000000e+02 : f32
    %1795 = vector.broadcast %cst_773 : f32 to vector<8x128xf32>
    %1796 = arith.addf %1794, %1795 : vector<8x128xf32>
    %cst_774 = arith.constant 4.000000e+02 : f32
    %1797 = vector.broadcast %cst_774 : f32 to vector<8x128xf32>
    %1798 = arith.cmpf oge, %1784, %1797 : vector<8x128xf32>
    %1799 = arith.select %1798, %1796, %1792 : vector<8x128xi1>, vector<8x128xf32>
    %cst_775 = arith.constant 0.000000e+00 : f32
    %1800 = vector.broadcast %cst_775 : f32 to vector<8x128xf32>
    %1801 = arith.mulf %1784, %1800 : vector<8x128xf32>
    %cst_776 = arith.constant 8.000000e+02 : f32
    %1802 = vector.broadcast %cst_776 : f32 to vector<8x128xf32>
    %1803 = arith.addf %1801, %1802 : vector<8x128xf32>
    %cst_777 = arith.constant 6.000000e+02 : f32
    %1804 = vector.broadcast %cst_777 : f32 to vector<8x128xf32>
    %1805 = arith.cmpf oge, %1784, %1804 : vector<8x128xf32>
    %1806 = arith.select %1805, %1803, %1799 : vector<8x128xi1>, vector<8x128xf32>
    %cst_778 = arith.constant 0.000000e+00 : f32
    %1807 = vector.broadcast %cst_778 : f32 to vector<8x128xf32>
    %1808 = arith.mulf %1784, %1807 : vector<8x128xf32>
    %cst_779 = arith.constant 8.000000e+02 : f32
    %1809 = vector.broadcast %cst_779 : f32 to vector<8x128xf32>
    %1810 = arith.addf %1808, %1809 : vector<8x128xf32>
    %cst_780 = arith.constant 8.000000e+02 : f32
    %1811 = vector.broadcast %cst_780 : f32 to vector<8x128xf32>
    %1812 = arith.cmpf oge, %1784, %1811 : vector<8x128xf32>
    %1813 = arith.select %1812, %1810, %1806 : vector<8x128xi1>, vector<8x128xf32>
    %cst_781 = arith.constant 0.000000e+00 : f32
    %1814 = vector.broadcast %cst_781 : f32 to vector<8x128xf32>
    %1815 = arith.mulf %1784, %1814 : vector<8x128xf32>
    %cst_782 = arith.constant 8.000000e+02 : f32
    %1816 = vector.broadcast %cst_782 : f32 to vector<8x128xf32>
    %1817 = arith.addf %1815, %1816 : vector<8x128xf32>
    %cst_783 = arith.constant 1.000000e+03 : f32
    %1818 = vector.broadcast %cst_783 : f32 to vector<8x128xf32>
    %1819 = arith.cmpf oge, %1784, %1818 : vector<8x128xf32>
    %1820 = arith.select %1819, %1817, %1813 : vector<8x128xi1>, vector<8x128xf32>
    %cst_784 = arith.constant 2.500000e-01 : f32
    %1821 = vector.broadcast %cst_784 : f32 to vector<8x128xf32>
    %1822 = arith.mulf %1784, %1821 : vector<8x128xf32>
    %cst_785 = arith.constant 5.000000e+02 : f32
    %1823 = vector.broadcast %cst_785 : f32 to vector<8x128xf32>
    %1824 = arith.addf %1822, %1823 : vector<8x128xf32>
    %cst_786 = arith.constant 1.200000e+03 : f32
    %1825 = vector.broadcast %cst_786 : f32 to vector<8x128xf32>
    %1826 = arith.cmpf oge, %1784, %1825 : vector<8x128xf32>
    %1827 = arith.select %1826, %1824, %1820 : vector<8x128xi1>, vector<8x128xf32>
    %cst_787 = arith.constant 1.750000e+00 : f32
    %1828 = vector.broadcast %cst_787 : f32 to vector<8x128xf32>
    %1829 = arith.mulf %1784, %1828 : vector<8x128xf32>
    %cst_788 = arith.constant -1.600000e+03 : f32
    %1830 = vector.broadcast %cst_788 : f32 to vector<8x128xf32>
    %1831 = arith.addf %1829, %1830 : vector<8x128xf32>
    %cst_789 = arith.constant 1.400000e+03 : f32
    %1832 = vector.broadcast %cst_789 : f32 to vector<8x128xf32>
    %1833 = arith.cmpf oge, %1784, %1832 : vector<8x128xf32>
    %1834 = arith.select %1833, %1831, %1827 : vector<8x128xi1>, vector<8x128xf32>
    %cst_790 = arith.constant 2.000000e+00 : f32
    %1835 = vector.broadcast %cst_790 : f32 to vector<8x128xf32>
    %1836 = arith.mulf %1784, %1835 : vector<8x128xf32>
    %cst_791 = arith.constant -2.000000e+03 : f32
    %1837 = vector.broadcast %cst_791 : f32 to vector<8x128xf32>
    %1838 = arith.addf %1836, %1837 : vector<8x128xf32>
    %cst_792 = arith.constant 1.600000e+03 : f32
    %1839 = vector.broadcast %cst_792 : f32 to vector<8x128xf32>
    %1840 = arith.cmpf oge, %1784, %1839 : vector<8x128xf32>
    %1841 = arith.select %1840, %1838, %1834 : vector<8x128xi1>, vector<8x128xf32>
    %cst_793 = arith.constant 2.000000e+00 : f32
    %1842 = vector.broadcast %cst_793 : f32 to vector<8x128xf32>
    %1843 = arith.mulf %1784, %1842 : vector<8x128xf32>
    %cst_794 = arith.constant -2.000000e+03 : f32
    %1844 = vector.broadcast %cst_794 : f32 to vector<8x128xf32>
    %1845 = arith.addf %1843, %1844 : vector<8x128xf32>
    %cst_795 = arith.constant 1.800000e+03 : f32
    %1846 = vector.broadcast %cst_795 : f32 to vector<8x128xf32>
    %1847 = arith.cmpf oge, %1784, %1846 : vector<8x128xf32>
    %1848 = arith.select %1847, %1845, %1841 : vector<8x128xi1>, vector<8x128xf32>
    %cst_796 = arith.constant 2.000000e-02 : f32
    %1849 = vector.broadcast %cst_796 : f32 to vector<8x128xf32>
    %1850 = arith.mulf %1153, %1849 : vector<8x128xf32>
    %cst_797 = arith.constant -1.000000e+01 : f32
    %1851 = vector.broadcast %cst_797 : f32 to vector<8x128xf32>
    %1852 = arith.addf %1850, %1851 : vector<8x128xf32>
    %1853 = arith.subf %1848, %1770 : vector<8x128xf32>
    %1854 = arith.mulf %1852, %1853 : vector<8x128xf32>
    %1855 = arith.addf %1770, %1854 : vector<8x128xf32>
    %cst_798 = arith.constant 5.000000e+02 : f32
    %1856 = vector.broadcast %cst_798 : f32 to vector<8x128xf32>
    %1857 = arith.cmpf oge, %1153, %1856 : vector<8x128xf32>
    %1858 = arith.select %1857, %1855, %1780 : vector<8x128xi1>, vector<8x128xf32>
    %cst_799 = arith.constant 1.000000e+01 : f32
    %cst_800 = arith.constant 2.000000e+01 : f32
    %1859 = vector.broadcast %cst_799 : f32 to vector<8x128xf32>
    %1860 = arith.maximumf %1859, %1 : vector<8x128xf32>
    %1861 = vector.broadcast %cst_800 : f32 to vector<8x128xf32>
    %1862 = arith.minimumf %1861, %1860 : vector<8x128xf32>
    %cst_801 = arith.constant 1.000000e+01 : f32
    %cst_802 = arith.constant 2.000000e+01 : f32
    %1863 = vector.broadcast %cst_801 : f32 to vector<8x128xf32>
    %1864 = arith.maximumf %1863, %1862 : vector<8x128xf32>
    %1865 = vector.broadcast %cst_802 : f32 to vector<8x128xf32>
    %1866 = arith.minimumf %1865, %1864 : vector<8x128xf32>
    %cst_803 = arith.constant 4.000000e+01 : f32
    %1867 = vector.broadcast %cst_803 : f32 to vector<8x128xf32>
    %1868 = arith.mulf %1866, %1867 : vector<8x128xf32>
    %cst_804 = arith.constant 4.000000e+02 : f32
    %1869 = vector.broadcast %cst_804 : f32 to vector<8x128xf32>
    %1870 = arith.addf %1868, %1869 : vector<8x128xf32>
    %cst_805 = arith.constant 1.000000e+01 : f32
    %1871 = vector.broadcast %cst_805 : f32 to vector<8x128xf32>
    %1872 = arith.cmpf oge, %1866, %1871 : vector<8x128xf32>
    %cst_806 = arith.constant 8.000000e+02 : f32
    %1873 = vector.broadcast %cst_806 : f32 to vector<8x128xf32>
    %1874 = arith.select %1872, %1870, %1873 : vector<8x128xi1>, vector<8x128xf32>
    %cst_807 = arith.constant 4.000000e+01 : f32
    %1875 = vector.broadcast %cst_807 : f32 to vector<8x128xf32>
    %1876 = arith.mulf %1866, %1875 : vector<8x128xf32>
    %cst_808 = arith.constant 4.000000e+02 : f32
    %1877 = vector.broadcast %cst_808 : f32 to vector<8x128xf32>
    %1878 = arith.addf %1876, %1877 : vector<8x128xf32>
    %cst_809 = arith.constant 1.500000e+01 : f32
    %1879 = vector.broadcast %cst_809 : f32 to vector<8x128xf32>
    %1880 = arith.cmpf oge, %1866, %1879 : vector<8x128xf32>
    %1881 = arith.select %1880, %1878, %1874 : vector<8x128xi1>, vector<8x128xf32>
    %1882 = arith.maximumf %1858, %1881 : vector<8x128xf32>
    %c11 = arith.constant 11 : index
    %c0_810 = arith.constant 0 : index
    %c0_811 = arith.constant 0 : index
    %1883 = vector.load %arg1[%c11, %c0_810, %c0_811] : memref<12x8x128xf32, #tpu.memory_space<vmem>>, vector<1x8x128xf32>
    %1884 = vector.shape_cast %1883 : vector<1x8x128xf32> to vector<8x128xf32>
    %cst_812 = arith.constant 0.000000e+00 : f32
    %1885 = vector.broadcast %cst_812 : f32 to vector<8x128xf32>
    %1886 = arith.cmpf ogt, %1884, %1885 : vector<8x128xf32>
    %c10 = arith.constant 10 : index
    %c0_813 = arith.constant 0 : index
    %c0_814 = arith.constant 0 : index
    %1887 = vector.load %arg1[%c10, %c0_813, %c0_814] : memref<12x8x128xf32, #tpu.memory_space<vmem>>, vector<1x8x128xf32>
    %1888 = vector.shape_cast %1887 : vector<1x8x128xf32> to vector<8x128xf32>
    %cst_815 = arith.constant 0.000000e+00 : f32
    %1889 = vector.broadcast %cst_815 : f32 to vector<8x128xf32>
    %1890 = arith.cmpf ogt, %1888, %1889 : vector<8x128xf32>
    %1891 = arith.andi %1886, %1890 : vector<8x128xi1>
    %c9 = arith.constant 9 : index
    %c0_816 = arith.constant 0 : index
    %c0_817 = arith.constant 0 : index
    %1892 = vector.load %arg1[%c9, %c0_816, %c0_817] : memref<12x8x128xf32, #tpu.memory_space<vmem>>, vector<1x8x128xf32>
    %1893 = vector.shape_cast %1892 : vector<1x8x128xf32> to vector<8x128xf32>
    %cst_818 = arith.constant 2.000000e+00 : f32
    %cst_819 = arith.constant 6.000000e+00 : f32
    %1894 = vector.broadcast %cst_818 : f32 to vector<8x128xf32>
    %1895 = arith.maximumf %1894, %1893 : vector<8x128xf32>
    %1896 = vector.broadcast %cst_819 : f32 to vector<8x128xf32>
    %1897 = arith.minimumf %1896, %1895 : vector<8x128xf32>
    %cst_820 = arith.constant 9.000000e+00 : f32
    %1898 = vector.broadcast %cst_820 : f32 to vector<8x128xf32>
    %1899 = arith.mulf %1897, %1898 : vector<8x128xf32>
    %cst_821 = arith.constant -1.700000e+01 : f32
    %1900 = vector.broadcast %cst_821 : f32 to vector<8x128xf32>
    %1901 = arith.addf %1899, %1900 : vector<8x128xf32>
    %cst_822 = arith.constant 2.000000e+00 : f32
    %1902 = vector.broadcast %cst_822 : f32 to vector<8x128xf32>
    %1903 = arith.cmpf oge, %1897, %1902 : vector<8x128xf32>
    %cst_823 = arith.constant 1.000000e+00 : f32
    %1904 = vector.broadcast %cst_823 : f32 to vector<8x128xf32>
    %1905 = arith.select %1903, %1901, %1904 : vector<8x128xi1>, vector<8x128xf32>
    %cst_824 = arith.constant 2.000000e+01 : f32
    %1906 = vector.broadcast %cst_824 : f32 to vector<8x128xf32>
    %1907 = arith.mulf %1897, %1906 : vector<8x128xf32>
    %cst_825 = arith.constant -5.000000e+01 : f32
    %1908 = vector.broadcast %cst_825 : f32 to vector<8x128xf32>
    %1909 = arith.addf %1907, %1908 : vector<8x128xf32>
    %cst_826 = arith.constant 3.000000e+00 : f32
    %1910 = vector.broadcast %cst_826 : f32 to vector<8x128xf32>
    %1911 = arith.cmpf oge, %1897, %1910 : vector<8x128xf32>
    %1912 = arith.select %1911, %1909, %1905 : vector<8x128xi1>, vector<8x128xf32>
    %cst_827 = arith.constant 4.500000e+02 : f32
    %1913 = vector.broadcast %cst_827 : f32 to vector<8x128xf32>
    %1914 = arith.mulf %1897, %1913 : vector<8x128xf32>
    %cst_828 = arith.constant -2.200000e+03 : f32
    %1915 = vector.broadcast %cst_828 : f32 to vector<8x128xf32>
    %1916 = arith.addf %1914, %1915 : vector<8x128xf32>
    %cst_829 = arith.constant 5.000000e+00 : f32
    %1917 = vector.broadcast %cst_829 : f32 to vector<8x128xf32>
    %1918 = arith.cmpf oge, %1897, %1917 : vector<8x128xf32>
    %1919 = arith.select %1918, %1916, %1912 : vector<8x128xi1>, vector<8x128xf32>
    %cst_830 = arith.constant 2.000000e+02 : f32
    %1920 = vector.broadcast %cst_830 : f32 to vector<8x128xf32>
    %1921 = arith.select %1891, %1919, %1920 : vector<8x128xi1>, vector<8x128xf32>
    %cst_831 = arith.constant 7.800000e+01 : f32
    %1922 = vector.broadcast %cst_831 : f32 to vector<8x128xf32>
    %1923 = arith.mulf %987, %1922 : vector<8x128xf32>
    %cst_832 = arith.constant 2.000000e+02 : f32
    %1924 = vector.broadcast %cst_832 : f32 to vector<8x128xf32>
    %1925 = arith.minimumf %1924, %1923 : vector<8x128xf32>
    %1926 = arith.minimumf %1925, %1921 : vector<8x128xf32>
    %c0_833 = arith.constant 0 : index
    %c0_834 = arith.constant 0 : index
    %c0_835 = arith.constant 0 : index
    %1927 = vector.load %arg1[%c0_833, %c0_834, %c0_835] : memref<12x8x128xf32, #tpu.memory_space<vmem>>, vector<1x8x128xf32>
    %1928 = vector.shape_cast %1927 : vector<1x8x128xf32> to vector<8x128xf32>
    %cst_836 = arith.constant 1.000000e+01 : f32
    %1929 = vector.broadcast %cst_836 : f32 to vector<8x128xf32>
    %1930 = arith.addf %1928, %1929 : vector<8x128xf32>
    %1931 = arith.cmpf ogt, %1930, %1882 : vector<8x128xf32>
    %cst_837 = arith.constant 8.500000e+03 : f32
    %1932 = vector.broadcast %cst_837 : f32 to vector<8x128xf32>
    %1933 = arith.select %1931, %1926, %1932 : vector<8x128xi1>, vector<8x128xf32>
    %cst_838 = arith.constant -2.000000e+02 : f32
    %cst_839 = arith.constant -8.500000e+03 : f32
    %1934 = vector.broadcast %cst_838 : f32 to vector<8x128xf32>
    %1935 = vector.broadcast %cst_839 : f32 to vector<8x128xf32>
    %1936 = arith.select %1931, %1934, %1935 : vector<8x128xi1>, vector<8x128xf32>
    %1937 = arith.maximumf %1936, %1149 : vector<8x128xf32>
    %1938 = arith.minimumf %1933, %1937 : vector<8x128xf32>
    %1939 = arith.addf %1928, %1938 : vector<8x128xf32>
    %cst_840 = arith.constant 1.200000e+02 : f32
    %1940 = vector.broadcast %cst_840 : f32 to vector<8x128xf32>
    %1941 = arith.subf %1882, %1940 : vector<8x128xf32>
    %1942 = arith.cmpf olt, %1939, %1941 : vector<8x128xf32>
    %cst_841 = arith.constant 8.000000e+02 : f32
    %1943 = vector.broadcast %cst_841 : f32 to vector<8x128xf32>
    %1944 = arith.select %1942, %1943, %1882 : vector<8x128xi1>, vector<8x128xf32>
    %cst_842 = arith.constant 8.000000e+03 : f32
    %1945 = vector.broadcast %cst_842 : f32 to vector<8x128xf32>
    %1946 = arith.minimumf %1939, %1945 : vector<8x128xf32>
    %1947 = arith.maximumf %1946, %1944 : vector<8x128xf32>
    %c0_843 = arith.constant 0 : index
    %c0_844 = arith.constant 0 : index
    %1948 = vector.load %arg2[%c0_843, %c0_844] : memref<8x128xf32, #tpu.memory_space<vmem>>, vector<8x128xf32>
    tpu.vector_store %arg2[%c0_843, %c0_844], %1947 {strides = array<i32>} : memref<8x128xf32, #tpu.memory_space<vmem>>, vector<8x128xf32>,
    return
  }
  func.func @transform_0(%arg0: i32) -> (i32, i32, i32) {
    %c0_i32 = arith.constant 0 : i32
    %c0_i32_0 = arith.constant 0 : i32
    %c0_i32_1 = arith.constant 0 : i32
    return %c0_i32, %arg0, %c0_i32_0 : i32, i32, i32
  }
  func.func @transform_1(%arg0: i32) -> (i32, i32) {
    %c0_i32 = arith.constant 0 : i32
    %c0_i32_0 = arith.constant 0 : i32
    return %arg0, %c0_i32 : i32, i32
  }
}

</mosaic_0001>

<llo_original>
// kernel: tpu_custom_call.1
$region0: #{tpu_custom_call.1}
  #allocation0 [shape = 'u32[]', space=smem, size = 0x4, offset = 0x4, fixed_abs, tag = 'smem constant byte address 0x4 - core index']
  #allocation1 [shape = 'u32[144,128]{1,0:T(1,128)}', space=vmem, size = 0x12000, scoped, tag = 'internal scratch']
  %s0 = inlined_call_operand.hbm [shape: f32[12,8,128], index: 0, kind: input, shape index: {}]
  %s1 = inlined_call_operand.hbm [shape: f32[8,128], index: 1, kind: output, shape index: {}]
  %s2 = sld [smem:[#allocation0]]
  $region18: #{tpu_custom_call.1} parent=0
    _
  %s4 = ssub.s32 1, %s2
  %s5 = scalar_select 0, %s4, %s2
  $region1: #{tpu_custom_call.1} parent=0
    #allocation2 [shape = 'u8[49152]{0}', space=vmem, size = 0xc000, scoped, tag = 'input window, operand 0, single buffered']
    #allocation3 [shape = 's32[1]{0}', space=sflag, size = 0x4, scoped, tag = 'scoped memory for tpu_custom_call.1']
    #allocation4 [shape = 's32[1]{0}', space=sflag, size = 0x4, scoped, tag = 'scoped memory for tpu_custom_call.1']
    #allocation5 [shape = 'u8[4096]{0}', space=vmem, size = 0x1000, scoped, tag = 'output window, operand 0, single buffered']
    %6 = vsyncpa [#allocation3], 0
    %7 = vsyncpa [#allocation4], 0
    // Predicated region
    $region2: #{tpu_custom_call.1} parent=1 // pred_check
      _
    $region3: #{tpu_custom_call.1} parent=1 // pred_check_branch
      %9 = sbr.rel (0) target = $region5
    $region4: #{tpu_custom_call.1} parent=1 // pred_region
      %s11 = ssub.s32 1536, 1536
      %12 = vsyncadd [#allocation3], %s11
      %s13 = sshll.u32 [#allocation2], 4
      %s14 = int_to_ptr.vmem [resolvable:$true] %s13
      %19 = dma.hbm_to_vmem [thread:$0]  %s0, 1536, %s14, [#allocation3], 128, 128, 8
    $region5: #{tpu_custom_call.1} parent=1 // pred_fallthru
      _
    // Predicated region
    $region6: #{tpu_custom_call.1} parent=1 // pred_check
      _
    $region7: #{tpu_custom_call.1} parent=1 // pred_check_branch
      %21 = sbr.rel (0) target = $region9
    $region8: #{tpu_custom_call.1} parent=1 // pred_region
      %22 = dma.done [#allocation3], 1536
    $region9: #{tpu_custom_call.1} parent=1 // pred_fallthru
      _
    %s23 = scalar_lea.vmem [#allocation2], 8
    %v24 = vld [vmem:[%s23] sm:$0xff]
    %v25 = vmax.f32 %v24, -20.0
    %v26 = vmin.f32 %v25, 45.0
    %v27 = vmul.f32 %v26, -0.1
    %v28 = vadd.f32 %v27, 1.0
    %vm29 = vcmp.ge.f32.partialorder %v26, -20.0
    %v30 = vsel %vm29, %v28, 3.0
    %v31 = vmul.f32 %v26, -0.112
    %v32 = vadd.f32 %v31, 0.88
    %vm33 = vcmp.ge.f32.partialorder %v26, -10.0
    %v34 = vsel %vm33, %v32, %v30
    %v35 = vmul.f32 %v26, -0.05
    %v36 = vadd.f32 %v35, 0.88
    %vm37 = vcmp.ge.f32.partialorder %v26, 0.0
    %v38 = vsel %vm37, %v36, %v34
    %v39 = vmul.f32 %v26, 0.021333333
    %v40 = vadd.f32 %v39, 0.16666667
    %vm41 = vcmp.ge.f32.partialorder %v26, 10.0
    %v42 = vsel %vm41, %v40, %v38
    %v43 = vmul.f32 %v26, 0.06
    %v44 = vadd.f32 %v43, -0.8
    %vm45 = vcmp.ge.f32.partialorder %v26, 25.0
    %v46 = vsel %vm45, %v44, %v42
    %v47 = vmul.f32 %v26, 0.062
    %v48 = vadd.f32 %v47, -0.86
    %vm49 = vcmp.ge.f32.partialorder %v26, 30.0
    %v50 = vsel %vm49, %v48, %v46
    %v51 = vmul.f32 %v26, 0.238
    %v52 = vadd.f32 %v51, -7.02
    %vm53 = vcmp.ge.f32.partialorder %v26, 35.0
    %v54 = vsel %vm53, %v52, %v50
    %v55 = vmul.f32 %v26, 0.1
    %v56 = vadd.f32 %v55, -1.5
    %vm57 = vcmp.ge.f32.partialorder %v26, 40.0
    %v58 = vsel %vm57, %v56, %v54
    %s59 = scalar_lea.vmem [#allocation2], 16
    %v60 = vld [vmem:[%s59] sm:$0xff]
    %s61 = scalar_lea.vmem [#allocation2], 24
    %v62 = vld [vmem:[%s61] sm:$0xff]
    %v63 = vmin.f32 %v60, %v62
    %v64 = vmax.f32 %v63, 18.0
    %v65 = vmin.f32 %v64, 32.0
    %v66 = vmax.f32 %v24, -30.0
    %v67 = vmin.f32 %v66, 50.0
    %v68 = vmul.f32 %v67, 0.0
    %v69 = vadd.f32 %v68, 20.0
    %vm70 = vcmp.ge.f32.partialorder %v67, -30.0
    %v71 = vsel %vm70, %v69, 20.0
    %v72 = vmul.f32 %v67, -0.05
    %v73 = vadd.f32 %v72, 19.0
    %vm74 = vcmp.ge.f32.partialorder %v67, -20.0
    %v75 = vsel %vm74, %v73, %v71
    %v76 = vadd.f32 %v68, 19.5
    %vm77 = vcmp.ge.f32.partialorder %v67, -10.0
    %v78 = vsel %vm77, %v76, %v75
    %vm79 = vcmp.ge.f32.partialorder %v67, 0.0
    %v80 = vsel %vm79, %v76, %v78
    %v81 = vmul.f32 %v67, -0.1
    %v82 = vadd.f32 %v81, 20.0
    %vm83 = vcmp.ge.f32.partialorder %v67, 5.0
    %v84 = vsel %vm83, %v82, %v80
    %v85 = vadd.f32 %v68, 19.0
    %vm86 = vcmp.ge.f32.partialorder %v67, 10.0
    %v87 = vsel %vm86, %v85, %v84
    %vm88 = vcmp.ge.f32.partialorder %v67, 15.0
    %v89 = vsel %vm88, %v85, %v87
    %v90 = vadd.f32 %v81, 21.0
    %vm91 = vcmp.ge.f32.partialorder %v67, 20.0
    %v92 = vsel %vm91, %v90, %v89
    %v93 = vadd.f32 %v68, 18.5
    %vm94 = vcmp.ge.f32.partialorder %v67, 25.0
    %v95 = vsel %vm94, %v93, %v92
    %v96 = vadd.f32 %v81, 21.5
    %vm97 = vcmp.ge.f32.partialorder %v67, 30.0
    %v98 = vsel %vm97, %v96, %v95
    %v99 = vadd.f32 %v68, 18.0
    %vm100 = vcmp.ge.f32.partialorder %v67, 35.0
    %v101 = vsel %vm100, %v99, %v98
    %vm102 = vcmp.ge.f32.partialorder %v67, 40.0
    %v103 = vsel %vm102, %v99, %v101
    %vm104 = vcmp.ge.f32.partialorder %v67, 45.0
    %v105 = vsel %vm104, %v99, %v103
    %v106 = vmul.f32 %v65, 0.5
    %v107 = vadd.f32 %v106, -9.0
    %v108 = vsub.f32 %v105, 17.0
    %v109 = vmul.f32 %v107, %v108
    %v110 = vadd.f32 %v109, 17.0
    %vm111 = vcmp.ge.f32.partialorder %v65, 18.0
    %v112 = vsel %vm111, %v110, 17.0
    %v113 = vadd.f32 %v68, 22.0
    %v114 = vsel %vm70, %v113, 22.0
    %v115 = vsel %vm74, %v113, %v114
    %v116 = vmul.f32 %v67, 0.05
    %v117 = vadd.f32 %v116, 22.5
    %v118 = vsel %vm77, %v117, %v115
    %v119 = vadd.f32 %v68, 22.5
    %v120 = vsel %vm79, %v119, %v118
    %v121 = vsel %vm83, %v119, %v120
    %v122 = vadd.f32 %v81, 23.5
    %v123 = vsel %vm86, %v122, %v121
    %v124 = vsel %vm88, %v113, %v123
    %v125 = vmul.f32 %v67, -0.2
    %v126 = vadd.f32 %v125, 26.0
    %v127 = vsel %vm91, %v126, %v124
    %v128 = vadd.f32 %v68, 21.0
    %v129 = vsel %vm94, %v128, %v127
    %v130 = vsel %vm97, %v128, %v129
    %v131 = vsel %vm100, %v128, %v130
    %v132 = vadd.f32 %v81, 25.0
    %v133 = vsel %vm102, %v132, %v131
    %v134 = vsel %vm104, %v132, %v133
    %v135 = vadd.f32 %v106, -10.0
    %v136 = vsub.f32 %v134, %v105
    %v137 = vmul.f32 %v135, %v136
    %v138 = vadd.f32 %v105, %v137
    %vm139 = vcmp.ge.f32.partialorder %v65, 20.0
    %v140 = vsel %vm139, %v138, %v112
    %v141 = vadd.f32 %v116, 25.5
    %v142 = vsel %vm70, %v141, 24.0
    %v143 = vmul.f32 %v67, 0.1
    %v144 = vadd.f32 %v143, 26.5
    %v145 = vsel %vm74, %v144, %v142
    %v146 = vadd.f32 %v68, 25.5
    %v147 = vsel %vm77, %v146, %v145
    %v148 = vadd.f32 %v143, 25.5
    %v149 = vsel %vm79, %v148, %v147
    %v150 = vadd.f32 %v68, 26.0
    %v151 = vsel %vm83, %v150, %v149
    %v152 = vadd.f32 %v81, 27.0
    %v153 = vsel %vm86, %v152, %v151
    %v154 = vsel %vm88, %v152, %v153
    %v155 = vsel %vm91, %v152, %v154
    %v156 = vsel %vm94, %v152, %v155
    %v157 = vsel %vm97, %v152, %v156
    %v158 = vsel %vm100, %v152, %v157
    %v159 = vadd.f32 %v68, 23.0
    %v160 = vsel %vm102, %v159, %v158
    %v161 = vsel %vm104, %v159, %v160
    %v162 = vadd.f32 %v106, -11.0
    %v163 = vsub.f32 %v161, %v134
    %v164 = vmul.f32 %v162, %v163
    %v165 = vadd.f32 %v134, %v164
    %vm166 = vcmp.ge.f32.partialorder %v65, 22.0
    %v167 = vsel %vm166, %v165, %v140
    %v168 = vadd.f32 %v72, 25.5
    %v169 = vsel %vm70, %v168, 27.0
    %v170 = vadd.f32 %v116, 27.5
    %v171 = vsel %vm74, %v170, %v169
    %v172 = vsel %vm77, %v170, %v171
    %v173 = vadd.f32 %v143, 27.5
    %v174 = vsel %vm79, %v173, %v172
    %v175 = vadd.f32 %v68, 28.0
    %v176 = vsel %vm83, %v175, %v174
    %v177 = vadd.f32 %v81, 29.0
    %v178 = vsel %vm86, %v177, %v176
    %v179 = vsel %vm88, %v177, %v178
    %v180 = vsel %vm91, %v177, %v179
    %v181 = vsel %vm94, %v177, %v180
    %v182 = vsel %vm97, %v177, %v181
    %v183 = vadd.f32 %v143, 22.0
    %v184 = vsel %vm100, %v183, %v182
    %v185 = vsel %vm102, %v150, %v184
    %v186 = vsel %vm104, %v150, %v185
    %v187 = vadd.f32 %v106, -12.0
    %v188 = vsub.f32 %v186, %v161
    %v189 = vmul.f32 %v187, %v188
    %v190 = vadd.f32 %v161, %v189
    %vm191 = vcmp.ge.f32.partialorder %v65, 24.0
    %v192 = vsel %vm191, %v190, %v167
    %v193 = vadd.f32 %v72, 27.5
    %v194 = vsel %vm70, %v193, 29.0
    %v195 = vadd.f32 %v68, 28.5
    %v196 = vsel %vm74, %v195, %v194
    %v197 = vadd.f32 %v143, 29.5
    %v198 = vsel %vm77, %v197, %v196
    %v199 = vsel %vm79, %v197, %v198
    %v200 = vadd.f32 %v68, 30.0
    %v201 = vsel %vm83, %v200, %v199
    %v202 = vadd.f32 %v81, 31.0
    %v203 = vsel %vm86, %v202, %v201
    %v204 = vsel %vm88, %v202, %v203
    %v205 = vadd.f32 %v68, 29.0
    %v206 = vsel %vm91, %v205, %v204
    %v207 = vsel %vm94, %v205, %v206
    %v208 = vadd.f32 %v125, 35.0
    %v209 = vsel %vm97, %v208, %v207
    %v210 = vsel %vm100, %v175, %v209
    %v211 = vmul.f32 %v67, 0.2
    %v212 = vadd.f32 %v211, 20.0
    %v213 = vsel %vm102, %v212, %v210
    %v214 = vsel %vm104, %v205, %v213
    %v215 = vadd.f32 %v106, -13.0
    %v216 = vsub.f32 %v214, %v186
    %v217 = vmul.f32 %v215, %v216
    %v218 = vadd.f32 %v186, %v217
    %vm219 = vcmp.ge.f32.partialorder %v65, 26.0
    %v220 = vsel %vm219, %v218, %v192
    %v221 = vadd.f32 %v72, 29.5
    %v222 = vsel %vm70, %v221, 31.0
    %v223 = vadd.f32 %v68, 30.5
    %v224 = vsel %vm74, %v223, %v222
    %v225 = vadd.f32 %v143, 31.5
    %v226 = vsel %vm77, %v225, %v224
    %v227 = vsel %vm79, %v225, %v226
    %v228 = vadd.f32 %v68, 32.0
    %v229 = vsel %vm83, %v228, %v227
    %v230 = vsel %vm86, %v228, %v229
    %v231 = vsel %vm88, %v208, %v230
    %v232 = vadd.f32 %v68, 31.0
    %v233 = vsel %vm91, %v232, %v231
    %v234 = vsel %vm94, %v232, %v233
    %v235 = vsel %vm97, %v232, %v234
    %v236 = vsel %vm100, %v232, %v235
    %v237 = vsel %vm102, %v232, %v236
    %v238 = vsel %vm104, %v232, %v237
    %v239 = vadd.f32 %v106, -14.0
    %v240 = vsub.f32 %v238, %v214
    %v241 = vmul.f32 %v239, %v240
    %v242 = vadd.f32 %v214, %v241
    %vm243 = vcmp.ge.f32.partialorder %v65, 28.0
    %v244 = vsel %vm243, %v242, %v220
    %v245 = vsel %vm70, %v228, 32.0
    %v246 = vsel %vm74, %v228, %v245
    %v247 = vadd.f32 %v143, 33.0
    %v248 = vsel %vm77, %v247, %v246
    %v249 = vadd.f32 %v68, 33.0
    %v250 = vsel %vm79, %v249, %v248
    %v251 = vsel %vm83, %v249, %v250
    %v252 = vsel %vm86, %v249, %v251
    %v253 = vsel %vm88, %v249, %v252
    %v254 = vsel %vm91, %v249, %v253
    %v255 = vsel %vm94, %v249, %v254
    %v256 = vsel %vm97, %v249, %v255
    %v257 = vsel %vm100, %v249, %v256
    %v258 = vadd.f32 %v125, 41.0
    %v259 = vsel %vm102, %v258, %v257
    %v260 = vsel %vm104, %v228, %v259
    %v261 = vmul.f32 %v65, 0.6666667
    %v262 = vadd.f32 %v261, -20.0
    %v263 = vsub.f32 %v260, %v238
    %v264 = vmul.f32 %v262, %v263
    %v265 = vadd.f32 %v238, %v264
    %vm266 = vcmp.ge.f32.partialorder %v65, 30.0
    %v267 = vsel %vm266, %v265, %v244
    %v268 = vmul.f32 %v67, 0.4
    %v269 = vadd.f32 %v268, 40.0
    %v270 = vsel %vm74, %v269, %v245
    %v271 = vadd.f32 %v68, 36.0
    %v272 = vsel %vm77, %v271, %v270
    %v273 = vsel %vm79, %v271, %v272
    %v274 = vsel %vm83, %v271, %v273
    %v275 = vsel %vm86, %v271, %v274
    %v276 = vsel %vm88, %v271, %v275
    %v277 = vsel %vm91, %v271, %v276
    %v278 = vsel %vm94, %v271, %v277
    %v279 = vsel %vm97, %v271, %v278
    %v280 = vsel %vm100, %v271, %v279
    %v281 = vsel %vm102, %v271, %v280
    %v282 = vsel %vm104, %v271, %v281
    %v283 = vmul.f32 %v65, 2.0
    %v284 = vadd.f32 %v283, -63.0
    %v285 = vsub.f32 %v282, %v260
    %v286 = vmul.f32 %v284, %v285
    %v287 = vadd.f32 %v260, %v286
    %vm288 = vcmp.ge.f32.partialorder %v65, 31.5
    %v289 = vsel %vm288, %v287, %v267
    %s290 = scalar_lea.vmem [#allocation2], 64
    %v291 = vld [vmem:[%s290] sm:$0xff]
    %v292 = vsub.f32 %v289, %v291
    %v293 = vmax.f32 %v292, -20.0
    %v294 = vmin.f32 %v293, 20.0
    %v295 = vmul.f32 %v294, -0.2
    %v296 = vadd.f32 %v295, -1.0
    %vm297 = vcmp.ge.f32.partialorder %v294, -20.0
    %v298 = vsel %vm297, %v296, 3.0
    %vm299 = vcmp.ge.f32.partialorder %v294, -15.0
    %v300 = vsel %vm299, %v296, %v298
    %v301 = vmul.f32 %v294, -0.1
    %v302 = vadd.f32 %v301, 0.0
    %vm303 = vcmp.ge.f32.partialorder %v294, -10.0
    %v304 = vsel %vm303, %v302, %v300
    %v305 = vmul.f32 %v294, -0.02
    %v306 = vadd.f32 %v305, 0.4
    %vm307 = vcmp.ge.f32.partialorder %v294, -5.0
    %v308 = vsel %vm307, %v306, %v304
    %v309 = vmul.f32 %v294, 0.02
    %v310 = vadd.f32 %v309, 0.4
    %vm311 = vcmp.ge.f32.partialorder %v294, 0.0
    %v312 = vsel %vm311, %v310, %v308
    %v313 = vmul.f32 %v294, 0.2
    %v314 = vadd.f32 %v313, -0.5
    %vm315 = vcmp.ge.f32.partialorder %v294, 5.0
    %v316 = vsel %vm315, %v314, %v312
    %v317 = vmul.f32 %v294, 0.3
    %v318 = vadd.f32 %v317, -1.5
    %vm319 = vcmp.ge.f32.partialorder %v294, 10.0
    %v320 = vsel %vm319, %v318, %v316
    %v321 = vmul.f32 %v294, 0.6
    %v322 = vadd.f32 %v321, -6.0
    %vm323 = vcmp.ge.f32.partialorder %v294, 15.0
    %v324 = vsel %vm323, %v322, %v320
    %v325 = vmin.f32 %v58, %v324
    %s326 = scalar_lea.vmem [#allocation2], 32
    %v327 = vld [vmem:[%s326] sm:$0xff]
    %s328 = scalar_lea.vmem [#allocation2], 40
    %v329 = vld [vmem:[%s328] sm:$0xff]
    %s330 = scalar_lea.vmem [#allocation2], 56
    %v331 = vld [vmem:[%s330] sm:$0xff]
    %v332 = vsub.f32 %v331, %v329
    %v333 = vmul.f32 %v332, 0.0244
    %s334 = scalar_lea.vmem [#allocation2], 48
    %v335 = vld [vmem:[%s334] sm:$0xff]
    %v336 = vsub.f32 %v327, %v335
    %v337 = vmul.f32 %v336, 0.0996
    %v338 = vmax.f32 %v333, -10.0
    %v339 = vmin.f32 %v338, 10.0
    %v340 = vmul.f32 %v339, -0.02109376
    %v341 = vadd.f32 %v340, 0.2890624
    %vm342 = vcmp.ge.f32.partialorder %v339, -10.0
    %v343 = vsel %vm342, %v341, 0.5
    %v344 = vmul.f32 %v339, 0.0
    %v345 = vadd.f32 %v344, 0.3417968
    %vm346 = vcmp.ge.f32.partialorder %v339, -2.5
    %v347 = vsel %vm346, %v345, %v343
    %vm348 = vcmp.ge.f32.partialorder %v339, -1.0
    %v349 = vsel %vm348, %v345, %v347
    %vm350 = vcmp.ge.f32.partialorder %v339, 1.0
    %v351 = vsel %vm350, %v345, %v349
    %v352 = vmul.f32 %v339, 0.02109376
    %v353 = vadd.f32 %v352, 0.2890624
    %vm354 = vcmp.ge.f32.partialorder %v339, 2.5
    %v355 = vsel %vm354, %v353, %v351
    %v356 = vmul.f32 %v355, %v325
    %v357 = vmax.f32 %v337, -10.0
    %v358 = vmin.f32 %v357, 10.0
    %v359 = vmul.f32 %v358, 0.0
    %v360 = vadd.f32 %v359, 0.49
    %vm361 = vcmp.ge.f32.partialorder %v358, -10.0
    %v362 = vsel %vm361, %v360, 0.49
    %v363 = vmul.f32 %v358, -0.29333332
    %v364 = vadd.f32 %v363, -0.24333334
    %vm365 = vcmp.ge.f32.partialorder %v358, -2.5
    %v366 = vsel %vm365, %v364, %v362
    %v367 = vadd.f32 %v359, 0.05
    %vm368 = vcmp.ge.f32.partialorder %v358, -1.0
    %v369 = vsel %vm368, %v367, %v366
    %v370 = vmul.f32 %v358, 0.29333332
    %v371 = vadd.f32 %v370, -0.24333334
    %vm372 = vcmp.ge.f32.partialorder %v358, 1.0
    %v373 = vsel %vm372, %v371, %v369
    %vm374 = vcmp.ge.f32.partialorder %v358, 2.5
    %v375 = vsel %vm374, %v360, %v373
    %v376 = vmul.f32 %v375, %v325
    %v377 = vmul.f32 %v358, -0.0026666666
    %v378 = vadd.f32 %v377, 0.123333335
    %v379 = vsel %vm361, %v378, 0.15
    %v380 = vmul.f32 %v358, -0.006666667
    %v381 = vadd.f32 %v380, 0.11333334
    %v382 = vsel %vm365, %v381, %v379
    %v383 = vmul.f32 %v358, -0.03
    %v384 = vadd.f32 %v383, 0.09
    %v385 = vsel %vm368, %v384, %v382
    %v386 = vadd.f32 %v359, 0.06
    %v387 = vsel %vm372, %v386, %v385
    %v388 = vmul.f32 %v358, 0.004
    %v389 = vadd.f32 %v388, 0.05
    %v390 = vsel %vm374, %v389, %v387
    %v391 = vmul.f32 %v390, %v325
    %v392 = vmul.f32 %v325, 0.1503906
    %v393 = vand.u32 2147483647, %v333
    %vm394 = vcmp.lt.f32.partialorder %v393, 0.39063
    %v395 = vmul.f32 %v333, 0.25
    %v396 = vsel %vm394, 0.0, %v395
    %v397 = vmul.f32 %v392, %v396
    %v398 = vmul.f32 %v356, %v333
    %v399 = vadd.f32 %v397, %v398
    %vm400 = vcmp.lt.f32.partialorder %v393, 0.59375
    %v401 = vmul.f32 %v337, 0.25
    %v402 = vsel %vm400, 0.0, %v401
    %v403 = vmul.f32 %v391, %v402
    %v404 = vmul.f32 %v376, %v337
    %v405 = vadd.f32 %v403, %v404
    %v406 = vmin.f32 %v399, %v405
    %v407 = vmul.f32 %v406, 85.0
    %v408 = vmax.f32 %v327, 100.0
    %v409 = vmin.f32 %v408, 550.0
    %v410 = vmax.f32 %v329, 200.0
    %v411 = vmin.f32 %v410, 2000.0
    %v412 = vmul.f32 %v411, 0.0
    %v413 = vadd.f32 %v412, 1600.0
    %vm414 = vcmp.ge.f32.partialorder %v411, 200.0
    %v415 = vsel %vm414, %v413, 1600.0
    %vm416 = vcmp.ge.f32.partialorder %v411, 400.0
    %v417 = vsel %vm416, %v413, %v415
    %vm418 = vcmp.ge.f32.partialorder %v411, 600.0
    %v419 = vsel %vm418, %v413, %v417
    %vm420 = vcmp.ge.f32.partialorder %v411, 800.0
    %v421 = vsel %vm420, %v413, %v419
    %v422 = vmul.f32 %v411, 0.5
    %v423 = vadd.f32 %v422, 1100.0
    %vm424 = vcmp.ge.f32.partialorder %v411, 1000.0
    %v425 = vsel %vm424, %v423, %v421
    %vm426 = vcmp.ge.f32.partialorder %v411, 1200.0
    %v427 = vsel %vm426, %v423, %v425
    %vm428 = vcmp.ge.f32.partialorder %v411, 1400.0
    %v429 = vsel %vm428, %v423, %v427
    %vm430 = vcmp.ge.f32.partialorder %v411, 1600.0
    %v431 = vsel %vm430, %v423, %v429
    %v432 = vadd.f32 %v412, 2000.0
    %vm433 = vcmp.ge.f32.partialorder %v411, 1800.0
    %v434 = vsel %vm433, %v432, %v431
    %v435 = vmul.f32 %v409, 0.02
    %v436 = vadd.f32 %v435, -2.0
    %v437 = vsub.f32 %v434, 2000.0
    %v438 = vmul.f32 %v436, %v437
    %v439 = vadd.f32 %v438, 2000.0
    %vm440 = vcmp.ge.f32.partialorder %v409, 100.0
    %v441 = vsel %vm440, %v439, 2000.0
    %v442 = vadd.f32 %v412, 1200.0
    %v443 = vsel %vm414, %v442, 1200.0
    %v444 = vsel %vm416, %v442, %v443
    %v445 = vsel %vm418, %v442, %v444
    %v446 = vsel %vm420, %v442, %v445
    %v447 = vsel %vm424, %v442, %v446
    %v448 = vsel %vm426, %v442, %v447
    %v449 = vsel %vm428, %v442, %v448
    %v450 = vmul.f32 %v411, 2.0
    %v451 = vadd.f32 %v450, -2000.0
    %v452 = vsel %vm430, %v451, %v449
    %v453 = vsel %vm433, %v451, %v452
    %v454 = vadd.f32 %v435, -3.0
    %v455 = vsub.f32 %v453, %v434
    %v456 = vmul.f32 %v454, %v455
    %v457 = vadd.f32 %v434, %v456
    %vm458 = vcmp.ge.f32.partialorder %v409, 150.0
    %v459 = vsel %vm458, %v457, %v441
    %v460 = vadd.f32 %v412, 900.0
    %v461 = vsel %vm414, %v460, 900.0
    %v462 = vmul.f32 %v411, 0.25
    %v463 = vadd.f32 %v462, 800.0
    %v464 = vsel %vm416, %v463, %v461
    %v465 = vsel %vm418, %v463, %v464
    %v466 = vsel %vm420, %v463, %v465
    %v467 = vsel %vm424, %v463, %v466
    %v468 = vsel %vm426, %v463, %v467
    %v469 = vsel %vm428, %v463, %v468
    %v470 = vsel %vm430, %v451, %v469
    %v471 = vsel %vm433, %v451, %v470
    %v472 = vadd.f32 %v435, -4.0
    %v473 = vsub.f32 %v471, %v453
    %v474 = vmul.f32 %v472, %v473
    %v475 = vadd.f32 %v453, %v474
    %vm476 = vcmp.ge.f32.partialorder %v409, 200.0
    %v477 = vsel %vm476, %v475, %v459
    %v478 = vadd.f32 %v412, 800.0
    %v479 = vsel %vm414, %v478, 800.0
    %v480 = vsel %vm416, %v478, %v479
    %v481 = vsel %vm418, %v478, %v480
    %v482 = vadd.f32 %v422, 400.0
    %v483 = vsel %vm420, %v482, %v481
    %v484 = vsel %vm424, %v482, %v483
    %v485 = vsel %vm426, %v482, %v484
    %v486 = vsel %vm428, %v482, %v485
    %v487 = vsel %vm430, %v451, %v486
    %v488 = vsel %vm433, %v451, %v487
    %v489 = vadd.f32 %v435, -5.0
    %v490 = vsub.f32 %v488, %v471
    %v491 = vmul.f32 %v489, %v490
    %v492 = vadd.f32 %v471, %v491
    %vm493 = vcmp.ge.f32.partialorder %v409, 250.0
    %v494 = vsel %vm493, %v492, %v477
    %v495 = vsel %vm420, %v478, %v481
    %v496 = vadd.f32 %v422, 300.0
    %v497 = vsel %vm424, %v496, %v495
    %v498 = vmul.f32 %v411, 0.75
    %v499 = vadd.f32 %v498, 0.0
    %v500 = vsel %vm426, %v499, %v497
    %v501 = vsel %vm428, %v499, %v500
    %v502 = vsel %vm430, %v451, %v501
    %v503 = vsel %vm433, %v451, %v502
    %v504 = vadd.f32 %v435, -6.0
    %v505 = vsub.f32 %v503, %v488
    %v506 = vmul.f32 %v504, %v505
    %v507 = vadd.f32 %v488, %v506
    %vm508 = vcmp.ge.f32.partialorder %v409, 300.0
    %v509 = vsel %vm508, %v507, %v494
    %v510 = vsel %vm424, %v478, %v495
    %v511 = vadd.f32 %v411, -400.0
    %v512 = vsel %vm426, %v511, %v510
    %v513 = vsel %vm428, %v511, %v512
    %v514 = vsel %vm430, %v451, %v513
    %v515 = vsel %vm433, %v451, %v514
    %v516 = vadd.f32 %v435, -7.0
    %v517 = vsub.f32 %v515, %v503
    %v518 = vmul.f32 %v516, %v517
    %v519 = vadd.f32 %v503, %v518
    %vm520 = vcmp.ge.f32.partialorder %v409, 350.0
    %v521 = vsel %vm520, %v519, %v509
    %v522 = vadd.f32 %v498, -100.0
    %v523 = vsel %vm426, %v522, %v510
    %v524 = vmul.f32 %v411, 1.25
    %v525 = vadd.f32 %v524, -800.0
    %v526 = vsel %vm428, %v525, %v523
    %v527 = vsel %vm430, %v451, %v526
    %v528 = vsel %vm433, %v451, %v527
    %v529 = vadd.f32 %v435, -8.0
    %v530 = vsub.f32 %v528, %v515
    %v531 = vmul.f32 %v529, %v530
    %v532 = vadd.f32 %v515, %v531
    %vm533 = vcmp.ge.f32.partialorder %v409, 400.0
    %v534 = vsel %vm533, %v532, %v521
    %v535 = vadd.f32 %v422, 200.0
    %v536 = vsel %vm426, %v535, %v510
    %v537 = vmul.f32 %v411, 1.5
    %v538 = vadd.f32 %v537, -1200.0
    %v539 = vsel %vm428, %v538, %v536
    %v540 = vsel %vm430, %v451, %v539
    %v541 = vsel %vm433, %v451, %v540
    %v542 = vadd.f32 %v435, -9.0
    %v543 = vsub.f32 %v541, %v528
    %v544 = vmul.f32 %v542, %v543
    %v545 = vadd.f32 %v528, %v544
    %vm546 = vcmp.ge.f32.partialorder %v409, 450.0
    %v547 = vsel %vm546, %v545, %v534
    %v548 = vadd.f32 %v462, 500.0
    %v549 = vsel %vm426, %v548, %v510
    %v550 = vmul.f32 %v411, 1.75
    %v551 = vadd.f32 %v550, -1600.0
    %v552 = vsel %vm428, %v551, %v549
    %v553 = vsel %vm430, %v451, %v552
    %v554 = vsel %vm433, %v451, %v553
    %v555 = vadd.f32 %v435, -10.0
    %v556 = vsub.f32 %v554, %v541
    %v557 = vmul.f32 %v555, %v556
    %v558 = vadd.f32 %v541, %v557
    %vm559 = vcmp.ge.f32.partialorder %v409, 500.0
    %v560 = vsel %vm559, %v558, %v547
    %v561 = vmax.f32 %v24, 10.0
    %v562 = vmin.f32 %v561, 20.0
    %v563 = vmax.f32 %v562, 10.0
    %v564 = vmin.f32 %v563, 20.0
    %v565 = vmul.f32 %v564, 40.0
    %v566 = vadd.f32 %v565, 400.0
    %vm567 = vcmp.ge.f32.partialorder %v564, 10.0
    %v568 = vsel %vm567, %v566, 800.0
    %vm569 = vcmp.ge.f32.partialorder %v564, 15.0
    %v570 = vsel %vm569, %v566, %v568
    %v571 = vmax.f32 %v560, %v570
    %s572 = scalar_lea.vmem [#allocation2], 88
    %v573 = vld [vmem:[%s572] sm:$0xff]
    %vm574 = vcmp.gt.f32.partialorder %v573, 0.0
    %s575 = scalar_lea.vmem [#allocation2], 80
    %v576 = vld [vmem:[%s575] sm:$0xff]
    %vm577 = vcmp.gt.f32.partialorder %v576, 0.0
    %vm578 = vmand %vm574, %vm577
    %s579 = scalar_lea.vmem [#allocation2], 72
    %v580 = vld [vmem:[%s579] sm:$0xff]
    %v581 = vmax.f32 %v580, 2.0
    %v582 = vmin.f32 %v581, 6.0
    %v583 = vmul.f32 %v582, 9.0
    %v584 = vadd.f32 %v583, -17.0
    %vm585 = vcmp.ge.f32.partialorder %v582, 2.0
    %v586 = vsel %vm585, %v584, 1.0
    %v587 = vmul.f32 %v582, 20.0
    %v588 = vadd.f32 %v587, -50.0
    %vm589 = vcmp.ge.f32.partialorder %v582, 3.0
    %v590 = vsel %vm589, %v588, %v586
    %v591 = vmul.f32 %v582, 450.0
    %v592 = vadd.f32 %v591, -2200.0
    %vm593 = vcmp.ge.f32.partialorder %v582, 5.0
    %v594 = vsel %vm593, %v592, %v590
    %v595 = vsel %vm578, %v594, 200.0
    %v596 = vmul.f32 %v325, 78.0
    %v597 = vmin.f32 %v596, 200.0
    %v598 = vmin.f32 %v597, %v595
    %v599 = vld [vmem:[#allocation2] sm:$0xff]
    %v600 = vadd.f32 %v599, 10.0
    %vm601 = vcmp.gt.f32.partialorder %v600, %v571
    %v602 = vsel %vm601, %v598, 8500.0
    %v603 = vsel %vm601, -200.0, -8500.0
    %v604 = vmax.f32 %v603, %v407
    %v605 = vmin.f32 %v602, %v604
    %v606 = vadd.f32 %v599, %v605
    %v607 = vsub.f32 %v571, 120.0
    %vm608 = vcmp.lt.f32.partialorder %v606, %v607
    %v609 = vsel %vm608, 800.0, %v571
    %v610 = vmin.f32 %v606, 8000.0
    %v611 = vmax.f32 %v610, %v609
    %612 = vst [vmem:[#allocation5] sm:$0xff] %v611
    // Predicated region
    $region10: #{tpu_custom_call.1} parent=1 // pred_check
      _
    $region11: #{tpu_custom_call.1} parent=1 // pred_check_branch
      %614 = sbr.rel (0) target = $region13
    $region12: #{tpu_custom_call.1} parent=1 // pred_region
      %s616 = ssub.s32 128, 128
      %617 = vsyncadd [#allocation4], %s616
      %s619 = sshll.u32 [#allocation5], 4
      %s620 = int_to_ptr.vmem [resolvable:$true] %s619
      %622 = dma.vmem_to_hbm [thread:$0]  %s620, 128, %s1, [#allocation4]
    $region13: #{tpu_custom_call.1} parent=1 // pred_fallthru
      _
    // Predicated region
    $region14: #{tpu_custom_call.1} parent=1 // pred_check
      _
    $region15: #{tpu_custom_call.1} parent=1 // pred_check_branch
      %624 = sbr.rel (0) target = $region17
    $region16: #{tpu_custom_call.1} parent=1 // pred_region
      %625 = dma.done [#allocation4], 128
    $region17: #{tpu_custom_call.1} parent=1 // pred_fallthru
      _
    %626 = vsyncpa [#allocation3], 1
    %627 = vsyncpa [#allocation4], 1

</llo_original>
